<compile_context>
chip_gen: v7x
topology: tpu7x:2x2x1
jax: 0.10.0
libtpu: 0.0.40
codegen_flags: <defaults>
</compile_context>

<pallas_src>
import jax
import jax.numpy as jnp
from jax.experimental import pallas as pl
from jax.experimental.pallas import tpu as pltpu


VMEM_SPEC = pl.BlockSpec(memory_space=pltpu.MemorySpace.VMEM)


# ----------------------------------------------------------------------------
# Kernels
# ----------------------------------------------------------------------------
def conv_relu_pool_kernel(p_ref, w_ref, b_ref, o_ref):
    """Fused Conv3x3(pad=1) + ReLU + MaxPool2x2 over one M-tile.

    p_ref: (4, tm, K)   im2col patches; axis 0 indexes the 2x2 pool position,
                        tm = tile of pooled output pixels, K = 9*Cin.
    w_ref: (K, Cout)    flattened conv weights (tap order kh, kw, cin).
    b_ref: (1, Cout)    bias.
    o_ref: (tm, Cout)   pooled activations.
    """
    w = w_ref[...]
    acc = jnp.dot(p_ref[0], w, preferred_element_type=jnp.float32)
    for pos in range(1, 4):  # static unroll over the 2x2 pooling window
        acc = jnp.maximum(
            acc, jnp.dot(p_ref[pos], w, preferred_element_type=jnp.float32))
    # Bias + ReLU applied once after the max (bias is shared across the pool
    # window and ReLU is monotone, so this equals maxpool(relu(conv + b))).
    o_ref[...] = jnp.maximum(acc + b_ref[...], 0.0)


def lstm_head_kernel(cgm_ref, wih_ref, whh_ref, lb_ref,
                     cnn_ref, cnnw_ref, cnnb_ref,
                     lfw_ref, lfb_ref,
                     demo_ref, d1w_ref, d1b_ref, d2w_ref, d2b_ref,
                     fc1w_ref, fc1b_ref, fc2w_ref, fc2b_ref,
                     o_ref):
    """Fused: cnn_fc (+branch sum), LSTM, lstm_fc, demo MLP, fc1, fc2.

    cgm_ref:  (B, T)        raw CGM sequence (input_size == 1)
    wih_ref:  (1, 4H)       LSTM input weights, gate order (i, f, g, o)
    whh_ref:  (H, 4H)       LSTM recurrent weights, 4 gates fused on the lane axis
    lb_ref:   (1, 4H)       LSTM bias (b_ih + b_hh)
    cnn_ref:  (2B, Fc)      flattened conv2 activations for [breakfast; lunch]
    cnnw/b:   (Fc,128),(1,128)   cnn fc
    lfw/b:    (T*H,128),(1,128)  lstm fc
    demo_ref: (B, D); d1w/b:(D,64),(1,64); d2w/b:(64,128),(1,128)
    fc1w/b:   (384,128),(1,128)  rows [0:128]=img, [128:256]=lstm, [256:384]=demo
    fc2w/b:   (128,1),(1,1)
    o_ref:    (B, 1)
    """
    B, T = cgm_ref.shape
    H = whh_ref.shape[0]
    F = cnnb_ref.shape[1]  # 128

    # ---- CNN feature head: relu(flat @ W + b), then sum the two image branches.
    y = jnp.dot(cnn_ref[...], cnnw_ref[...], preferred_element_type=jnp.float32)
    y = jnp.maximum(y + cnnb_ref[...], 0.0)          # (2B, 128)
    img = y[0:B] + y[B:2 * B]                        # (B, 128)

    # ---- LSTM: one fused (B,H)@(H,4H) dot per timestep; input contribution
    #      (input_size == 1 -> broadcast multiply) precomputed for all T.
    x = cgm_ref[...]                                  # (B, T)
    wih = wih_ref[...]                                # (1, 4H)
    whh = whh_ref[...]                                # (H, 4H)
    bias = lb_ref[...]                                # (1, 4H)
    xw_all = x[:, :, None] * wih[:, None, :]          # (B, T, 4H)

    h = jnp.zeros((B, H), jnp.float32)
    c = jnp.zeros((B, H), jnp.float32)
    hs = []
    for t in range(T):  # static unroll, T is small; h/c carried as values
        z = (xw_all[:, t]
             + jnp.dot(h, whh, preferred_element_type=jnp.float32)
             + bias)                                   # (B, 4H)
        i = jax.nn.sigmoid(z[:, 0:H])
        f = jax.nn.sigmoid(z[:, H:2 * H])
        g = jnp.tanh(z[:, 2 * H:3 * H])
        o = jax.nn.sigmoid(z[:, 3 * H:4 * H])
        c = f * c + i * g
        h = o * jnp.tanh(c)
        hs.append(h)
    lstm_h = jnp.concatenate(hs, axis=1)               # (B, T*H) lane-dense
    lstm_feat = (jnp.dot(lstm_h, lfw_ref[...],
                         preferred_element_type=jnp.float32) + lfb_ref[...])

    # ---- demographics MLP.
    # TODO(synk): nn.Dropout treated as identity (eval-mode inference).
    d = jnp.maximum(jnp.dot(demo_ref[...], d1w_ref[...],
                            preferred_element_type=jnp.float32) + d1b_ref[...],
                    0.0)
    d = jnp.maximum(jnp.dot(d, d2w_ref[...],
                            preferred_element_type=jnp.float32) + d2b_ref[...],
                    0.0)

    # ---- joint head: fc1 over [img | lstm | demo] as 3 partial dots (no concat),
    #      then ReLU, then fc2 — all kept in vregs, single (B,1) store at the end.
    hj = (jnp.dot(img, fc1w_ref[0:F], preferred_element_type=jnp.float32)
          + jnp.dot(lstm_feat, fc1w_ref[F:2 * F],
                    preferred_element_type=jnp.float32)
          + jnp.dot(d, fc1w_ref[2 * F:3 * F],
                    preferred_element_type=jnp.float32)
          + fc1b_ref[...])
    hj = jnp.maximum(hj, 0.0)
    o_ref[...] = (jnp.dot(hj, fc2w_ref[...],
                          preferred_element_type=jnp.float32) + fc2b_ref[...])


# ----------------------------------------------------------------------------
# Wrappers (glue: layout transforms, im2col, pallas_call plumbing)
# ----------------------------------------------------------------------------
def conv_relu_pool(x, w, b):
    """x: (B, H, W, Cin) NHWC -> (B, H//2, W//2, Cout)."""
    B, H, W, Cin = x.shape
    Cout = w.shape[-1]
    Ho, Wo = H // 2, W // 2
    M, K = B * Ho * Wo, 9 * Cin

    xp = jnp.pad(x, ((0, 0), (1, 1), (1, 1), (0, 0)))
    # im2col: tap order (kh, kw, cin) along the last axis.
    cols = [xp[:, kh:kh + H, kw:kw + W, :] for kh in range(3) for kw in range(3)]
    patches = jnp.concatenate(cols, axis=-1)              # (B, H, W, 9*Cin)
    # Group rows by 2x2 pool position so pooling is an elementwise max in-kernel.
    pos = [patches[:, di::2, dj::2, :].reshape(M, K)
           for di in (0, 1) for dj in (0, 1)]
    p4 = jnp.stack(pos, axis=0)                            # (4, M, 9*Cin)

    # M-tile: split in two when cleanly possible so the "parallel" grid axis can
    # be sharded across v7x's 2 TensorCores (one step on v5e/v6e is still cheap).
    tile_m = M
    if M % 2 == 0 and (M // 2) % 8 == 0:
        tile_m = M // 2
    grid = (M // tile_m,)

    out = pl.pallas_call(
        conv_relu_pool_kernel,
        out_shape=jax.ShapeDtypeStruct((M, Cout), jnp.float32),
        grid=grid,
        in_specs=[pl.BlockSpec((4, tile_m, K), lambda i: (0, i, 0)),
                  pl.BlockSpec((K, Cout), lambda i: (0, 0)),
                  pl.BlockSpec((1, Cout), lambda i: (0, 0))],
        out_specs=pl.BlockSpec((tile_m, Cout), lambda i: (i, 0)),
        compiler_params=pltpu.CompilerParams(
            dimension_semantics=("parallel",)),
    )(p4, w, b)
    return out.reshape(B, Ho, Wo, Cout)


def forward(params, image_breakfast, image_lunch, cgm_data, demo_data):
    B = image_breakfast.shape[0]

    # Batch the two image branches into a single CNN pass (batch 2B).
    imgs = jnp.concatenate([image_breakfast, image_lunch], axis=0)   # NCHW
    x = jnp.transpose(imgs, (0, 2, 3, 1)).astype(jnp.float32)        # NHWC
    y = conv_relu_pool(x, params["conv1_w"], params["conv1_b"])      # (2B,H/2,W/2,f1)
    y = conv_relu_pool(y, params["conv2_w"], params["conv2_b"])      # (2B,H/4,W/4,f2)
    flat = y.reshape(2 * B, -1)                                      # (2B, Fc) no-copy

    out = pl.pallas_call(
        lstm_head_kernel,
        out_shape=jax.ShapeDtypeStruct((B, 1), jnp.float32),
        in_specs=[VMEM_SPEC] * 18,
        out_specs=VMEM_SPEC,
    )(cgm_data.astype(jnp.float32),
      params["lstm_wih"], params["lstm_whh"], params["lstm_b"],
      flat, params["cnn_fc_w"], params["cnn_fc_b"],
      params["lstm_fc_w"], params["lstm_fc_b"],
      demo_data.astype(jnp.float32),
      params["demo1_w"], params["demo1_b"],
      params["demo2_w"], params["demo2_b"],
      params["fc1_w"], params["fc1_b"],
      params["fc2_w"], params["fc2_b"])
    return out


# ----------------------------------------------------------------------------
# Deterministic parameter init (synthetic, no checkpoint loading)
# ----------------------------------------------------------------------------
def init_params(key, *, image_hw=16, cgm_size=8, demo_size=16,
                cnn_filters=(16, 32), lstm_hidden=64):
    f1, f2 = cnn_filters
    H = lstm_hidden
    keys = jax.random.split(key, 10)

    def w_init(k, shape, fan_in):
        return jax.random.normal(k, shape, jnp.float32) / jnp.sqrt(float(fan_in))

    flat_cnn = f2 * (image_hw // 4) * (image_hw // 4)
    return {
        "conv1_w": w_init(keys[0], (9 * 3, f1), 9 * 3),
        "conv1_b": jnp.zeros((1, f1), jnp.float32),
        "conv2_w": w_init(keys[1], (9 * f1, f2), 9 * f1),
        "conv2_b": jnp.zeros((1, f2), jnp.float32),
        "cnn_fc_w": w_init(keys[2], (flat_cnn, 128), flat_cnn),
        "cnn_fc_b": jnp.zeros((1, 128), jnp.float32),
        # LSTM gates fused along the last axis, PyTorch order (i, f, g, o).
        "lstm_wih": w_init(keys[3], (1, 4 * H), H),
        "lstm_whh": w_init(keys[4], (H, 4 * H), H),
        "lstm_b":   jnp.zeros((1, 4 * H), jnp.float32),   # b_ih + b_hh
        "lstm_fc_w": w_init(keys[5], (H * cgm_size, 128), H * cgm_size),
        "lstm_fc_b": jnp.zeros((1, 128), jnp.float32),
        "demo1_w": w_init(keys[6], (demo_size, 64), demo_size),
        "demo1_b": jnp.zeros((1, 64), jnp.float32),
        "demo2_w": w_init(keys[7], (64, 128), 64),
        "demo2_b": jnp.zeros((1, 128), jnp.float32),
        "fc1_w": w_init(keys[8], (3 * 128, 128), 3 * 128),
        "fc1_b": jnp.zeros((1, 128), jnp.float32),
        "fc2_w": w_init(keys[9], (128, 1), 128),
        "fc2_b": jnp.zeros((1, 1), jnp.float32),
    }


if __name__ == "__main__":
    B, HW, CGM, DEMO = 2, 16, 8, 16
    key = jax.random.PRNGKey(0)
    kp, k1, k2, k3, k4 = jax.random.split(key, 5)

    params = init_params(kp, image_hw=HW, cgm_size=CGM, demo_size=DEMO)

    image_breakfast = jax.random.normal(k1, (B, 3, HW, HW), jnp.float32)  # NCHW
    image_lunch     = jax.random.normal(k2, (B, 3, HW, HW), jnp.float32)  # NCHW
    cgm_data        = jax.random.normal(k3, (B, CGM), jnp.float32)
    demo_data       = jax.random.normal(k4, (B, DEMO), jnp.float32)

    out = jax.jit(forward)(params, image_breakfast, image_lunch,
                           cgm_data, demo_data)
    jax.block_until_ready(out)
    assert out.shape == (B, 1), out.shape
    assert bool(jnp.all(jnp.isfinite(out)))
    print("KERNEL_OK")
</pallas_src>

<mosaic_0001>
module attributes {stable_mosaic.version = 11 : i64} {
  func.func @conv_relu_pool_kernel(%arg0: i32, %arg1: memref<4x128x27xf32, #tpu.memory_space<vmem>>, %arg2: memref<27x16xf32, #tpu.memory_space<vmem>>, %arg3: memref<1x16xf32, #tpu.memory_space<vmem>>, %arg4: memref<128x16xf32, #tpu.memory_space<vmem>>) attributes {dimension_semantics = [#tpu.dimension_semantics<parallel>], iteration_bounds = array<i64: 2>, scalar_prefetch = 0 : i64, scratch_operands = 0 : i64, tpu.core_type = #tpu.core_type<tc>, window_params = [{transform_indices = @transform_0, window_bounds = array<i64: 4, 128, 27>}, {pipeline_mode = #tpu.pipeline_mode<synchronous>, transform_indices = @transform_1, window_bounds = array<i64: 27, 16>}, {pipeline_mode = #tpu.pipeline_mode<synchronous>, transform_indices = @transform_2, window_bounds = array<i64: 1, 16>}, {transform_indices = @transform_3, window_bounds = array<i64: 128, 16>}]} {
    %c0 = arith.constant 0 : index
    %c0_0 = arith.constant 0 : index
    %0 = vector.load %arg2[%c0, %c0_0] : memref<27x16xf32, #tpu.memory_space<vmem>>, vector<27x16xf32>
    %c0_1 = arith.constant 0 : index
    %c0_2 = arith.constant 0 : index
    %c0_3 = arith.constant 0 : index
    %1 = vector.load %arg1[%c0_1, %c0_2, %c0_3] : memref<4x128x27xf32, #tpu.memory_space<vmem>>, vector<1x128x27xf32>
    %2 = vector.shape_cast %1 : vector<1x128x27xf32> to vector<128x27xf32>
    %cst = arith.constant dense<0.000000e+00> : vector<128x16xf32>
    %3 = tpu.matmul %2, %0, %cst {dimension_numbers = #tpu.dot_dimension_numbers<[1], [0], [0], [1], [0, 0, 1, 1], [], []>} : vector<128x27xf32>, vector<27x16xf32>, vector<128x16xf32> -> vector<128x16xf32>
    %c1 = arith.constant 1 : index
    %c0_4 = arith.constant 0 : index
    %c0_5 = arith.constant 0 : index
    %4 = vector.load %arg1[%c1, %c0_4, %c0_5] : memref<4x128x27xf32, #tpu.memory_space<vmem>>, vector<1x128x27xf32>
    %5 = vector.shape_cast %4 : vector<1x128x27xf32> to vector<128x27xf32>
    %cst_6 = arith.constant dense<0.000000e+00> : vector<128x16xf32>
    %6 = tpu.matmul %5, %0, %cst_6 {dimension_numbers = #tpu.dot_dimension_numbers<[1], [0], [0], [1], [0, 0, 1, 1], [], []>} : vector<128x27xf32>, vector<27x16xf32>, vector<128x16xf32> -> vector<128x16xf32>
    %7 = arith.maximumf %3, %6 : vector<128x16xf32>
    %c2 = arith.constant 2 : index
    %c0_7 = arith.constant 0 : index
    %c0_8 = arith.constant 0 : index
    %8 = vector.load %arg1[%c2, %c0_7, %c0_8] : memref<4x128x27xf32, #tpu.memory_space<vmem>>, vector<1x128x27xf32>
    %9 = vector.shape_cast %8 : vector<1x128x27xf32> to vector<128x27xf32>
    %cst_9 = arith.constant dense<0.000000e+00> : vector<128x16xf32>
    %10 = tpu.matmul %9, %0, %cst_9 {dimension_numbers = #tpu.dot_dimension_numbers<[1], [0], [0], [1], [0, 0, 1, 1], [], []>} : vector<128x27xf32>, vector<27x16xf32>, vector<128x16xf32> -> vector<128x16xf32>
    %11 = arith.maximumf %7, %10 : vector<128x16xf32>
    %c3 = arith.constant 3 : index
    %c0_10 = arith.constant 0 : index
    %c0_11 = arith.constant 0 : index
    %12 = vector.load %arg1[%c3, %c0_10, %c0_11] : memref<4x128x27xf32, #tpu.memory_space<vmem>>, vector<1x128x27xf32>
    %13 = vector.shape_cast %12 : vector<1x128x27xf32> to vector<128x27xf32>
    %cst_12 = arith.constant dense<0.000000e+00> : vector<128x16xf32>
    %14 = tpu.matmul %13, %0, %cst_12 {dimension_numbers = #tpu.dot_dimension_numbers<[1], [0], [0], [1], [0, 0, 1, 1], [], []>} : vector<128x27xf32>, vector<27x16xf32>, vector<128x16xf32> -> vector<128x16xf32>
    %15 = arith.maximumf %11, %14 : vector<128x16xf32>
    %c0_13 = arith.constant 0 : index
    %c0_14 = arith.constant 0 : index
    %16 = vector.load %arg3[%c0_13, %c0_14] : memref<1x16xf32, #tpu.memory_space<vmem>>, vector<1x16xf32>
    %17 = vector.broadcast %16 : vector<1x16xf32> to vector<128x16xf32>
    %18 = arith.addf %15, %17 : vector<128x16xf32>
    %cst_15 = arith.constant 0.000000e+00 : f32
    %19 = vector.broadcast %cst_15 : f32 to vector<128x16xf32>
    %20 = arith.maximumf %18, %19 : vector<128x16xf32>
    %c0_16 = arith.constant 0 : index
    %c0_17 = arith.constant 0 : index
    %21 = vector.load %arg4[%c0_16, %c0_17] : memref<128x16xf32, #tpu.memory_space<vmem>>, vector<128x16xf32>
    tpu.vector_store %arg4[%c0_16, %c0_17], %20 {strides = array<i32>} : memref<128x16xf32, #tpu.memory_space<vmem>>, vector<128x16xf32>,
    return
  }
  func.func @transform_0(%arg0: i32) -> (i32, i32, i32) {
    %c0_i32 = arith.constant 0 : i32
    %c0_i32_0 = arith.constant 0 : i32
    %c0_i32_1 = arith.constant 0 : i32
    return %c0_i32, %arg0, %c0_i32_0 : i32, i32, i32
  }
  func.func @transform_1(%arg0: i32) -> (i32, i32) {
    %c0_i32 = arith.constant 0 : i32
    %c0_i32_0 = arith.constant 0 : i32
    %c0_i32_1 = arith.constant 0 : i32
    return %c0_i32, %c0_i32_0 : i32, i32
  }
  func.func @transform_2(%arg0: i32) -> (i32, i32) {
    %c0_i32 = arith.constant 0 : i32
    %c0_i32_0 = arith.constant 0 : i32
    %c0_i32_1 = arith.constant 0 : i32
    return %c0_i32, %c0_i32_0 : i32, i32
  }
  func.func @transform_3(%arg0: i32) -> (i32, i32) {
    %c0_i32 = arith.constant 0 : i32
    %c0_i32_0 = arith.constant 0 : i32
    return %arg0, %c0_i32 : i32, i32
  }
}

module attributes {stable_mosaic.version = 11 : i64} {
  func.func @conv_relu_pool_kernel(%arg0: i32, %arg1: memref<4x32x144xf32, #tpu.memory_space<vmem>>, %arg2: memref<144x32xf32, #tpu.memory_space<vmem>>, %arg3: memref<1x32xf32, #tpu.memory_space<vmem>>, %arg4: memref<32x32xf32, #tpu.memory_space<vmem>>) attributes {dimension_semantics = [#tpu.dimension_semantics<parallel>], iteration_bounds = array<i64: 2>, scalar_prefetch = 0 : i64, scratch_operands = 0 : i64, tpu.core_type = #tpu.core_type<tc>, window_params = [{transform_indices = @transform_0, window_bounds = array<i64: 4, 32, 144>}, {pipeline_mode = #tpu.pipeline_mode<synchronous>, transform_indices = @transform_1, window_bounds = array<i64: 144, 32>}, {pipeline_mode = #tpu.pipeline_mode<synchronous>, transform_indices = @transform_2, window_bounds = array<i64: 1, 32>}, {transform_indices = @transform_3, window_bounds = array<i64: 32, 32>}]} {
    %c0 = arith.constant 0 : index
    %c0_0 = arith.constant 0 : index
    %0 = vector.load %arg2[%c0, %c0_0] : memref<144x32xf32, #tpu.memory_space<vmem>>, vector<144x32xf32>
    %c0_1 = arith.constant 0 : index
    %c0_2 = arith.constant 0 : index
    %c0_3 = arith.constant 0 : index
    %1 = vector.load %arg1[%c0_1, %c0_2, %c0_3] : memref<4x32x144xf32, #tpu.memory_space<vmem>>, vector<1x32x144xf32>
    %2 = vector.shape_cast %1 : vector<1x32x144xf32> to vector<32x144xf32>
    %cst = arith.constant dense<0.000000e+00> : vector<32x32xf32>
    %3 = tpu.matmul %2, %0, %cst {dimension_numbers = #tpu.dot_dimension_numbers<[1], [0], [0], [1], [0, 0, 1, 1], [], []>} : vector<32x144xf32>, vector<144x32xf32>, vector<32x32xf32> -> vector<32x32xf32>
    %c1 = arith.constant 1 : index
    %c0_4 = arith.constant 0 : index
    %c0_5 = arith.constant 0 : index
    %4 = vector.load %arg1[%c1, %c0_4, %c0_5] : memref<4x32x144xf32, #tpu.memory_space<vmem>>, vector<1x32x144xf32>
    %5 = vector.shape_cast %4 : vector<1x32x144xf32> to vector<32x144xf32>
    %cst_6 = arith.constant dense<0.000000e+00> : vector<32x32xf32>
    %6 = tpu.matmul %5, %0, %cst_6 {dimension_numbers = #tpu.dot_dimension_numbers<[1], [0], [0], [1], [0, 0, 1, 1], [], []>} : vector<32x144xf32>, vector<144x32xf32>, vector<32x32xf32> -> vector<32x32xf32>
    %7 = arith.maximumf %3, %6 : vector<32x32xf32>
    %c2 = arith.constant 2 : index
    %c0_7 = arith.constant 0 : index
    %c0_8 = arith.constant 0 : index
    %8 = vector.load %arg1[%c2, %c0_7, %c0_8] : memref<4x32x144xf32, #tpu.memory_space<vmem>>, vector<1x32x144xf32>
    %9 = vector.shape_cast %8 : vector<1x32x144xf32> to vector<32x144xf32>
    %cst_9 = arith.constant dense<0.000000e+00> : vector<32x32xf32>
    %10 = tpu.matmul %9, %0, %cst_9 {dimension_numbers = #tpu.dot_dimension_numbers<[1], [0], [0], [1], [0, 0, 1, 1], [], []>} : vector<32x144xf32>, vector<144x32xf32>, vector<32x32xf32> -> vector<32x32xf32>
    %11 = arith.maximumf %7, %10 : vector<32x32xf32>
    %c3 = arith.constant 3 : index
    %c0_10 = arith.constant 0 : index
    %c0_11 = arith.constant 0 : index
    %12 = vector.load %arg1[%c3, %c0_10, %c0_11] : memref<4x32x144xf32, #tpu.memory_space<vmem>>, vector<1x32x144xf32>
    %13 = vector.shape_cast %12 : vector<1x32x144xf32> to vector<32x144xf32>
    %cst_12 = arith.constant dense<0.000000e+00> : vector<32x32xf32>
    %14 = tpu.matmul %13, %0, %cst_12 {dimension_numbers = #tpu.dot_dimension_numbers<[1], [0], [0], [1], [0, 0, 1, 1], [], []>} : vector<32x144xf32>, vector<144x32xf32>, vector<32x32xf32> -> vector<32x32xf32>
    %15 = arith.maximumf %11, %14 : vector<32x32xf32>
    %c0_13 = arith.constant 0 : index
    %c0_14 = arith.constant 0 : index
    %16 = vector.load %arg3[%c0_13, %c0_14] : memref<1x32xf32, #tpu.memory_space<vmem>>, vector<1x32xf32>
    %17 = vector.broadcast %16 : vector<1x32xf32> to vector<32x32xf32>
    %18 = arith.addf %15, %17 : vector<32x32xf32>
    %cst_15 = arith.constant 0.000000e+00 : f32
    %19 = vector.broadcast %cst_15 : f32 to vector<32x32xf32>
    %20 = arith.maximumf %18, %19 : vector<32x32xf32>
    %c0_16 = arith.constant 0 : index
    %c0_17 = arith.constant 0 : index
    %21 = vector.load %arg4[%c0_16, %c0_17] : memref<32x32xf32, #tpu.memory_space<vmem>>, vector<32x32xf32>
    tpu.vector_store %arg4[%c0_16, %c0_17], %20 {strides = array<i32>} : memref<32x32xf32, #tpu.memory_space<vmem>>, vector<32x32xf32>,
    return
  }
  func.func @transform_0(%arg0: i32) -> (i32, i32, i32) {
    %c0_i32 = arith.constant 0 : i32
    %c0_i32_0 = arith.constant 0 : i32
    %c0_i32_1 = arith.constant 0 : i32
    return %c0_i32, %arg0, %c0_i32_0 : i32, i32, i32
  }
  func.func @transform_1(%arg0: i32) -> (i32, i32) {
    %c0_i32 = arith.constant 0 : i32
    %c0_i32_0 = arith.constant 0 : i32
    %c0_i32_1 = arith.constant 0 : i32
    return %c0_i32, %c0_i32_0 : i32, i32
  }
  func.func @transform_2(%arg0: i32) -> (i32, i32) {
    %c0_i32 = arith.constant 0 : i32
    %c0_i32_0 = arith.constant 0 : i32
    %c0_i32_1 = arith.constant 0 : i32
    return %c0_i32, %c0_i32_0 : i32, i32
  }
  func.func @transform_3(%arg0: i32) -> (i32, i32) {
    %c0_i32 = arith.constant 0 : i32
    %c0_i32_0 = arith.constant 0 : i32
    return %arg0, %c0_i32 : i32, i32
  }
}

module attributes {stable_mosaic.version = 11 : i64} {
  func.func @lstm_head_kernel(%arg0: memref<2x8xf32, #tpu.memory_space<vmem>>, %arg1: memref<1x256xf32, #tpu.memory_space<vmem>>, %arg2: memref<64x256xf32, #tpu.memory_space<vmem>>, %arg3: memref<1x256xf32, #tpu.memory_space<vmem>>, %arg4: memref<4x512xf32, #tpu.memory_space<vmem>>, %arg5: memref<512x128xf32, #tpu.memory_space<vmem>>, %arg6: memref<1x128xf32, #tpu.memory_space<vmem>>, %arg7: memref<512x128xf32, #tpu.memory_space<vmem>>, %arg8: memref<1x128xf32, #tpu.memory_space<vmem>>, %arg9: memref<2x16xf32, #tpu.memory_space<vmem>>, %arg10: memref<16x64xf32, #tpu.memory_space<vmem>>, %arg11: memref<1x64xf32, #tpu.memory_space<vmem>>, %arg12: memref<64x128xf32, #tpu.memory_space<vmem>>, %arg13: memref<1x128xf32, #tpu.memory_space<vmem>>, %arg14: memref<384x128xf32, #tpu.memory_space<vmem>>, %arg15: memref<1x128xf32, #tpu.memory_space<vmem>>, %arg16: memref<128x1xf32, #tpu.memory_space<vmem>>, %arg17: memref<1x1xf32, #tpu.memory_space<vmem>>, %arg18: memref<2x1xf32, #tpu.memory_space<vmem>>) attributes {dimension_semantics = [], scalar_prefetch = 0 : i64, scratch_operands = 0 : i64, tpu.core_type = #tpu.core_type<tc>} {
    %c0 = arith.constant 0 : index
    %c0_0 = arith.constant 0 : index
    %0 = vector.load %arg4[%c0, %c0_0] : memref<4x512xf32, #tpu.memory_space<vmem>>, vector<4x512xf32>
    %c0_1 = arith.constant 0 : index
    %c0_2 = arith.constant 0 : index
    %1 = vector.load %arg5[%c0_1, %c0_2] : memref<512x128xf32, #tpu.memory_space<vmem>>, vector<512x128xf32>
    %cst = arith.constant dense<0.000000e+00> : vector<4x128xf32>
    %2 = tpu.matmul %0, %1, %cst {dimension_numbers = #tpu.dot_dimension_numbers<[1], [0], [0], [1], [0, 0, 1, 1], [], []>} : vector<4x512xf32>, vector<512x128xf32>, vector<4x128xf32> -> vector<4x128xf32>
    %c0_3 = arith.constant 0 : index
    %c0_4 = arith.constant 0 : index
    %3 = vector.load %arg6[%c0_3, %c0_4] : memref<1x128xf32, #tpu.memory_space<vmem>>, vector<1x128xf32>
    %4 = vector.broadcast %3 : vector<1x128xf32> to vector<4x128xf32>
    %5 = arith.addf %2, %4 : vector<4x128xf32>
    %cst_5 = arith.constant 0.000000e+00 : f32
    %6 = vector.broadcast %cst_5 : f32 to vector<4x128xf32>
    %7 = arith.maximumf %5, %6 : vector<4x128xf32>
    %8 = vector.extract_strided_slice %7 {offsets = [0, 0], sizes = [2, 128], strides = [1, 1]} : vector<4x128xf32> to vector<2x128xf32>
    %9 = vector.extract_strided_slice %7 {offsets = [2, 0], sizes = [2, 128], strides = [1, 1]} : vector<4x128xf32> to vector<2x128xf32>
    %10 = arith.addf %8, %9 : vector<2x128xf32>
    %c0_6 = arith.constant 0 : index
    %c0_7 = arith.constant 0 : index
    %11 = vector.load %arg0[%c0_6, %c0_7] : memref<2x8xf32, #tpu.memory_space<vmem>>, vector<2x8xf32>
    %c0_8 = arith.constant 0 : index
    %c0_9 = arith.constant 0 : index
    %12 = vector.load %arg1[%c0_8, %c0_9] : memref<1x256xf32, #tpu.memory_space<vmem>>, vector<1x256xf32>
    %c0_10 = arith.constant 0 : index
    %c0_11 = arith.constant 0 : index
    %13 = vector.load %arg2[%c0_10, %c0_11] : memref<64x256xf32, #tpu.memory_space<vmem>>, vector<64x256xf32>
    %c0_12 = arith.constant 0 : index
    %c0_13 = arith.constant 0 : index
    %14 = vector.load %arg3[%c0_12, %c0_13] : memref<1x256xf32, #tpu.memory_space<vmem>>, vector<1x256xf32>
    %15 = vector.shape_cast %11 : vector<2x8xf32> to vector<2x8x1xf32>
    %16 = vector.shape_cast %12 : vector<1x256xf32> to vector<1x1x256xf32>
    %17 = vector.broadcast %15 : vector<2x8x1xf32> to vector<2x8x256xf32>
    %18 = vector.broadcast %16 : vector<1x1x256xf32> to vector<2x8x256xf32>
    %19 = arith.mulf %17, %18 : vector<2x8x256xf32>
    %cst_14 = arith.constant 0.000000e+00 : f32
    %20 = vector.broadcast %cst_14 : f32 to vector<2x64xf32>
    %cst_15 = arith.constant 0.000000e+00 : f32
    %21 = vector.broadcast %cst_15 : f32 to vector<2x64xf32>
    %22 = vector.extract_strided_slice %19 {offsets = [0, 0, 0], sizes = [2, 1, 256], strides = [1, 1, 1]} : vector<2x8x256xf32> to vector<2x1x256xf32>
    %23 = vector.shape_cast %22 : vector<2x1x256xf32> to vector<2x256xf32>
    %cst_16 = arith.constant dense<0.000000e+00> : vector<2x256xf32>
    %24 = tpu.matmul %20, %13, %cst_16 {dimension_numbers = #tpu.dot_dimension_numbers<[1], [0], [0], [1], [0, 0, 1, 1], [], []>} : vector<2x64xf32>, vector<64x256xf32>, vector<2x256xf32> -> vector<2x256xf32>
    %25 = arith.addf %23, %24 : vector<2x256xf32>
    %26 = vector.broadcast %14 : vector<1x256xf32> to vector<2x256xf32>
    %27 = arith.addf %25, %26 : vector<2x256xf32>
    %28 = vector.extract_strided_slice %27 {offsets = [0, 0], sizes = [2, 64], strides = [1, 1]} : vector<2x256xf32> to vector<2x64xf32>
    %29 = arith.negf %28 : vector<2x64xf32>
    %30 = math.exp %29 : vector<2x64xf32>
    %cst_17 = arith.constant 1.000000e+00 : f32
    %31 = vector.broadcast %cst_17 : f32 to vector<2x64xf32>
    %32 = arith.addf %31, %30 : vector<2x64xf32>
    %33 = arith.divf %31, %32 : vector<2x64xf32>
    %34 = vector.extract_strided_slice %27 {offsets = [0, 64], sizes = [2, 64], strides = [1, 1]} : vector<2x256xf32> to vector<2x64xf32>
    %35 = arith.negf %34 : vector<2x64xf32>
    %36 = math.exp %35 : vector<2x64xf32>
    %cst_18 = arith.constant 1.000000e+00 : f32
    %37 = vector.broadcast %cst_18 : f32 to vector<2x64xf32>
    %38 = arith.addf %37, %36 : vector<2x64xf32>
    %39 = arith.divf %37, %38 : vector<2x64xf32>
    %40 = vector.extract_strided_slice %27 {offsets = [0, 128], sizes = [2, 64], strides = [1, 1]} : vector<2x256xf32> to vector<2x64xf32>
    %41 = math.tanh %40 : vector<2x64xf32>
    %42 = vector.extract_strided_slice %27 {offsets = [0, 192], sizes = [2, 64], strides = [1, 1]} : vector<2x256xf32> to vector<2x64xf32>
    %43 = arith.negf %42 : vector<2x64xf32>
    %44 = math.exp %43 : vector<2x64xf32>
    %cst_19 = arith.constant 1.000000e+00 : f32
    %45 = vector.broadcast %cst_19 : f32 to vector<2x64xf32>
    %46 = arith.addf %45, %44 : vector<2x64xf32>
    %47 = arith.divf %45, %46 : vector<2x64xf32>
    %48 = arith.mulf %39, %21 : vector<2x64xf32>
    %49 = arith.mulf %33, %41 : vector<2x64xf32>
    %50 = arith.addf %48, %49 : vector<2x64xf32>
    %51 = math.tanh %50 : vector<2x64xf32>
    %52 = arith.mulf %47, %51 : vector<2x64xf32>
    %53 = vector.extract_strided_slice %19 {offsets = [0, 1, 0], sizes = [2, 1, 256], strides = [1, 1, 1]} : vector<2x8x256xf32> to vector<2x1x256xf32>
    %54 = vector.shape_cast %53 : vector<2x1x256xf32> to vector<2x256xf32>
    %cst_20 = arith.constant dense<0.000000e+00> : vector<2x256xf32>
    %55 = tpu.matmul %52, %13, %cst_20 {dimension_numbers = #tpu.dot_dimension_numbers<[1], [0], [0], [1], [0, 0, 1, 1], [], []>} : vector<2x64xf32>, vector<64x256xf32>, vector<2x256xf32> -> vector<2x256xf32>
    %56 = arith.addf %54, %55 : vector<2x256xf32>
    %57 = vector.broadcast %14 : vector<1x256xf32> to vector<2x256xf32>
    %58 = arith.addf %56, %57 : vector<2x256xf32>
    %59 = vector.extract_strided_slice %58 {offsets = [0, 0], sizes = [2, 64], strides = [1, 1]} : vector<2x256xf32> to vector<2x64xf32>
    %60 = arith.negf %59 : vector<2x64xf32>
    %61 = math.exp %60 : vector<2x64xf32>
    %cst_21 = arith.constant 1.000000e+00 : f32
    %62 = vector.broadcast %cst_21 : f32 to vector<2x64xf32>
    %63 = arith.addf %62, %61 : vector<2x64xf32>
    %64 = arith.divf %62, %63 : vector<2x64xf32>
    %65 = vector.extract_strided_slice %58 {offsets = [0, 64], sizes = [2, 64], strides = [1, 1]} : vector<2x256xf32> to vector<2x64xf32>
    %66 = arith.negf %65 : vector<2x64xf32>
    %67 = math.exp %66 : vector<2x64xf32>
    %cst_22 = arith.constant 1.000000e+00 : f32
    %68 = vector.broadcast %cst_22 : f32 to vector<2x64xf32>
    %69 = arith.addf %68, %67 : vector<2x64xf32>
    %70 = arith.divf %68, %69 : vector<2x64xf32>
    %71 = vector.extract_strided_slice %58 {offsets = [0, 128], sizes = [2, 64], strides = [1, 1]} : vector<2x256xf32> to vector<2x64xf32>
    %72 = math.tanh %71 : vector<2x64xf32>
    %73 = vector.extract_strided_slice %58 {offsets = [0, 192], sizes = [2, 64], strides = [1, 1]} : vector<2x256xf32> to vector<2x64xf32>
    %74 = arith.negf %73 : vector<2x64xf32>
    %75 = math.exp %74 : vector<2x64xf32>
    %cst_23 = arith.constant 1.000000e+00 : f32
    %76 = vector.broadcast %cst_23 : f32 to vector<2x64xf32>
    %77 = arith.addf %76, %75 : vector<2x64xf32>
    %78 = arith.divf %76, %77 : vector<2x64xf32>
    %79 = arith.mulf %70, %50 : vector<2x64xf32>
    %80 = arith.mulf %64, %72 : vector<2x64xf32>
    %81 = arith.addf %79, %80 : vector<2x64xf32>
    %82 = math.tanh %81 : vector<2x64xf32>
    %83 = arith.mulf %78, %82 : vector<2x64xf32>
    %84 = vector.extract_strided_slice %19 {offsets = [0, 2, 0], sizes = [2, 1, 256], strides = [1, 1, 1]} : vector<2x8x256xf32> to vector<2x1x256xf32>
    %85 = vector.shape_cast %84 : vector<2x1x256xf32> to vector<2x256xf32>
    %cst_24 = arith.constant dense<0.000000e+00> : vector<2x256xf32>
    %86 = tpu.matmul %83, %13, %cst_24 {dimension_numbers = #tpu.dot_dimension_numbers<[1], [0], [0], [1], [0, 0, 1, 1], [], []>} : vector<2x64xf32>, vector<64x256xf32>, vector<2x256xf32> -> vector<2x256xf32>
    %87 = arith.addf %85, %86 : vector<2x256xf32>
    %88 = vector.broadcast %14 : vector<1x256xf32> to vector<2x256xf32>
    %89 = arith.addf %87, %88 : vector<2x256xf32>
    %90 = vector.extract_strided_slice %89 {offsets = [0, 0], sizes = [2, 64], strides = [1, 1]} : vector<2x256xf32> to vector<2x64xf32>
    %91 = arith.negf %90 : vector<2x64xf32>
    %92 = math.exp %91 : vector<2x64xf32>
    %cst_25 = arith.constant 1.000000e+00 : f32
    %93 = vector.broadcast %cst_25 : f32 to vector<2x64xf32>
    %94 = arith.addf %93, %92 : vector<2x64xf32>
    %95 = arith.divf %93, %94 : vector<2x64xf32>
    %96 = vector.extract_strided_slice %89 {offsets = [0, 64], sizes = [2, 64], strides = [1, 1]} : vector<2x256xf32> to vector<2x64xf32>
    %97 = arith.negf %96 : vector<2x64xf32>
    %98 = math.exp %97 : vector<2x64xf32>
    %cst_26 = arith.constant 1.000000e+00 : f32
    %99 = vector.broadcast %cst_26 : f32 to vector<2x64xf32>
    %100 = arith.addf %99, %98 : vector<2x64xf32>
    %101 = arith.divf %99, %100 : vector<2x64xf32>
    %102 = vector.extract_strided_slice %89 {offsets = [0, 128], sizes = [2, 64], strides = [1, 1]} : vector<2x256xf32> to vector<2x64xf32>
    %103 = math.tanh %102 : vector<2x64xf32>
    %104 = vector.extract_strided_slice %89 {offsets = [0, 192], sizes = [2, 64], strides = [1, 1]} : vector<2x256xf32> to vector<2x64xf32>
    %105 = arith.negf %104 : vector<2x64xf32>
    %106 = math.exp %105 : vector<2x64xf32>
    %cst_27 = arith.constant 1.000000e+00 : f32
    %107 = vector.broadcast %cst_27 : f32 to vector<2x64xf32>
    %108 = arith.addf %107, %106 : vector<2x64xf32>
    %109 = arith.divf %107, %108 : vector<2x64xf32>
    %110 = arith.mulf %101, %81 : vector<2x64xf32>
    %111 = arith.mulf %95, %103 : vector<2x64xf32>
    %112 = arith.addf %110, %111 : vector<2x64xf32>
    %113 = math.tanh %112 : vector<2x64xf32>
    %114 = arith.mulf %109, %113 : vector<2x64xf32>
    %115 = vector.extract_strided_slice %19 {offsets = [0, 3, 0], sizes = [2, 1, 256], strides = [1, 1, 1]} : vector<2x8x256xf32> to vector<2x1x256xf32>
    %116 = vector.shape_cast %115 : vector<2x1x256xf32> to vector<2x256xf32>
    %cst_28 = arith.constant dense<0.000000e+00> : vector<2x256xf32>
    %117 = tpu.matmul %114, %13, %cst_28 {dimension_numbers = #tpu.dot_dimension_numbers<[1], [0], [0], [1], [0, 0, 1, 1], [], []>} : vector<2x64xf32>, vector<64x256xf32>, vector<2x256xf32> -> vector<2x256xf32>
    %118 = arith.addf %116, %117 : vector<2x256xf32>
    %119 = vector.broadcast %14 : vector<1x256xf32> to vector<2x256xf32>
    %120 = arith.addf %118, %119 : vector<2x256xf32>
    %121 = vector.extract_strided_slice %120 {offsets = [0, 0], sizes = [2, 64], strides = [1, 1]} : vector<2x256xf32> to vector<2x64xf32>
    %122 = arith.negf %121 : vector<2x64xf32>
    %123 = math.exp %122 : vector<2x64xf32>
    %cst_29 = arith.constant 1.000000e+00 : f32
    %124 = vector.broadcast %cst_29 : f32 to vector<2x64xf32>
    %125 = arith.addf %124, %123 : vector<2x64xf32>
    %126 = arith.divf %124, %125 : vector<2x64xf32>
    %127 = vector.extract_strided_slice %120 {offsets = [0, 64], sizes = [2, 64], strides = [1, 1]} : vector<2x256xf32> to vector<2x64xf32>
    %128 = arith.negf %127 : vector<2x64xf32>
    %129 = math.exp %128 : vector<2x64xf32>
    %cst_30 = arith.constant 1.000000e+00 : f32
    %130 = vector.broadcast %cst_30 : f32 to vector<2x64xf32>
    %131 = arith.addf %130, %129 : vector<2x64xf32>
    %132 = arith.divf %130, %131 : vector<2x64xf32>
    %133 = vector.extract_strided_slice %120 {offsets = [0, 128], sizes = [2, 64], strides = [1, 1]} : vector<2x256xf32> to vector<2x64xf32>
    %134 = math.tanh %133 : vector<2x64xf32>
    %135 = vector.extract_strided_slice %120 {offsets = [0, 192], sizes = [2, 64], strides = [1, 1]} : vector<2x256xf32> to vector<2x64xf32>
    %136 = arith.negf %135 : vector<2x64xf32>
    %137 = math.exp %136 : vector<2x64xf32>
    %cst_31 = arith.constant 1.000000e+00 : f32
    %138 = vector.broadcast %cst_31 : f32 to vector<2x64xf32>
    %139 = arith.addf %138, %137 : vector<2x64xf32>
    %140 = arith.divf %138, %139 : vector<2x64xf32>
    %141 = arith.mulf %132, %112 : vector<2x64xf32>
    %142 = arith.mulf %126, %134 : vector<2x64xf32>
    %143 = arith.addf %141, %142 : vector<2x64xf32>
    %144 = math.tanh %143 : vector<2x64xf32>
    %145 = arith.mulf %140, %144 : vector<2x64xf32>
    %146 = vector.extract_strided_slice %19 {offsets = [0, 4, 0], sizes = [2, 1, 256], strides = [1, 1, 1]} : vector<2x8x256xf32> to vector<2x1x256xf32>
    %147 = vector.shape_cast %146 : vector<2x1x256xf32> to vector<2x256xf32>
    %cst_32 = arith.constant dense<0.000000e+00> : vector<2x256xf32>
    %148 = tpu.matmul %145, %13, %cst_32 {dimension_numbers = #tpu.dot_dimension_numbers<[1], [0], [0], [1], [0, 0, 1, 1], [], []>} : vector<2x64xf32>, vector<64x256xf32>, vector<2x256xf32> -> vector<2x256xf32>
    %149 = arith.addf %147, %148 : vector<2x256xf32>
    %150 = vector.broadcast %14 : vector<1x256xf32> to vector<2x256xf32>
    %151 = arith.addf %149, %150 : vector<2x256xf32>
    %152 = vector.extract_strided_slice %151 {offsets = [0, 0], sizes = [2, 64], strides = [1, 1]} : vector<2x256xf32> to vector<2x64xf32>
    %153 = arith.negf %152 : vector<2x64xf32>
    %154 = math.exp %153 : vector<2x64xf32>
    %cst_33 = arith.constant 1.000000e+00 : f32
    %155 = vector.broadcast %cst_33 : f32 to vector<2x64xf32>
    %156 = arith.addf %155, %154 : vector<2x64xf32>
    %157 = arith.divf %155, %156 : vector<2x64xf32>
    %158 = vector.extract_strided_slice %151 {offsets = [0, 64], sizes = [2, 64], strides = [1, 1]} : vector<2x256xf32> to vector<2x64xf32>
    %159 = arith.negf %158 : vector<2x64xf32>
    %160 = math.exp %159 : vector<2x64xf32>
    %cst_34 = arith.constant 1.000000e+00 : f32
    %161 = vector.broadcast %cst_34 : f32 to vector<2x64xf32>
    %162 = arith.addf %161, %160 : vector<2x64xf32>
    %163 = arith.divf %161, %162 : vector<2x64xf32>
    %164 = vector.extract_strided_slice %151 {offsets = [0, 128], sizes = [2, 64], strides = [1, 1]} : vector<2x256xf32> to vector<2x64xf32>
    %165 = math.tanh %164 : vector<2x64xf32>
    %166 = vector.extract_strided_slice %151 {offsets = [0, 192], sizes = [2, 64], strides = [1, 1]} : vector<2x256xf32> to vector<2x64xf32>
    %167 = arith.negf %166 : vector<2x64xf32>
    %168 = math.exp %167 : vector<2x64xf32>
    %cst_35 = arith.constant 1.000000e+00 : f32
    %169 = vector.broadcast %cst_35 : f32 to vector<2x64xf32>
    %170 = arith.addf %169, %168 : vector<2x64xf32>
    %171 = arith.divf %169, %170 : vector<2x64xf32>
    %172 = arith.mulf %163, %143 : vector<2x64xf32>
    %173 = arith.mulf %157, %165 : vector<2x64xf32>
    %174 = arith.addf %172, %173 : vector<2x64xf32>
    %175 = math.tanh %174 : vector<2x64xf32>
    %176 = arith.mulf %171, %175 : vector<2x64xf32>
    %177 = vector.extract_strided_slice %19 {offsets = [0, 5, 0], sizes = [2, 1, 256], strides = [1, 1, 1]} : vector<2x8x256xf32> to vector<2x1x256xf32>
    %178 = vector.shape_cast %177 : vector<2x1x256xf32> to vector<2x256xf32>
    %cst_36 = arith.constant dense<0.000000e+00> : vector<2x256xf32>
    %179 = tpu.matmul %176, %13, %cst_36 {dimension_numbers = #tpu.dot_dimension_numbers<[1], [0], [0], [1], [0, 0, 1, 1], [], []>} : vector<2x64xf32>, vector<64x256xf32>, vector<2x256xf32> -> vector<2x256xf32>
    %180 = arith.addf %178, %179 : vector<2x256xf32>
    %181 = vector.broadcast %14 : vector<1x256xf32> to vector<2x256xf32>
    %182 = arith.addf %180, %181 : vector<2x256xf32>
    %183 = vector.extract_strided_slice %182 {offsets = [0, 0], sizes = [2, 64], strides = [1, 1]} : vector<2x256xf32> to vector<2x64xf32>
    %184 = arith.negf %183 : vector<2x64xf32>
    %185 = math.exp %184 : vector<2x64xf32>
    %cst_37 = arith.constant 1.000000e+00 : f32
    %186 = vector.broadcast %cst_37 : f32 to vector<2x64xf32>
    %187 = arith.addf %186, %185 : vector<2x64xf32>
    %188 = arith.divf %186, %187 : vector<2x64xf32>
    %189 = vector.extract_strided_slice %182 {offsets = [0, 64], sizes = [2, 64], strides = [1, 1]} : vector<2x256xf32> to vector<2x64xf32>
    %190 = arith.negf %189 : vector<2x64xf32>
    %191 = math.exp %190 : vector<2x64xf32>
    %cst_38 = arith.constant 1.000000e+00 : f32
    %192 = vector.broadcast %cst_38 : f32 to vector<2x64xf32>
    %193 = arith.addf %192, %191 : vector<2x64xf32>
    %194 = arith.divf %192, %193 : vector<2x64xf32>
    %195 = vector.extract_strided_slice %182 {offsets = [0, 128], sizes = [2, 64], strides = [1, 1]} : vector<2x256xf32> to vector<2x64xf32>
    %196 = math.tanh %195 : vector<2x64xf32>
    %197 = vector.extract_strided_slice %182 {offsets = [0, 192], sizes = [2, 64], strides = [1, 1]} : vector<2x256xf32> to vector<2x64xf32>
    %198 = arith.negf %197 : vector<2x64xf32>
    %199 = math.exp %198 : vector<2x64xf32>
    %cst_39 = arith.constant 1.000000e+00 : f32
    %200 = vector.broadcast %cst_39 : f32 to vector<2x64xf32>
    %201 = arith.addf %200, %199 : vector<2x64xf32>
    %202 = arith.divf %200, %201 : vector<2x64xf32>
    %203 = arith.mulf %194, %174 : vector<2x64xf32>
    %204 = arith.mulf %188, %196 : vector<2x64xf32>
    %205 = arith.addf %203, %204 : vector<2x64xf32>
    %206 = math.tanh %205 : vector<2x64xf32>
    %207 = arith.mulf %202, %206 : vector<2x64xf32>
    %208 = vector.extract_strided_slice %19 {offsets = [0, 6, 0], sizes = [2, 1, 256], strides = [1, 1, 1]} : vector<2x8x256xf32> to vector<2x1x256xf32>
    %209 = vector.shape_cast %208 : vector<2x1x256xf32> to vector<2x256xf32>
    %cst_40 = arith.constant dense<0.000000e+00> : vector<2x256xf32>
    %210 = tpu.matmul %207, %13, %cst_40 {dimension_numbers = #tpu.dot_dimension_numbers<[1], [0], [0], [1], [0, 0, 1, 1], [], []>} : vector<2x64xf32>, vector<64x256xf32>, vector<2x256xf32> -> vector<2x256xf32>
    %211 = arith.addf %209, %210 : vector<2x256xf32>
    %212 = vector.broadcast %14 : vector<1x256xf32> to vector<2x256xf32>
    %213 = arith.addf %211, %212 : vector<2x256xf32>
    %214 = vector.extract_strided_slice %213 {offsets = [0, 0], sizes = [2, 64], strides = [1, 1]} : vector<2x256xf32> to vector<2x64xf32>
    %215 = arith.negf %214 : vector<2x64xf32>
    %216 = math.exp %215 : vector<2x64xf32>
    %cst_41 = arith.constant 1.000000e+00 : f32
    %217 = vector.broadcast %cst_41 : f32 to vector<2x64xf32>
    %218 = arith.addf %217, %216 : vector<2x64xf32>
    %219 = arith.divf %217, %218 : vector<2x64xf32>
    %220 = vector.extract_strided_slice %213 {offsets = [0, 64], sizes = [2, 64], strides = [1, 1]} : vector<2x256xf32> to vector<2x64xf32>
    %221 = arith.negf %220 : vector<2x64xf32>
    %222 = math.exp %221 : vector<2x64xf32>
    %cst_42 = arith.constant 1.000000e+00 : f32
    %223 = vector.broadcast %cst_42 : f32 to vector<2x64xf32>
    %224 = arith.addf %223, %222 : vector<2x64xf32>
    %225 = arith.divf %223, %224 : vector<2x64xf32>
    %226 = vector.extract_strided_slice %213 {offsets = [0, 128], sizes = [2, 64], strides = [1, 1]} : vector<2x256xf32> to vector<2x64xf32>
    %227 = math.tanh %226 : vector<2x64xf32>
    %228 = vector.extract_strided_slice %213 {offsets = [0, 192], sizes = [2, 64], strides = [1, 1]} : vector<2x256xf32> to vector<2x64xf32>
    %229 = arith.negf %228 : vector<2x64xf32>
    %230 = math.exp %229 : vector<2x64xf32>
    %cst_43 = arith.constant 1.000000e+00 : f32
    %231 = vector.broadcast %cst_43 : f32 to vector<2x64xf32>
    %232 = arith.addf %231, %230 : vector<2x64xf32>
    %233 = arith.divf %231, %232 : vector<2x64xf32>
    %234 = arith.mulf %225, %205 : vector<2x64xf32>
    %235 = arith.mulf %219, %227 : vector<2x64xf32>
    %236 = arith.addf %234, %235 : vector<2x64xf32>
    %237 = math.tanh %236 : vector<2x64xf32>
    %238 = arith.mulf %233, %237 : vector<2x64xf32>
    %239 = vector.extract_strided_slice %19 {offsets = [0, 7, 0], sizes = [2, 1, 256], strides = [1, 1, 1]} : vector<2x8x256xf32> to vector<2x1x256xf32>
    %240 = vector.shape_cast %239 : vector<2x1x256xf32> to vector<2x256xf32>
    %cst_44 = arith.constant dense<0.000000e+00> : vector<2x256xf32>
    %241 = tpu.matmul %238, %13, %cst_44 {dimension_numbers = #tpu.dot_dimension_numbers<[1], [0], [0], [1], [0, 0, 1, 1], [], []>} : vector<2x64xf32>, vector<64x256xf32>, vector<2x256xf32> -> vector<2x256xf32>
    %242 = arith.addf %240, %241 : vector<2x256xf32>
    %243 = vector.broadcast %14 : vector<1x256xf32> to vector<2x256xf32>
    %244 = arith.addf %242, %243 : vector<2x256xf32>
    %245 = vector.extract_strided_slice %244 {offsets = [0, 0], sizes = [2, 64], strides = [1, 1]} : vector<2x256xf32> to vector<2x64xf32>
    %246 = arith.negf %245 : vector<2x64xf32>
    %247 = math.exp %246 : vector<2x64xf32>
    %cst_45 = arith.constant 1.000000e+00 : f32
    %248 = vector.broadcast %cst_45 : f32 to vector<2x64xf32>
    %249 = arith.addf %248, %247 : vector<2x64xf32>
    %250 = arith.divf %248, %249 : vector<2x64xf32>
    %251 = vector.extract_strided_slice %244 {offsets = [0, 64], sizes = [2, 64], strides = [1, 1]} : vector<2x256xf32> to vector<2x64xf32>
    %252 = arith.negf %251 : vector<2x64xf32>
    %253 = math.exp %252 : vector<2x64xf32>
    %cst_46 = arith.constant 1.000000e+00 : f32
    %254 = vector.broadcast %cst_46 : f32 to vector<2x64xf32>
    %255 = arith.addf %254, %253 : vector<2x64xf32>
    %256 = arith.divf %254, %255 : vector<2x64xf32>
    %257 = vector.extract_strided_slice %244 {offsets = [0, 128], sizes = [2, 64], strides = [1, 1]} : vector<2x256xf32> to vector<2x64xf32>
    %258 = math.tanh %257 : vector<2x64xf32>
    %259 = vector.extract_strided_slice %244 {offsets = [0, 192], sizes = [2, 64], strides = [1, 1]} : vector<2x256xf32> to vector<2x64xf32>
    %260 = arith.negf %259 : vector<2x64xf32>
    %261 = math.exp %260 : vector<2x64xf32>
    %cst_47 = arith.constant 1.000000e+00 : f32
    %262 = vector.broadcast %cst_47 : f32 to vector<2x64xf32>
    %263 = arith.addf %262, %261 : vector<2x64xf32>
    %264 = arith.divf %262, %263 : vector<2x64xf32>
    %265 = arith.mulf %256, %236 : vector<2x64xf32>
    %266 = arith.mulf %250, %258 : vector<2x64xf32>
    %267 = arith.addf %265, %266 : vector<2x64xf32>
    %268 = math.tanh %267 : vector<2x64xf32>
    %269 = arith.mulf %264, %268 : vector<2x64xf32>
    %270 = tpu.concatenate %52, %83, %114, %145, %176, %207, %238, %269 in 1 : vector<2x64xf32>, vector<2x64xf32>, vector<2x64xf32>, vector<2x64xf32>, vector<2x64xf32>, vector<2x64xf32>, vector<2x64xf32>, vector<2x64xf32> -> vector<2x512xf32>
    %c0_48 = arith.constant 0 : index
    %c0_49 = arith.constant 0 : index
    %271 = vector.load %arg7[%c0_48, %c0_49] : memref<512x128xf32, #tpu.memory_space<vmem>>, vector<512x128xf32>
    %cst_50 = arith.constant dense<0.000000e+00> : vector<2x128xf32>
    %272 = tpu.matmul %270, %271, %cst_50 {dimension_numbers = #tpu.dot_dimension_numbers<[1], [0], [0], [1], [0, 0, 1, 1], [], []>} : vector<2x512xf32>, vector<512x128xf32>, vector<2x128xf32> -> vector<2x128xf32>
    %c0_51 = arith.constant 0 : index
    %c0_52 = arith.constant 0 : index
    %273 = vector.load %arg8[%c0_51, %c0_52] : memref<1x128xf32, #tpu.memory_space<vmem>>, vector<1x128xf32>
    %274 = vector.broadcast %273 : vector<1x128xf32> to vector<2x128xf32>
    %275 = arith.addf %272, %274 : vector<2x128xf32>
    %c0_53 = arith.constant 0 : index
    %c0_54 = arith.constant 0 : index
    %276 = vector.load %arg9[%c0_53, %c0_54] : memref<2x16xf32, #tpu.memory_space<vmem>>, vector<2x16xf32>
    %c0_55 = arith.constant 0 : index
    %c0_56 = arith.constant 0 : index
    %277 = vector.load %arg10[%c0_55, %c0_56] : memref<16x64xf32, #tpu.memory_space<vmem>>, vector<16x64xf32>
    %cst_57 = arith.constant dense<0.000000e+00> : vector<2x64xf32>
    %278 = tpu.matmul %276, %277, %cst_57 {dimension_numbers = #tpu.dot_dimension_numbers<[1], [0], [0], [1], [0, 0, 1, 1], [], []>} : vector<2x16xf32>, vector<16x64xf32>, vector<2x64xf32> -> vector<2x64xf32>
    %c0_58 = arith.constant 0 : index
    %c0_59 = arith.constant 0 : index
    %279 = vector.load %arg11[%c0_58, %c0_59] : memref<1x64xf32, #tpu.memory_space<vmem>>, vector<1x64xf32>
    %280 = vector.broadcast %279 : vector<1x64xf32> to vector<2x64xf32>
    %281 = arith.addf %278, %280 : vector<2x64xf32>
    %cst_60 = arith.constant 0.000000e+00 : f32
    %282 = vector.broadcast %cst_60 : f32 to vector<2x64xf32>
    %283 = arith.maximumf %281, %282 : vector<2x64xf32>
    %c0_61 = arith.constant 0 : index
    %c0_62 = arith.constant 0 : index
    %284 = vector.load %arg12[%c0_61, %c0_62] : memref<64x128xf32, #tpu.memory_space<vmem>>, vector<64x128xf32>
    %cst_63 = arith.constant dense<0.000000e+00> : vector<2x128xf32>
    %285 = tpu.matmul %283, %284, %cst_63 {dimension_numbers = #tpu.dot_dimension_numbers<[1], [0], [0], [1], [0, 0, 1, 1], [], []>} : vector<2x64xf32>, vector<64x128xf32>, vector<2x128xf32> -> vector<2x128xf32>
    %c0_64 = arith.constant 0 : index
    %c0_65 = arith.constant 0 : index
    %286 = vector.load %arg13[%c0_64, %c0_65] : memref<1x128xf32, #tpu.memory_space<vmem>>, vector<1x128xf32>
    %287 = vector.broadcast %286 : vector<1x128xf32> to vector<2x128xf32>
    %288 = arith.addf %285, %287 : vector<2x128xf32>
    %cst_66 = arith.constant 0.000000e+00 : f32
    %289 = vector.broadcast %cst_66 : f32 to vector<2x128xf32>
    %290 = arith.maximumf %288, %289 : vector<2x128xf32>
    %c0_67 = arith.constant 0 : index
    %c0_68 = arith.constant 0 : index
    %291 = vector.load %arg14[%c0_67, %c0_68] : memref<384x128xf32, #tpu.memory_space<vmem>>, vector<128x128xf32>
    %cst_69 = arith.constant dense<0.000000e+00> : vector<2x128xf32>
    %292 = tpu.matmul %10, %291, %cst_69 {dimension_numbers = #tpu.dot_dimension_numbers<[1], [0], [0], [1], [0, 0, 1, 1], [], []>} : vector<2x128xf32>, vector<128x128xf32>, vector<2x128xf32> -> vector<2x128xf32>
    %c128 = arith.constant 128 : index
    %c0_70 = arith.constant 0 : index
    %293 = vector.load %arg14[%c128, %c0_70] : memref<384x128xf32, #tpu.memory_space<vmem>>, vector<128x128xf32>
    %cst_71 = arith.constant dense<0.000000e+00> : vector<2x128xf32>
    %294 = tpu.matmul %275, %293, %cst_71 {dimension_numbers = #tpu.dot_dimension_numbers<[1], [0], [0], [1], [0, 0, 1, 1], [], []>} : vector<2x128xf32>, vector<128x128xf32>, vector<2x128xf32> -> vector<2x128xf32>
    %295 = arith.addf %292, %294 : vector<2x128xf32>
    %c256 = arith.constant 256 : index
    %c0_72 = arith.constant 0 : index
    %296 = vector.load %arg14[%c256, %c0_72] : memref<384x128xf32, #tpu.memory_space<vmem>>, vector<128x128xf32>
    %cst_73 = arith.constant dense<0.000000e+00> : vector<2x128xf32>
    %297 = tpu.matmul %290, %296, %cst_73 {dimension_numbers = #tpu.dot_dimension_numbers<[1], [0], [0], [1], [0, 0, 1, 1], [], []>} : vector<2x128xf32>, vector<128x128xf32>, vector<2x128xf32> -> vector<2x128xf32>
    %298 = arith.addf %295, %297 : vector<2x128xf32>
    %c0_74 = arith.constant 0 : index
    %c0_75 = arith.constant 0 : index
    %299 = vector.load %arg15[%c0_74, %c0_75] : memref<1x128xf32, #tpu.memory_space<vmem>>, vector<1x128xf32>
    %300 = vector.broadcast %299 : vector<1x128xf32> to vector<2x128xf32>
    %301 = arith.addf %298, %300 : vector<2x128xf32>
    %cst_76 = arith.constant 0.000000e+00 : f32
    %302 = vector.broadcast %cst_76 : f32 to vector<2x128xf32>
    %303 = arith.maximumf %301, %302 : vector<2x128xf32>
    %c0_77 = arith.constant 0 : index
    %c0_78 = arith.constant 0 : index
    %304 = vector.load %arg16[%c0_77, %c0_78] : memref<128x1xf32, #tpu.memory_space<vmem>>, vector<128x1xf32>
    %cst_79 = arith.constant dense<0.000000e+00> : vector<2x1xf32>
    %305 = tpu.matmul %303, %304, %cst_79 {dimension_numbers = #tpu.dot_dimension_numbers<[1], [0], [0], [1], [0, 0, 1, 1], [], []>} : vector<2x128xf32>, vector<128x1xf32>, vector<2x1xf32> -> vector<2x1xf32>
    %c0_80 = arith.constant 0 : index
    %c0_81 = arith.constant 0 : index
    %306 = vector.load %arg17[%c0_80, %c0_81] : memref<1x1xf32, #tpu.memory_space<vmem>>, vector<1x1xf32>
    %307 = vector.broadcast %306 : vector<1x1xf32> to vector<2x1xf32>
    %308 = arith.addf %305, %307 : vector<2x1xf32>
    %c0_82 = arith.constant 0 : index
    %c0_83 = arith.constant 0 : index
    %309 = vector.load %arg18[%c0_82, %c0_83] : memref<2x1xf32, #tpu.memory_space<vmem>>, vector<2x1xf32>
    tpu.vector_store %arg18[%c0_82, %c0_83], %308 {strides = array<i32>} : memref<2x1xf32, #tpu.memory_space<vmem>>, vector<2x1xf32>,
    return
  }
}

</mosaic_0001>

<llo_original>
// kernel: forward.3
$region0: #{forward.3}
  #allocation0 [shape = 'u32[]', space=smem, size = 0x4, offset = 0x4, fixed_abs, tag = 'smem constant byte address 0x4 - core index']
  #allocation1 [shape = 'u32[144,128]{1,0:T(1,128)}', space=vmem, size = 0x12000, scoped, tag = 'internal scratch']
  %s0 = inlined_call_operand.vmem [shape: f32[4,256,27], index: 0, kind: input, shape index: {}]
  %s1 = inlined_call_operand.vmem [shape: f32[27,16], index: 1, kind: input, shape index: {}]
  %s2 = inlined_call_operand.vmem [shape: f32[1,16], index: 2, kind: input, shape index: {}]
  %s3 = inlined_call_operand.vmem [shape: f32[256,16], index: 3, kind: output, shape index: {}]
  %s4 = sld [smem:[#allocation0]]
  $region83: #{forward.3} parent=0
    _
  %s6 = ssub.s32 1, %s4
  %s7 = scalar_select 0, %s6, %s4
  $region1: #{forward.3} parent=0
    #allocation2 [shape = 'u8[524288]{0}', space=vmem, size = 0x80000, scoped, tag = 'input window, operand 0']
    loop: start=0, step=1, limit=4
    $region2: #{forward.3} parent=1 // loop_pre_header
      _
    $region3: #{forward.3} parent=1 // loop_header
      %s9 = sphi 0, %s13
      %p10 = scmp.ge.s32.totalorder %s9, 4
      %s19 = sphi 0, %s21
      %s22 = sphi 0, %s19
      %s23 = sphi 0, %s22
      %s39 = sphi 0, %s23
      %s43 = sphi 0, %s43
      %s45 = sphi 0, %s43
      %s46 = sphi 0, %s45
      %s60 = sphi 0, %s46
      %s64 = sphi 0, %s64
      %s66 = sphi 0, %s64
      %s67 = sphi 0, %s66
      %s81 = sphi 0, %s67
      %s87 = sphi 0, %s89
      %s90 = sphi 0, %s87
      %s91 = sphi 0, %s90
      %s107 = sphi 0, %s91
    $region4: #{forward.3} parent=1 // loop_header_branch
      %12 = sbr.rel (%p10) target = $region8
    $region5: #{forward.3} parent=1 // loop_body
      %s14 = ssub.s32 %s9, 1
      %s15 = ssub.s32 %s9, 2
      %s16 = sadd.s32 %s9, 1
      %s17 = ssub.s32 %s9, %s16
      %p18 = scmp.eq.s32.totalorder %s17, 0
      %s20 = sadd.s32 %s19, 1
      %s21 = scalar_select %p18, %s19, %s20
      %p24 = pneg %p18
      %p25 = scmp.eq.s32.totalorder %s9, 1
      %p26 = por %p24, %p25
      %p27 = scmp.ne.s32.totalorder %s19, %s22
      %p28 = scmp.eq.s32.totalorder %s9, 0
      %p29 = por %p27, %p28
      %p30 = scmp.ne.s32.totalorder %s19, %s22
      %p31 = scmp.eq.s32.totalorder %s14, 1
      %p32 = por %p30, %p31
      %p33 = scmp.ne.s32.totalorder %s22, %s23
      %p34 = scmp.eq.s32.totalorder %s14, 0
      %p35 = por %p33, %p34
      %p36 = scmp.ne.s32.totalorder %s22, %s23
      %p37 = scmp.eq.s32.totalorder %s15, 1
      %p38 = por %p36, %p37
      %p40 = scmp.ne.s32.totalorder %s23, %s39
      %p41 = scmp.eq.s32.totalorder %s15, 0
      %p42 = por %p40, %p41
      %s44 = sadd.s32 %s43, 1
      %p47 = scmp.eq.s32.totalorder %s9, 1
      %p48 = scmp.ne.s32.totalorder %s43, %s45
      %p49 = scmp.eq.s32.totalorder %s9, 0
      %p50 = por %p48, %p49
      %p51 = scmp.ne.s32.totalorder %s43, %s45
      %p52 = scmp.eq.s32.totalorder %s14, 1
      %p53 = por %p51, %p52
      %p54 = scmp.ne.s32.totalorder %s45, %s46
      %p55 = scmp.eq.s32.totalorder %s14, 0
      %p56 = por %p54, %p55
      %p57 = scmp.ne.s32.totalorder %s45, %s46
      %p58 = scmp.eq.s32.totalorder %s15, 1
      %p59 = por %p57, %p58
      %p61 = scmp.ne.s32.totalorder %s46, %s60
      %p62 = scmp.eq.s32.totalorder %s15, 0
      %p63 = por %p61, %p62
      %s65 = sadd.s32 %s64, 1
      %p68 = scmp.eq.s32.totalorder %s9, 1
      %p69 = scmp.ne.s32.totalorder %s64, %s66
      %p70 = scmp.eq.s32.totalorder %s9, 0
      %p71 = por %p69, %p70
      %p72 = scmp.ne.s32.totalorder %s64, %s66
      %p73 = scmp.eq.s32.totalorder %s14, 1
      %p74 = por %p72, %p73
      %p75 = scmp.ne.s32.totalorder %s66, %s67
      %p76 = scmp.eq.s32.totalorder %s14, 0
      %p77 = por %p75, %p76
      %p78 = scmp.ne.s32.totalorder %s66, %s67
      %p79 = scmp.eq.s32.totalorder %s15, 1
      %p80 = por %p78, %p79
      %p82 = scmp.ne.s32.totalorder %s67, %s81
      %p83 = scmp.eq.s32.totalorder %s15, 0
      %p84 = por %p82, %p83
      %s85 = ssub.s32 %s9, %s16
      %p86 = scmp.eq.s32.totalorder %s85, 0
      %s88 = sadd.s32 %s87, 1
      %s89 = scalar_select %p86, %s87, %s88
      %p92 = pneg %p86
      %p93 = scmp.eq.s32.totalorder %s9, 1
      %p94 = por %p92, %p93
      %p95 = scmp.ne.s32.totalorder %s87, %s90
      %p96 = scmp.eq.s32.totalorder %s9, 0
      %p97 = por %p95, %p96
      %p98 = scmp.ne.s32.totalorder %s87, %s90
      %p99 = scmp.eq.s32.totalorder %s14, 1
      %p100 = por %p98, %p99
      %p101 = scmp.ne.s32.totalorder %s90, %s91
      %p102 = scmp.eq.s32.totalorder %s14, 0
      %p103 = por %p101, %p102
      %p104 = scmp.ne.s32.totalorder %s90, %s91
      %p105 = scmp.eq.s32.totalorder %s15, 1
      %p106 = por %p104, %p105
      %p108 = scmp.ne.s32.totalorder %s91, %s107
      %p109 = scmp.eq.s32.totalorder %s15, 0
      %p110 = por %p108, %p109
      %p111 = scmp.le.s32.totalorder 1, %s9
      %p112 = scmp.lt.s32.totalorder %s9, 3
      %p113 = pnand %p111, %p112
      %p114 = pneg %p113
      // Predicated region
      $region9: #{forward.3} parent=5 // pred_check
        _
      $region10: #{forward.3} parent=5 // pred_check_branch
        %116 = sbr.rel (%p113) target = $region12
      $region11: #{forward.3} parent=5 // pred_region
        %s117 = ssub.s32 %s9, 1
        // Predicated region
        $region13: #{forward.3} parent=11 // pred_check
          %p118 = pneg %p56
        $region14: #{forward.3} parent=11 // pred_check_branch
          %120 = sbr.rel (%p118) target = $region16
        $region15: #{forward.3} parent=11 // pred_region
          _
        $region16: #{forward.3} parent=11 // pred_fallthru
          _
        // Predicated region
        $region17: #{forward.3} parent=11 // pred_check
          %p121 = pneg %p77
        $region18: #{forward.3} parent=11 // pred_check_branch
          %123 = sbr.rel (%p121) target = $region20
        $region19: #{forward.3} parent=11 // pred_region
          _
        $region20: #{forward.3} parent=11 // pred_fallthru
          _
      $region12: #{forward.3} parent=5 // pred_fallthru
        _
      %p124 = scmp.lt.s32.totalorder %s9, 2
      // Predicated region
      $region21: #{forward.3} parent=5 // pred_check
        %p125 = pneg %p124
      $region22: #{forward.3} parent=5 // pred_check_branch
        %127 = sbr.rel (%p125) target = $region24
      $region23: #{forward.3} parent=5 // pred_region
        // Predicated region
        $region25: #{forward.3} parent=23 // pred_check
          %p128 = pneg %p29
        $region26: #{forward.3} parent=23 // pred_check_branch
          %130 = sbr.rel (%p128) target = $region28
        $region27: #{forward.3} parent=23 // pred_region
          %s131 = sand.u32 %s19, 1
          %s132 = sand.u32 %s19, 1
          %s133 = smul.addr %s132, 512
          %s134 = scalar_lea.vmem [#allocation2], %s133
          %s135 = smul.u32 16, %s9
          %s136 = smul.addr %s135, 8
          %s137 = scalar_lea.vmem %s0, %s136
          // Predicated region
          $region29: #{forward.3} parent=27 // pred_check
            _
          $region30: #{forward.3} parent=27 // pred_check_branch
            %139 = sbr.rel (0) target = $region32
          $region31: #{forward.3} parent=27 // pred_region
            // Predicated region
            $region33: #{forward.3} parent=31 // pred_check
              _
            $region34: #{forward.3} parent=31 // pred_check_branch
              %141 = sbr.rel (0) target = $region36
            $region35: #{forward.3} parent=31 // pred_region
              // Predicated region
              $region48: #{forward.3} parent=35 // pred_check
                _
              $region49: #{forward.3} parent=35 // pred_check_branch
                %282 = sbr.rel (0) target = $region51
              $region50: #{forward.3} parent=35 // pred_region
                loop: start=0, step=1, limit=1
                $region52: #{forward.3} parent=50 // loop_pre_header
                  _
                $region53: #{forward.3} parent=50 // loop_header
                  %s284 = sphi 0, %s288
                  %p285 = scmp.ge.s32.totalorder %s284, 1
                  %s289 = sphi %s137, %s137
                  %s290 = sphi %s134, %s134
                $region54: #{forward.3} parent=50 // loop_header_branch
                  %287 = sbr.rel (%p285) target = $region58
                $region55: #{forward.3} parent=50 // loop_body
                  %v291 = vld [vmem:[%s289] sm:$0xff]
                  %292 = vst [vmem:[%s290] sm:$0xff] %v291
                  %v293 = vld [vmem:[%s289 + $0x8] sm:$0xff]
                  %294 = vst [vmem:[%s290 + $0x8] sm:$0xff] %v293
                  %v295 = vld [vmem:[%s289 + $0x10] sm:$0xff]
                  %296 = vst [vmem:[%s290 + $0x10] sm:$0xff] %v295
                  %v297 = vld [vmem:[%s289 + $0x18] sm:$0xff]
                  %298 = vst [vmem:[%s290 + $0x18] sm:$0xff] %v297
                  %v299 = vld [vmem:[%s289 + $0x20] sm:$0xff]
                  %300 = vst [vmem:[%s290 + $0x20] sm:$0xff] %v299
                  %v301 = vld [vmem:[%s289 + $0x28] sm:$0xff]
                  %302 = vst [vmem:[%s290 + $0x28] sm:$0xff] %v301
                  %v303 = vld [vmem:[%s289 + $0x30] sm:$0xff]
                  %304 = vst [vmem:[%s290 + $0x30] sm:$0xff] %v303
                  %v305 = vld [vmem:[%s289 + $0x38] sm:$0xff]
                  %306 = vst [vmem:[%s290 + $0x38] sm:$0xff] %v305
                  %v307 = vld [vmem:[%s289 + $0x40] sm:$0xff]
                  %308 = vst [vmem:[%s290 + $0x40] sm:$0xff] %v307
                  %v309 = vld [vmem:[%s289 + $0x48] sm:$0xff]
                  %310 = vst [vmem:[%s290 + $0x48] sm:$0xff] %v309
                  %v311 = vld [vmem:[%s289 + $0x50] sm:$0xff]
                  %312 = vst [vmem:[%s290 + $0x50] sm:$0xff] %v311
                  %v313 = vld [vmem:[%s289 + $0x58] sm:$0xff]
                  %314 = vst [vmem:[%s290 + $0x58] sm:$0xff] %v313
                  %v315 = vld [vmem:[%s289 + $0x60] sm:$0xff]
                  %316 = vst [vmem:[%s290 + $0x60] sm:$0xff] %v315
                  %v317 = vld [vmem:[%s289 + $0x68] sm:$0xff]
                  %318 = vst [vmem:[%s290 + $0x68] sm:$0xff] %v317
                  %v319 = vld [vmem:[%s289 + $0x70] sm:$0xff]
                  %320 = vst [vmem:[%s290 + $0x70] sm:$0xff] %v319
                  %v321 = vld [vmem:[%s289 + $0x78] sm:$0xff]
                  %322 = vst [vmem:[%s290 + $0x78] sm:$0xff] %v321
                  %v323 = vld [vmem:[%s289 + $0x100] sm:$0xff]
                  %324 = vst [vmem:[%s290 + $0x80] sm:$0xff] %v323
                  %v325 = vld [vmem:[%s289 + $0x108] sm:$0xff]
                  %326 = vst [vmem:[%s290 + $0x88] sm:$0xff] %v325
                  %v327 = vld [vmem:[%s289 + $0x110] sm:$0xff]
                  %328 = vst [vmem:[%s290 + $0x90] sm:$0xff] %v327
                  %v329 = vld [vmem:[%s289 + $0x118] sm:$0xff]
                  %330 = vst [vmem:[%s290 + $0x98] sm:$0xff] %v329
                  %v331 = vld [vmem:[%s289 + $0x120] sm:$0xff]
                  %332 = vst [vmem:[%s290 + $0xa0] sm:$0xff] %v331
                  %v333 = vld [vmem:[%s289 + $0x128] sm:$0xff]
                  %334 = vst [vmem:[%s290 + $0xa8] sm:$0xff] %v333
                  %v335 = vld [vmem:[%s289 + $0x130] sm:$0xff]
                  %336 = vst [vmem:[%s290 + $0xb0] sm:$0xff] %v335
                  %v337 = vld [vmem:[%s289 + $0x138] sm:$0xff]
                  %338 = vst [vmem:[%s290 + $0xb8] sm:$0xff] %v337
                  %v339 = vld [vmem:[%s289 + $0x140] sm:$0xff]
                  %340 = vst [vmem:[%s290 + $0xc0] sm:$0xff] %v339
                  %v341 = vld [vmem:[%s289 + $0x148] sm:$0xff]
                  %342 = vst [vmem:[%s290 + $0xc8] sm:$0xff] %v341
                  %v343 = vld [vmem:[%s289 + $0x150] sm:$0xff]
                  %344 = vst [vmem:[%s290 + $0xd0] sm:$0xff] %v343
                  %v345 = vld [vmem:[%s289 + $0x158] sm:$0xff]
                  %346 = vst [vmem:[%s290 + $0xd8] sm:$0xff] %v345
                  %v347 = vld [vmem:[%s289 + $0x160] sm:$0xff]
                  %348 = vst [vmem:[%s290 + $0xe0] sm:$0xff] %v347
                  %v349 = vld [vmem:[%s289 + $0x168] sm:$0xff]
                  %350 = vst [vmem:[%s290 + $0xe8] sm:$0xff] %v349
                  %v351 = vld [vmem:[%s289 + $0x170] sm:$0xff]
                  %352 = vst [vmem:[%s290 + $0xf0] sm:$0xff] %v351
                  %v353 = vld [vmem:[%s289 + $0x178] sm:$0xff]
                  %354 = vst [vmem:[%s290 + $0xf8] sm:$0xff] %v353
                  %v355 = vld [vmem:[%s289 + $0x200] sm:$0xff]
                  %356 = vst [vmem:[%s290 + $0x100] sm:$0xff] %v355
                  %v357 = vld [vmem:[%s289 + $0x208] sm:$0xff]
                  %358 = vst [vmem:[%s290 + $0x108] sm:$0xff] %v357
                  %v359 = vld [vmem:[%s289 + $0x210] sm:$0xff]
                  %360 = vst [vmem:[%s290 + $0x110] sm:$0xff] %v359
                  %v361 = vld [vmem:[%s289 + $0x218] sm:$0xff]
                  %362 = vst [vmem:[%s290 + $0x118] sm:$0xff] %v361
                  %v363 = vld [vmem:[%s289 + $0x220] sm:$0xff]
                  %364 = vst [vmem:[%s290 + $0x120] sm:$0xff] %v363
                  %v365 = vld [vmem:[%s289 + $0x228] sm:$0xff]
                  %366 = vst [vmem:[%s290 + $0x128] sm:$0xff] %v365
                  %v367 = vld [vmem:[%s289 + $0x230] sm:$0xff]
                  %368 = vst [vmem:[%s290 + $0x130] sm:$0xff] %v367
                  %v369 = vld [vmem:[%s289 + $0x238] sm:$0xff]
                  %370 = vst [vmem:[%s290 + $0x138] sm:$0xff] %v369
                  %v371 = vld [vmem:[%s289 + $0x240] sm:$0xff]
                  %372 = vst [vmem:[%s290 + $0x140] sm:$0xff] %v371
                  %v373 = vld [vmem:[%s289 + $0x248] sm:$0xff]
                  %374 = vst [vmem:[%s290 + $0x148] sm:$0xff] %v373
                  %v375 = vld [vmem:[%s289 + $0x250] sm:$0xff]
                  %376 = vst [vmem:[%s290 + $0x150] sm:$0xff] %v375
                  %v377 = vld [vmem:[%s289 + $0x258] sm:$0xff]
                  %378 = vst [vmem:[%s290 + $0x158] sm:$0xff] %v377
                  %v379 = vld [vmem:[%s289 + $0x260] sm:$0xff]
                  %380 = vst [vmem:[%s290 + $0x160] sm:$0xff] %v379
                  %v381 = vld [vmem:[%s289 + $0x268] sm:$0xff]
                  %382 = vst [vmem:[%s290 + $0x168] sm:$0xff] %v381
                  %v383 = vld [vmem:[%s289 + $0x270] sm:$0xff]
                  %384 = vst [vmem:[%s290 + $0x170] sm:$0xff] %v383
                  %v385 = vld [vmem:[%s289 + $0x278] sm:$0xff]
                  %386 = vst [vmem:[%s290 + $0x178] sm:$0xff] %v385
                  %v387 = vld [vmem:[%s289 + $0x300] sm:$0xff]
                  %388 = vst [vmem:[%s290 + $0x180] sm:$0xff] %v387
                  %v389 = vld [vmem:[%s289 + $0x308] sm:$0xff]
                  %390 = vst [vmem:[%s290 + $0x188] sm:$0xff] %v389
                  %v391 = vld [vmem:[%s289 + $0x310] sm:$0xff]
                  %392 = vst [vmem:[%s290 + $0x190] sm:$0xff] %v391
                  %v393 = vld [vmem:[%s289 + $0x318] sm:$0xff]
                  %394 = vst [vmem:[%s290 + $0x198] sm:$0xff] %v393
                  %v395 = vld [vmem:[%s289 + $0x320] sm:$0xff]
                  %396 = vst [vmem:[%s290 + $0x1a0] sm:$0xff] %v395
                  %v397 = vld [vmem:[%s289 + $0x328] sm:$0xff]
                  %398 = vst [vmem:[%s290 + $0x1a8] sm:$0xff] %v397
                  %v399 = vld [vmem:[%s289 + $0x330] sm:$0xff]
                  %400 = vst [vmem:[%s290 + $0x1b0] sm:$0xff] %v399
                  %v401 = vld [vmem:[%s289 + $0x338] sm:$0xff]
                  %402 = vst [vmem:[%s290 + $0x1b8] sm:$0xff] %v401
                  %v403 = vld [vmem:[%s289 + $0x340] sm:$0xff]
                  %404 = vst [vmem:[%s290 + $0x1c0] sm:$0xff] %v403
                  %v405 = vld [vmem:[%s289 + $0x348] sm:$0xff]
                  %406 = vst [vmem:[%s290 + $0x1c8] sm:$0xff] %v405
                  %v407 = vld [vmem:[%s289 + $0x350] sm:$0xff]
                  %408 = vst [vmem:[%s290 + $0x1d0] sm:$0xff] %v407
                  %v409 = vld [vmem:[%s289 + $0x358] sm:$0xff]
                  %410 = vst [vmem:[%s290 + $0x1d8] sm:$0xff] %v409
                  %v411 = vld [vmem:[%s289 + $0x360] sm:$0xff]
                  %412 = vst [vmem:[%s290 + $0x1e0] sm:$0xff] %v411
                  %v413 = vld [vmem:[%s289 + $0x368] sm:$0xff]
                  %414 = vst [vmem:[%s290 + $0x1e8] sm:$0xff] %v413
                  %v415 = vld [vmem:[%s289 + $0x370] sm:$0xff]
                  %416 = vst [vmem:[%s290 + $0x1f0] sm:$0xff] %v415
                  %v417 = vld [vmem:[%s289 + $0x378] sm:$0xff]
                  %418 = vst [vmem:[%s290 + $0x1f8] sm:$0xff] %v417
                $region56: #{forward.3} parent=50 // loop_footer
                  %s288 = sadd.s32 1, %s284
                $region57: #{forward.3} parent=50 // loop_footer_branch
                  %283 = sbr.rel target = $region53
                $region58: #{forward.3} parent=50 // loop_exit
                  _
              $region51: #{forward.3} parent=35 // pred_fallthru
                _
              // Predicated region
              $region59: #{forward.3} parent=35 // pred_check
                _
              $region60: #{forward.3} parent=35 // pred_check_branch
                %420 = sbr.rel target = $region62
              $region61: #{forward.3} parent=35 // pred_region
                _
              $region62: #{forward.3} parent=35 // pred_fallthru
                _
            $region36: #{forward.3} parent=31 // pred_fallthru
              _
            // Predicated region
            $region37: #{forward.3} parent=31 // pred_check
              _
            $region38: #{forward.3} parent=31 // pred_check_branch
              %143 = sbr.rel target = $region40
            $region39: #{forward.3} parent=31 // pred_region
              loop: start=0, step=1, limit=1
              $region41: #{forward.3} parent=39 // loop_pre_header
                _
              $region42: #{forward.3} parent=39 // loop_header
                %s146 = sphi 0, %s150
                %p147 = scmp.ge.s32.totalorder %s146, 1
                %s151 = sphi %s137, %s137
                %s152 = sphi %s134, %s134
              $region43: #{forward.3} parent=39 // loop_header_branch
                %149 = sbr.rel (%p147) target = $region47
              $region44: #{forward.3} parent=39 // loop_body
                %v153 = vld [vmem:[%s151] sm:$0xff]
                %154 = vst [vmem:[%s152] sm:$0xff] %v153
                %v155 = vld [vmem:[%s151 + $0x8] sm:$0xff]
                %156 = vst [vmem:[%s152 + $0x8] sm:$0xff] %v155
                %v157 = vld [vmem:[%s151 + $0x10] sm:$0xff]
                %158 = vst [vmem:[%s152 + $0x10] sm:$0xff] %v157
                %v159 = vld [vmem:[%s151 + $0x18] sm:$0xff]
                %160 = vst [vmem:[%s152 + $0x18] sm:$0xff] %v159
                %v161 = vld [vmem:[%s151 + $0x20] sm:$0xff]
                %162 = vst [vmem:[%s152 + $0x20] sm:$0xff] %v161
                %v163 = vld [vmem:[%s151 + $0x28] sm:$0xff]
                %164 = vst [vmem:[%s152 + $0x28] sm:$0xff] %v163
                %v165 = vld [vmem:[%s151 + $0x30] sm:$0xff]
                %166 = vst [vmem:[%s152 + $0x30] sm:$0xff] %v165
                %v167 = vld [vmem:[%s151 + $0x38] sm:$0xff]
                %168 = vst [vmem:[%s152 + $0x38] sm:$0xff] %v167
                %v169 = vld [vmem:[%s151 + $0x40] sm:$0xff]
                %170 = vst [vmem:[%s152 + $0x40] sm:$0xff] %v169
                %v171 = vld [vmem:[%s151 + $0x48] sm:$0xff]
                %172 = vst [vmem:[%s152 + $0x48] sm:$0xff] %v171
                %v173 = vld [vmem:[%s151 + $0x50] sm:$0xff]
                %174 = vst [vmem:[%s152 + $0x50] sm:$0xff] %v173
                %v175 = vld [vmem:[%s151 + $0x58] sm:$0xff]
                %176 = vst [vmem:[%s152 + $0x58] sm:$0xff] %v175
                %v177 = vld [vmem:[%s151 + $0x60] sm:$0xff]
                %178 = vst [vmem:[%s152 + $0x60] sm:$0xff] %v177
                %v179 = vld [vmem:[%s151 + $0x68] sm:$0xff]
                %180 = vst [vmem:[%s152 + $0x68] sm:$0xff] %v179
                %v181 = vld [vmem:[%s151 + $0x70] sm:$0xff]
                %182 = vst [vmem:[%s152 + $0x70] sm:$0xff] %v181
                %v183 = vld [vmem:[%s151 + $0x78] sm:$0xff]
                %184 = vst [vmem:[%s152 + $0x78] sm:$0xff] %v183
                %v185 = vld [vmem:[%s151 + $0x100] sm:$0xff]
                %186 = vst [vmem:[%s152 + $0x80] sm:$0xff] %v185
                %v187 = vld [vmem:[%s151 + $0x108] sm:$0xff]
                %188 = vst [vmem:[%s152 + $0x88] sm:$0xff] %v187
                %v189 = vld [vmem:[%s151 + $0x110] sm:$0xff]
                %190 = vst [vmem:[%s152 + $0x90] sm:$0xff] %v189
                %v191 = vld [vmem:[%s151 + $0x118] sm:$0xff]
                %192 = vst [vmem:[%s152 + $0x98] sm:$0xff] %v191
                %v193 = vld [vmem:[%s151 + $0x120] sm:$0xff]
                %194 = vst [vmem:[%s152 + $0xa0] sm:$0xff] %v193
                %v195 = vld [vmem:[%s151 + $0x128] sm:$0xff]
                %196 = vst [vmem:[%s152 + $0xa8] sm:$0xff] %v195
                %v197 = vld [vmem:[%s151 + $0x130] sm:$0xff]
                %198 = vst [vmem:[%s152 + $0xb0] sm:$0xff] %v197
                %v199 = vld [vmem:[%s151 + $0x138] sm:$0xff]
                %200 = vst [vmem:[%s152 + $0xb8] sm:$0xff] %v199
                %v201 = vld [vmem:[%s151 + $0x140] sm:$0xff]
                %202 = vst [vmem:[%s152 + $0xc0] sm:$0xff] %v201
                %v203 = vld [vmem:[%s151 + $0x148] sm:$0xff]
                %204 = vst [vmem:[%s152 + $0xc8] sm:$0xff] %v203
                %v205 = vld [vmem:[%s151 + $0x150] sm:$0xff]
                %206 = vst [vmem:[%s152 + $0xd0] sm:$0xff] %v205
                %v207 = vld [vmem:[%s151 + $0x158] sm:$0xff]
                %208 = vst [vmem:[%s152 + $0xd8] sm:$0xff] %v207
                %v209 = vld [vmem:[%s151 + $0x160] sm:$0xff]
                %210 = vst [vmem:[%s152 + $0xe0] sm:$0xff] %v209
                %v211 = vld [vmem:[%s151 + $0x168] sm:$0xff]
                %212 = vst [vmem:[%s152 + $0xe8] sm:$0xff] %v211
                %v213 = vld [vmem:[%s151 + $0x170] sm:$0xff]
                %214 = vst [vmem:[%s152 + $0xf0] sm:$0xff] %v213
                %v215 = vld [vmem:[%s151 + $0x178] sm:$0xff]
                %216 = vst [vmem:[%s152 + $0xf8] sm:$0xff] %v215
                %v217 = vld [vmem:[%s151 + $0x200] sm:$0xff]
                %218 = vst [vmem:[%s152 + $0x100] sm:$0xff] %v217
                %v219 = vld [vmem:[%s151 + $0x208] sm:$0xff]
                %220 = vst [vmem:[%s152 + $0x108] sm:$0xff] %v219
                %v221 = vld [vmem:[%s151 + $0x210] sm:$0xff]
                %222 = vst [vmem:[%s152 + $0x110] sm:$0xff] %v221
                %v223 = vld [vmem:[%s151 + $0x218] sm:$0xff]
                %224 = vst [vmem:[%s152 + $0x118] sm:$0xff] %v223
                %v225 = vld [vmem:[%s151 + $0x220] sm:$0xff]
                %226 = vst [vmem:[%s152 + $0x120] sm:$0xff] %v225
                %v227 = vld [vmem:[%s151 + $0x228] sm:$0xff]
                %228 = vst [vmem:[%s152 + $0x128] sm:$0xff] %v227
                %v229 = vld [vmem:[%s151 + $0x230] sm:$0xff]
                %230 = vst [vmem:[%s152 + $0x130] sm:$0xff] %v229
                %v231 = vld [vmem:[%s151 + $0x238] sm:$0xff]
                %232 = vst [vmem:[%s152 + $0x138] sm:$0xff] %v231
                %v233 = vld [vmem:[%s151 + $0x240] sm:$0xff]
                %234 = vst [vmem:[%s152 + $0x140] sm:$0xff] %v233
                %v235 = vld [vmem:[%s151 + $0x248] sm:$0xff]
                %236 = vst [vmem:[%s152 + $0x148] sm:$0xff] %v235
                %v237 = vld [vmem:[%s151 + $0x250] sm:$0xff]
                %238 = vst [vmem:[%s152 + $0x150] sm:$0xff] %v237
                %v239 = vld [vmem:[%s151 + $0x258] sm:$0xff]
                %240 = vst [vmem:[%s152 + $0x158] sm:$0xff] %v239
                %v241 = vld [vmem:[%s151 + $0x260] sm:$0xff]
                %242 = vst [vmem:[%s152 + $0x160] sm:$0xff] %v241
                %v243 = vld [vmem:[%s151 + $0x268] sm:$0xff]
                %244 = vst [vmem:[%s152 + $0x168] sm:$0xff] %v243
                %v245 = vld [vmem:[%s151 + $0x270] sm:$0xff]
                %246 = vst [vmem:[%s152 + $0x170] sm:$0xff] %v245
                %v247 = vld [vmem:[%s151 + $0x278] sm:$0xff]
                %248 = vst [vmem:[%s152 + $0x178] sm:$0xff] %v247
                %v249 = vld [vmem:[%s151 + $0x300] sm:$0xff]
                %250 = vst [vmem:[%s152 + $0x180] sm:$0xff] %v249
                %v251 = vld [vmem:[%s151 + $0x308] sm:$0xff]
                %252 = vst [vmem:[%s152 + $0x188] sm:$0xff] %v251
                %v253 = vld [vmem:[%s151 + $0x310] sm:$0xff]
                %254 = vst [vmem:[%s152 + $0x190] sm:$0xff] %v253
                %v255 = vld [vmem:[%s151 + $0x318] sm:$0xff]
                %256 = vst [vmem:[%s152 + $0x198] sm:$0xff] %v255
                %v257 = vld [vmem:[%s151 + $0x320] sm:$0xff]
                %258 = vst [vmem:[%s152 + $0x1a0] sm:$0xff] %v257
                %v259 = vld [vmem:[%s151 + $0x328] sm:$0xff]
                %260 = vst [vmem:[%s152 + $0x1a8] sm:$0xff] %v259
                %v261 = vld [vmem:[%s151 + $0x330] sm:$0xff]
                %262 = vst [vmem:[%s152 + $0x1b0] sm:$0xff] %v261
                %v263 = vld [vmem:[%s151 + $0x338] sm:$0xff]
                %264 = vst [vmem:[%s152 + $0x1b8] sm:$0xff] %v263
                %v265 = vld [vmem:[%s151 + $0x340] sm:$0xff]
                %266 = vst [vmem:[%s152 + $0x1c0] sm:$0xff] %v265
                %v267 = vld [vmem:[%s151 + $0x348] sm:$0xff]
                %268 = vst [vmem:[%s152 + $0x1c8] sm:$0xff] %v267
                %v269 = vld [vmem:[%s151 + $0x350] sm:$0xff]
                %270 = vst [vmem:[%s152 + $0x1d0] sm:$0xff] %v269
                %v271 = vld [vmem:[%s151 + $0x358] sm:$0xff]
                %272 = vst [vmem:[%s152 + $0x1d8] sm:$0xff] %v271
                %v273 = vld [vmem:[%s151 + $0x360] sm:$0xff]
                %274 = vst [vmem:[%s152 + $0x1e0] sm:$0xff] %v273
                %v275 = vld [vmem:[%s151 + $0x368] sm:$0xff]
                %276 = vst [vmem:[%s152 + $0x1e8] sm:$0xff] %v275
                %v277 = vld [vmem:[%s151 + $0x370] sm:$0xff]
                %278 = vst [vmem:[%s152 + $0x1f0] sm:$0xff] %v277
                %v279 = vld [vmem:[%s151 + $0x378] sm:$0xff]
                %280 = vst [vmem:[%s152 + $0x1f8] sm:$0xff] %v279
              $region45: #{forward.3} parent=39 // loop_footer
                %s150 = sadd.s32 1, %s146
              $region46: #{forward.3} parent=39 // loop_footer_branch
                %145 = sbr.rel target = $region42
              $region47: #{forward.3} parent=39 // loop_exit
                _
            $region40: #{forward.3} parent=31 // pred_fallthru
              _
          $region32: #{forward.3} parent=27 // pred_fallthru
            _
          %421 = vnop
        $region28: #{forward.3} parent=23 // pred_fallthru
          _
      $region24: #{forward.3} parent=5 // pred_fallthru
        _
      %p422 = scmp.le.s32.totalorder 1, %s9
      %p423 = scmp.lt.s32.totalorder %s9, 3
      %p424 = pnand %p422, %p423
      %p425 = pneg %p424
      // Predicated region
      $region63: #{forward.3} parent=5 // pred_check
        _
      $region64: #{forward.3} parent=5 // pred_check_branch
        %427 = sbr.rel (%p424) target = $region66
      $region65: #{forward.3} parent=5 // pred_region
        %s428 = ssub.s32 %s9, 1
        %s429 = sand.u32 %s22, 1
        %s430 = sand.u32 %s22, 1
        %s431 = smul.addr %s430, 512
        %s432 = scalar_lea.vmem [#allocation2], %s431
        // Predicated region
        $region67: #{forward.3} parent=65 // pred_check
          %p433 = pneg %p35
        $region68: #{forward.3} parent=65 // pred_check_branch
          %435 = sbr.rel (%p433) target = $region70
        $region69: #{forward.3} parent=65 // pred_region
          _
        $region70: #{forward.3} parent=65 // pred_fallthru
          _
        %s436 = sand.u32 %s22, 1
        %s437 = sand.u32 %s22, 1
        %s438 = smul.addr %s437, 512
        %s439 = scalar_lea.vmem [#allocation2], %s438
        %p440 = pneg %p35
        %p441 = pneg %p32
        %p442 = pneg %p56
        %p443 = pneg %p53
        %p444 = pneg %p77
        %p445 = pneg %p74
        %p446 = pneg %p103
        %p447 = pneg %p100
        %s448 = smul.u32 16, %s14
        %p449 = scmp.lt.s32.totalorder %s448, 31
        %s450 = scalar_select %p449, %s448, 31
        %s451 = smul.addr %s450, 8
        %s452 = scalar_lea.vmem %s3, %s451
        %s453 = smul.u32 16, %s14
        %s454 = smul.u32 16, %s14
        %p455 = scmp.lt.s32.totalorder %s454, 31
        %s456 = scalar_select %p455, %s454, 31
        %s457 = smul.addr %s456, 8
        %s458 = scalar_lea.vmem %s3, %s457
        %s459 = smul.u32 16, %s14
        %v460 = vld [vmem:[%s1] sm:$0xff]
        %v461 = vld [vmem:[%s1 + $0x8] sm:$0xff]
        %v462 = vld [vmem:[%s1 + $0x10] sm:$0xff]
        %v463 = vld [vmem:[%s1 + $0x18] sm:$0x7]
        %v464 = vld [vmem:[%s432] sm:$0xff]
        %v465 = vld [vmem:[%s432 + $0x8] sm:$0xff]
        %v466 = vld [vmem:[%s432 + $0x10] sm:$0xff]
        %v467 = vld [vmem:[%s432 + $0x18] sm:$0xff]
        %v468 = vld [vmem:[%s432 + $0x20] sm:$0xff]
        %v469 = vld [vmem:[%s432 + $0x28] sm:$0xff]
        %v470 = vld [vmem:[%s432 + $0x30] sm:$0xff]
        %v471 = vld [vmem:[%s432 + $0x38] sm:$0xff]
        %v472 = vld [vmem:[%s432 + $0x40] sm:$0xff]
        %v473 = vld [vmem:[%s432 + $0x48] sm:$0xff]
        %v474 = vld [vmem:[%s432 + $0x50] sm:$0xff]
        %v475 = vld [vmem:[%s432 + $0x58] sm:$0xff]
        %v476 = vld [vmem:[%s432 + $0x60] sm:$0xff]
        %v477 = vld [vmem:[%s432 + $0x68] sm:$0xff]
        %v478 = vld [vmem:[%s432 + $0x70] sm:$0xff]
        %v479 = vld [vmem:[%s432 + $0x78] sm:$0xff]
        %vm480 = vcmask 220160
        %v482 = vsel %vm480, %v464, 0
        %v485 = vsel %vm480, %v465, 0
        %v488 = vsel %vm480, %v466, 0
        %v491 = vsel %vm480, %v467, 0
        %v494 = vsel %vm480, %v468, 0
        %v497 = vsel %vm480, %v469, 0
        %v500 = vsel %vm480, %v470, 0
        %v503 = vsel %vm480, %v471, 0
        %v506 = vsel %vm480, %v472, 0
        %v509 = vsel %vm480, %v473, 0
        %v512 = vsel %vm480, %v474, 0
        %v515 = vsel %vm480, %v475, 0
        %v518 = vsel %vm480, %v476, 0
        %v521 = vsel %vm480, %v477, 0
        %v524 = vsel %vm480, %v478, 0
        %v527 = vsel %vm480, %v479, 0
        %vm529 = vcmask 1042432
        %v531 = vsel %vm529, %v463, 0
        %533 = vmatprep.subr.mxu0 0.0
        %534 = vmatpush1.msra.mxu0 %v460
        %535 = vmatprep.subr.mxu0 0.0
        %536 = vmatpush1.msra.mxu0 %v461
        %537 = vmatprep.subr.mxu0 0.0
        %538 = vmatpush1.msra.mxu0 %v462
        %539 = vmatprep.subr.mxu0 0.0
        %540 = vmatpush1.msra.mxu0 %v531
        %541 = vmatprep.subr.mxu0 0.0
        %542 = vmatpush1.msra.mxu0 0.0
        %543 = vmatprep.subr.mxu0 0.0
        %544 = vmatpush1.msra.mxu0 0.0
        %545 = vmatprep.subr.mxu0 0.0
        %546 = vmatpush1.msra.mxu0 0.0
        %547 = vmatprep.subr.mxu0 0.0
        %548 = vmatpush1.msra.mxu0 0.0
        %549 = vmatprep.subr.mxu0 0.0
        %550 = vmatpush1.msra.mxu0 0.0
        %551 = vmatprep.subr.mxu0 0.0
        %552 = vmatpush1.msra.mxu0 0.0
        %553 = vmatprep.subr.mxu0 0.0
        %554 = vmatpush1.msra.mxu0 0.0
        %555 = vmatprep.subr.mxu0 0.0
        %556 = vmatpush1.msra.mxu0 0.0
        %557 = vmatprep.subr.mxu0 0.0
        %558 = vmatpush1.msra.mxu0 0.0
        %559 = vmatprep.subr.mxu0 0.0
        %560 = vmatpush1.msra.mxu0 0.0
        %561 = vmatprep.subr.mxu0 0.0
        %562 = vmatpush1.msra.mxu0 0.0
        %563 = vmatprep.subr.mxu0 0.0
        %564 = vmatpush1.msra.mxu0 0.0
        %565 = vmatprep.subr.mxu0 0.0
        %566 = vmatpush1.msra.mxu0 0.0
        %567 = vmatprep.subr.mxu0 0.0
        %568 = vmatpush1.msra.mxu0 0.0
        %569 = vmatprep.subr.mxu0 0.0
        %570 = vmatpush1.msra.mxu0 0.0
        %571 = vmatprep.subr.mxu0 0.0
        %572 = vmatpush1.msra.mxu0 0.0
        %573 = vmatprep.subr.mxu0 0.0
        %574 = vmatpush1.msra.mxu0 0.0
        %575 = vmatprep.subr.mxu0 0.0
        %576 = vmatpush1.msra.mxu0 0.0
        %577 = vmatprep.subr.mxu0 0.0
        %578 = vmatpush1.msra.mxu0 0.0
        %579 = vmatprep.subr.mxu0 0.0
        %580 = vmatpush1.msra.mxu0 0.0
        %581 = vmatprep.subr.mxu0 0.0
        %582 = vmatpush1.msra.mxu0 0.0
        %583 = vmatprep.subr.mxu0 0.0
        %584 = vmatpush1.msra.mxu0 0.0
        %585 = vmatprep.subr.mxu0 0.0
        %586 = vmatpush1.msra.mxu0 0.0
        %587 = vmatprep.subr.mxu0 0.0
        %588 = vmatpush1.msra.mxu0 0.0
        %589 = vmatprep.subr.mxu0 0.0
        %590 = vmatpush1.msra.mxu0 0.0
        %591 = vmatprep.subr.mxu0 0.0
        %592 = vmatpush1.msra.mxu0 0.0
        %593 = vmatprep.subr.mxu0 0.0
        %594 = vmatpush1.msra.mxu0 0.0
        %595 = vmatprep.subr.mxu0 0.0
        %596 = vmatpush1.msra.mxu0 0.0
        %597 = vmatprep.mubr.f32.mxu0 0.0
        %598 = vmatmul.mubr.f32.gmra.mrb[0].mxu0 %v482
        %v599 = vpop.f32.mrb[0].mxu0
        %v600 = vadd.f32 0.0, %v599
        %v601 = vpop.f32.mrb[0].mxu0
        %602 = vmatprep.mubr.f32.mxu0 0.0
        %603 = vmatmul.mubr.f32.gmra.mrb[0].mxu0 %v485
        %v604 = vpop.f32.mrb[0].mxu0
        %v605 = vadd.f32 0.0, %v604
        %v606 = vpop.f32.mrb[0].mxu0
        %607 = vmatprep.mubr.f32.mxu0 0.0
        %608 = vmatmul.mubr.f32.gmra.mrb[0].mxu0 %v488
        %v609 = vpop.f32.mrb[0].mxu0
        %v610 = vadd.f32 0.0, %v609
        %v611 = vpop.f32.mrb[0].mxu0
        %612 = vmatprep.mubr.f32.mxu0 0.0
        %613 = vmatmul.mubr.f32.gmra.mrb[0].mxu0 %v491
        %v614 = vpop.f32.mrb[0].mxu0
        %v615 = vadd.f32 0.0, %v614
        %v616 = vpop.f32.mrb[0].mxu0
        %617 = vmatprep.mubr.f32.mxu0 0.0
        %618 = vmatmul.mubr.f32.gmra.mrb[0].mxu0 %v494
        %v619 = vpop.f32.mrb[0].mxu0
        %v620 = vadd.f32 0.0, %v619
        %v621 = vpop.f32.mrb[0].mxu0
        %622 = vmatprep.mubr.f32.mxu0 0.0
        %623 = vmatmul.mubr.f32.gmra.mrb[0].mxu0 %v497
        %v624 = vpop.f32.mrb[0].mxu0
        %v625 = vadd.f32 0.0, %v624
        %v626 = vpop.f32.mrb[0].mxu0
        %627 = vmatprep.mubr.f32.mxu0 0.0
        %628 = vmatmul.mubr.f32.gmra.mrb[0].mxu0 %v500
        %v629 = vpop.f32.mrb[0].mxu0
        %v630 = vadd.f32 0.0, %v629
        %v631 = vpop.f32.mrb[0].mxu0
        %632 = vmatprep.mubr.f32.mxu0 0.0
        %633 = vmatmul.mubr.f32.gmra.mrb[0].mxu0 %v503
        %v634 = vpop.f32.mrb[0].mxu0
        %v635 = vadd.f32 0.0, %v634
        %v636 = vpop.f32.mrb[0].mxu0
        %637 = vmatprep.mubr.f32.mxu0 0.0
        %638 = vmatmul.mubr.f32.gmra.mrb[0].mxu0 %v506
        %v639 = vpop.f32.mrb[0].mxu0
        %v640 = vadd.f32 0.0, %v639
        %v641 = vpop.f32.mrb[0].mxu0
        %642 = vmatprep.mubr.f32.mxu0 0.0
        %643 = vmatmul.mubr.f32.gmra.mrb[0].mxu0 %v509
        %v644 = vpop.f32.mrb[0].mxu0
        %v645 = vadd.f32 0.0, %v644
        %v646 = vpop.f32.mrb[0].mxu0
        %647 = vmatprep.mubr.f32.mxu0 0.0
        %648 = vmatmul.mubr.f32.gmra.mrb[0].mxu0 %v512
        %v649 = vpop.f32.mrb[0].mxu0
        %v650 = vadd.f32 0.0, %v649
        %v651 = vpop.f32.mrb[0].mxu0
        %652 = vmatprep.mubr.f32.mxu0 0.0
        %653 = vmatmul.mubr.f32.gmra.mrb[0].mxu0 %v515
        %v654 = vpop.f32.mrb[0].mxu0
        %v655 = vadd.f32 0.0, %v654
        %v656 = vpop.f32.mrb[0].mxu0
        %657 = vmatprep.mubr.f32.mxu0 0.0
        %658 = vmatmul.mubr.f32.gmra.mrb[0].mxu0 %v518
        %v659 = vpop.f32.mrb[0].mxu0
        %v660 = vadd.f32 0.0, %v659
        %v661 = vpop.f32.mrb[0].mxu0
        %662 = vmatprep.mubr.f32.mxu0 0.0
        %663 = vmatmul.mubr.f32.gmra.mrb[0].mxu0 %v521
        %v664 = vpop.f32.mrb[0].mxu0
        %v665 = vadd.f32 0.0, %v664
        %v666 = vpop.f32.mrb[0].mxu0
        %667 = vmatprep.mubr.f32.mxu0 0.0
        %668 = vmatmul.mubr.f32.gmra.mrb[0].mxu0 %v524
        %v669 = vpop.f32.mrb[0].mxu0
        %v670 = vadd.f32 0.0, %v669
        %v671 = vpop.f32.mrb[0].mxu0
        %672 = vmatprep.mubr.f32.mxu0 0.0
        %673 = vmatmul.mubr.f32.gmra.mrb[0].mxu0 %v527
        %v674 = vpop.f32.mrb[0].mxu0
        %v675 = vadd.f32 0.0, %v674
        %v676 = vpop.f32.mrb[0].mxu0
        %677 = vdwg.mxu0
        %s678 = scalar_lea.vmem %s432, 128 [#allocation2]
        %v679 = vld [vmem:[%s678] sm:$0xff]
        %v680 = vld [vmem:[%s678 + $0x8] sm:$0xff]
        %v681 = vld [vmem:[%s678 + $0x10] sm:$0xff]
        %v682 = vld [vmem:[%s678 + $0x18] sm:$0xff]
        %v683 = vld [vmem:[%s678 + $0x20] sm:$0xff]
        %v684 = vld [vmem:[%s678 + $0x28] sm:$0xff]
        %v685 = vld [vmem:[%s678 + $0x30] sm:$0xff]
        %v686 = vld [vmem:[%s678 + $0x38] sm:$0xff]
        %v687 = vld [vmem:[%s678 + $0x40] sm:$0xff]
        %v688 = vld [vmem:[%s678 + $0x48] sm:$0xff]
        %v689 = vld [vmem:[%s678 + $0x50] sm:$0xff]
        %v690 = vld [vmem:[%s678 + $0x58] sm:$0xff]
        %v691 = vld [vmem:[%s678 + $0x60] sm:$0xff]
        %v692 = vld [vmem:[%s678 + $0x68] sm:$0xff]
        %v693 = vld [vmem:[%s678 + $0x70] sm:$0xff]
        %v694 = vld [vmem:[%s678 + $0x78] sm:$0xff]
        %v696 = vsel %vm480, %v679, 0
        %v699 = vsel %vm480, %v680, 0
        %v702 = vsel %vm480, %v681, 0
        %v705 = vsel %vm480, %v682, 0
        %v708 = vsel %vm480, %v683, 0
        %v711 = vsel %vm480, %v684, 0
        %v714 = vsel %vm480, %v685, 0
        %v717 = vsel %vm480, %v686, 0
        %v720 = vsel %vm480, %v687, 0
        %v723 = vsel %vm480, %v688, 0
        %v726 = vsel %vm480, %v689, 0
        %v729 = vsel %vm480, %v690, 0
        %v732 = vsel %vm480, %v691, 0
        %v735 = vsel %vm480, %v692, 0
        %v738 = vsel %vm480, %v693, 0
        %v741 = vsel %vm480, %v694, 0
        %743 = vmatprep.subr.mxu0 0.0
        %744 = vmatpush1.msra.mxu0 %v460
        %745 = vmatprep.subr.mxu0 0.0
        %746 = vmatpush1.msra.mxu0 %v461
        %747 = vmatprep.subr.mxu0 0.0
        %748 = vmatpush1.msra.mxu0 %v462
        %749 = vmatprep.subr.mxu0 0.0
        %750 = vmatpush1.msra.mxu0 %v531
        %751 = vmatprep.subr.mxu0 0.0
        %752 = vmatpush1.msra.mxu0 0.0
        %753 = vmatprep.subr.mxu0 0.0
        %754 = vmatpush1.msra.mxu0 0.0
        %755 = vmatprep.subr.mxu0 0.0
        %756 = vmatpush1.msra.mxu0 0.0
        %757 = vmatprep.subr.mxu0 0.0
        %758 = vmatpush1.msra.mxu0 0.0
        %759 = vmatprep.subr.mxu0 0.0
        %760 = vmatpush1.msra.mxu0 0.0
        %761 = vmatprep.subr.mxu0 0.0
        %762 = vmatpush1.msra.mxu0 0.0
        %763 = vmatprep.subr.mxu0 0.0
        %764 = vmatpush1.msra.mxu0 0.0
        %765 = vmatprep.subr.mxu0 0.0
        %766 = vmatpush1.msra.mxu0 0.0
        %767 = vmatprep.subr.mxu0 0.0
        %768 = vmatpush1.msra.mxu0 0.0
        %769 = vmatprep.subr.mxu0 0.0
        %770 = vmatpush1.msra.mxu0 0.0
        %771 = vmatprep.subr.mxu0 0.0
        %772 = vmatpush1.msra.mxu0 0.0
        %773 = vmatprep.subr.mxu0 0.0
        %774 = vmatpush1.msra.mxu0 0.0
        %775 = vmatprep.subr.mxu0 0.0
        %776 = vmatpush1.msra.mxu0 0.0
        %777 = vmatprep.subr.mxu0 0.0
        %778 = vmatpush1.msra.mxu0 0.0
        %779 = vmatprep.subr.mxu0 0.0
        %780 = vmatpush1.msra.mxu0 0.0
        %781 = vmatprep.subr.mxu0 0.0
        %782 = vmatpush1.msra.mxu0 0.0
        %783 = vmatprep.subr.mxu0 0.0
        %784 = vmatpush1.msra.mxu0 0.0
        %785 = vmatprep.subr.mxu0 0.0
        %786 = vmatpush1.msra.mxu0 0.0
        %787 = vmatprep.subr.mxu0 0.0
        %788 = vmatpush1.msra.mxu0 0.0
        %789 = vmatprep.subr.mxu0 0.0
        %790 = vmatpush1.msra.mxu0 0.0
        %791 = vmatprep.subr.mxu0 0.0
        %792 = vmatpush1.msra.mxu0 0.0
        %793 = vmatprep.subr.mxu0 0.0
        %794 = vmatpush1.msra.mxu0 0.0
        %795 = vmatprep.subr.mxu0 0.0
        %796 = vmatpush1.msra.mxu0 0.0
        %797 = vmatprep.subr.mxu0 0.0
        %798 = vmatpush1.msra.mxu0 0.0
        %799 = vmatprep.subr.mxu0 0.0
        %800 = vmatpush1.msra.mxu0 0.0
        %801 = vmatprep.subr.mxu0 0.0
        %802 = vmatpush1.msra.mxu0 0.0
        %803 = vmatprep.subr.mxu0 0.0
        %804 = vmatpush1.msra.mxu0 0.0
        %805 = vmatprep.subr.mxu0 0.0
        %806 = vmatpush1.msra.mxu0 0.0
        %807 = vmatprep.mubr.f32.mxu0 0.0
        %808 = vmatmul.mubr.f32.gmra.mrb[0].mxu0 %v696
        %v809 = vpop.f32.mrb[0].mxu0
        %v810 = vadd.f32 0.0, %v809
        %v811 = vpop.f32.mrb[0].mxu0
        %812 = vmatprep.mubr.f32.mxu0 0.0
        %813 = vmatmul.mubr.f32.gmra.mrb[0].mxu0 %v699
        %v814 = vpop.f32.mrb[0].mxu0
        %v815 = vadd.f32 0.0, %v814
        %v816 = vpop.f32.mrb[0].mxu0
        %817 = vmatprep.mubr.f32.mxu0 0.0
        %818 = vmatmul.mubr.f32.gmra.mrb[0].mxu0 %v702
        %v819 = vpop.f32.mrb[0].mxu0
        %v820 = vadd.f32 0.0, %v819
        %v821 = vpop.f32.mrb[0].mxu0
        %822 = vmatprep.mubr.f32.mxu0 0.0
        %823 = vmatmul.mubr.f32.gmra.mrb[0].mxu0 %v705
        %v824 = vpop.f32.mrb[0].mxu0
        %v825 = vadd.f32 0.0, %v824
        %v826 = vpop.f32.mrb[0].mxu0
        %827 = vmatprep.mubr.f32.mxu0 0.0
        %828 = vmatmul.mubr.f32.gmra.mrb[0].mxu0 %v708
        %v829 = vpop.f32.mrb[0].mxu0
        %v830 = vadd.f32 0.0, %v829
        %v831 = vpop.f32.mrb[0].mxu0
        %832 = vmatprep.mubr.f32.mxu0 0.0
        %833 = vmatmul.mubr.f32.gmra.mrb[0].mxu0 %v711
        %v834 = vpop.f32.mrb[0].mxu0
        %v835 = vadd.f32 0.0, %v834
        %v836 = vpop.f32.mrb[0].mxu0
        %837 = vmatprep.mubr.f32.mxu0 0.0
        %838 = vmatmul.mubr.f32.gmra.mrb[0].mxu0 %v714
        %v839 = vpop.f32.mrb[0].mxu0
        %v840 = vadd.f32 0.0, %v839
        %v841 = vpop.f32.mrb[0].mxu0
        %842 = vmatprep.mubr.f32.mxu0 0.0
        %843 = vmatmul.mubr.f32.gmra.mrb[0].mxu0 %v717
        %v844 = vpop.f32.mrb[0].mxu0
        %v845 = vadd.f32 0.0, %v844
        %v846 = vpop.f32.mrb[0].mxu0
        %847 = vmatprep.mubr.f32.mxu0 0.0
        %848 = vmatmul.mubr.f32.gmra.mrb[0].mxu0 %v720
        %v849 = vpop.f32.mrb[0].mxu0
        %v850 = vadd.f32 0.0, %v849
        %v851 = vpop.f32.mrb[0].mxu0
        %852 = vmatprep.mubr.f32.mxu0 0.0
        %853 = vmatmul.mubr.f32.gmra.mrb[0].mxu0 %v723
        %v854 = vpop.f32.mrb[0].mxu0
        %v855 = vadd.f32 0.0, %v854
        %v856 = vpop.f32.mrb[0].mxu0
        %857 = vmatprep.mubr.f32.mxu0 0.0
        %858 = vmatmul.mubr.f32.gmra.mrb[0].mxu0 %v726
        %v859 = vpop.f32.mrb[0].mxu0
        %v860 = vadd.f32 0.0, %v859
        %v861 = vpop.f32.mrb[0].mxu0
        %862 = vmatprep.mubr.f32.mxu0 0.0
        %863 = vmatmul.mubr.f32.gmra.mrb[0].mxu0 %v729
        %v864 = vpop.f32.mrb[0].mxu0
        %v865 = vadd.f32 0.0, %v864
        %v866 = vpop.f32.mrb[0].mxu0
        %867 = vmatprep.mubr.f32.mxu0 0.0
        %868 = vmatmul.mubr.f32.gmra.mrb[0].mxu0 %v732
        %v869 = vpop.f32.mrb[0].mxu0
        %v870 = vadd.f32 0.0, %v869
        %v871 = vpop.f32.mrb[0].mxu0
        %872 = vmatprep.mubr.f32.mxu0 0.0
        %873 = vmatmul.mubr.f32.gmra.mrb[0].mxu0 %v735
        %v874 = vpop.f32.mrb[0].mxu0
        %v875 = vadd.f32 0.0, %v874
        %v876 = vpop.f32.mrb[0].mxu0
        %877 = vmatprep.mubr.f32.mxu0 0.0
        %878 = vmatmul.mubr.f32.gmra.mrb[0].mxu0 %v738
        %v879 = vpop.f32.mrb[0].mxu0
        %v880 = vadd.f32 0.0, %v879
        %v881 = vpop.f32.mrb[0].mxu0
        %882 = vmatprep.mubr.f32.mxu0 0.0
        %883 = vmatmul.mubr.f32.gmra.mrb[0].mxu0 %v741
        %v884 = vpop.f32.mrb[0].mxu0
        %v885 = vadd.f32 0.0, %v884
        %v886 = vpop.f32.mrb[0].mxu0
        %887 = vdwg.mxu0
        %v888 = vmax.f32 %v600, %v810
        %v889 = vmax.f32 %v605, %v815
        %v890 = vmax.f32 %v610, %v820
        %v891 = vmax.f32 %v615, %v825
        %v892 = vmax.f32 %v620, %v830
        %v893 = vmax.f32 %v625, %v835
        %v894 = vmax.f32 %v630, %v840
        %v895 = vmax.f32 %v635, %v845
        %v896 = vmax.f32 %v640, %v850
        %v897 = vmax.f32 %v645, %v855
        %v898 = vmax.f32 %v650, %v860
        %v899 = vmax.f32 %v655, %v865
        %v900 = vmax.f32 %v660, %v870
        %v901 = vmax.f32 %v665, %v875
        %v902 = vmax.f32 %v670, %v880
        %v903 = vmax.f32 %v675, %v885
        %s904 = scalar_lea.vmem %s432, 256 [#allocation2]
        %v905 = vld [vmem:[%s904] sm:$0xff]
        %v906 = vld [vmem:[%s904 + $0x8] sm:$0xff]
        %v907 = vld [vmem:[%s904 + $0x10] sm:$0xff]
        %v908 = vld [vmem:[%s904 + $0x18] sm:$0xff]
        %v909 = vld [vmem:[%s904 + $0x20] sm:$0xff]
        %v910 = vld [vmem:[%s904 + $0x28] sm:$0xff]
        %v911 = vld [vmem:[%s904 + $0x30] sm:$0xff]
        %v912 = vld [vmem:[%s904 + $0x38] sm:$0xff]
        %v913 = vld [vmem:[%s904 + $0x40] sm:$0xff]
        %v914 = vld [vmem:[%s904 + $0x48] sm:$0xff]
        %v915 = vld [vmem:[%s904 + $0x50] sm:$0xff]
        %v916 = vld [vmem:[%s904 + $0x58] sm:$0xff]
        %v917 = vld [vmem:[%s904 + $0x60] sm:$0xff]
        %v918 = vld [vmem:[%s904 + $0x68] sm:$0xff]
        %v919 = vld [vmem:[%s904 + $0x70] sm:$0xff]
        %v920 = vld [vmem:[%s904 + $0x78] sm:$0xff]
        %v922 = vsel %vm480, %v905, 0
        %v925 = vsel %vm480, %v906, 0
        %v928 = vsel %vm480, %v907, 0
        %v931 = vsel %vm480, %v908, 0
        %v934 = vsel %vm480, %v909, 0
        %v937 = vsel %vm480, %v910, 0
        %v940 = vsel %vm480, %v911, 0
        %v943 = vsel %vm480, %v912, 0
        %v946 = vsel %vm480, %v913, 0
        %v949 = vsel %vm480, %v914, 0
        %v952 = vsel %vm480, %v915, 0
        %v955 = vsel %vm480, %v916, 0
        %v958 = vsel %vm480, %v917, 0
        %v961 = vsel %vm480, %v918, 0
        %v964 = vsel %vm480, %v919, 0
        %v967 = vsel %vm480, %v920, 0
        %969 = vmatprep.subr.mxu0 0.0
        %970 = vmatpush1.msra.mxu0 %v460
        %971 = vmatprep.subr.mxu0 0.0
        %972 = vmatpush1.msra.mxu0 %v461
        %973 = vmatprep.subr.mxu0 0.0
        %974 = vmatpush1.msra.mxu0 %v462
        %975 = vmatprep.subr.mxu0 0.0
        %976 = vmatpush1.msra.mxu0 %v531
        %977 = vmatprep.subr.mxu0 0.0
        %978 = vmatpush1.msra.mxu0 0.0
        %979 = vmatprep.subr.mxu0 0.0
        %980 = vmatpush1.msra.mxu0 0.0
        %981 = vmatprep.subr.mxu0 0.0
        %982 = vmatpush1.msra.mxu0 0.0
        %983 = vmatprep.subr.mxu0 0.0
        %984 = vmatpush1.msra.mxu0 0.0
        %985 = vmatprep.subr.mxu0 0.0
        %986 = vmatpush1.msra.mxu0 0.0
        %987 = vmatprep.subr.mxu0 0.0
        %988 = vmatpush1.msra.mxu0 0.0
        %989 = vmatprep.subr.mxu0 0.0
        %990 = vmatpush1.msra.mxu0 0.0
        %991 = vmatprep.subr.mxu0 0.0
        %992 = vmatpush1.msra.mxu0 0.0
        %993 = vmatprep.subr.mxu0 0.0
        %994 = vmatpush1.msra.mxu0 0.0
        %995 = vmatprep.subr.mxu0 0.0
        %996 = vmatpush1.msra.mxu0 0.0
        %997 = vmatprep.subr.mxu0 0.0
        %998 = vmatpush1.msra.mxu0 0.0
        %999 = vmatprep.subr.mxu0 0.0
        %1000 = vmatpush1.msra.mxu0 0.0
        %1001 = vmatprep.subr.mxu0 0.0
        %1002 = vmatpush1.msra.mxu0 0.0
        %1003 = vmatprep.subr.mxu0 0.0
        %1004 = vmatpush1.msra.mxu0 0.0
        %1005 = vmatprep.subr.mxu0 0.0
        %1006 = vmatpush1.msra.mxu0 0.0
        %1007 = vmatprep.subr.mxu0 0.0
        %1008 = vmatpush1.msra.mxu0 0.0
        %1009 = vmatprep.subr.mxu0 0.0
        %1010 = vmatpush1.msra.mxu0 0.0
        %1011 = vmatprep.subr.mxu0 0.0
        %1012 = vmatpush1.msra.mxu0 0.0
        %1013 = vmatprep.subr.mxu0 0.0
        %1014 = vmatpush1.msra.mxu0 0.0
        %1015 = vmatprep.subr.mxu0 0.0
        %1016 = vmatpush1.msra.mxu0 0.0
        %1017 = vmatprep.subr.mxu0 0.0
        %1018 = vmatpush1.msra.mxu0 0.0
        %1019 = vmatprep.subr.mxu0 0.0
        %1020 = vmatpush1.msra.mxu0 0.0
        %1021 = vmatprep.subr.mxu0 0.0
        %1022 = vmatpush1.msra.mxu0 0.0
        %1023 = vmatprep.subr.mxu0 0.0
        %1024 = vmatpush1.msra.mxu0 0.0
        %1025 = vmatprep.subr.mxu0 0.0
        %1026 = vmatpush1.msra.mxu0 0.0
        %1027 = vmatprep.subr.mxu0 0.0
        %1028 = vmatpush1.msra.mxu0 0.0
        %1029 = vmatprep.subr.mxu0 0.0
        %1030 = vmatpush1.msra.mxu0 0.0
        %1031 = vmatprep.subr.mxu0 0.0
        %1032 = vmatpush1.msra.mxu0 0.0
        %1033 = vmatprep.mubr.f32.mxu0 0.0
        %1034 = vmatmul.mubr.f32.gmra.mrb[0].mxu0 %v922
        %v1035 = vpop.f32.mrb[0].mxu0
        %v1036 = vadd.f32 0.0, %v1035
        %v1037 = vpop.f32.mrb[0].mxu0
        %1038 = vmatprep.mubr.f32.mxu0 0.0
        %1039 = vmatmul.mubr.f32.gmra.mrb[0].mxu0 %v925
        %v1040 = vpop.f32.mrb[0].mxu0
        %v1041 = vadd.f32 0.0, %v1040
        %v1042 = vpop.f32.mrb[0].mxu0
        %1043 = vmatprep.mubr.f32.mxu0 0.0
        %1044 = vmatmul.mubr.f32.gmra.mrb[0].mxu0 %v928
        %v1045 = vpop.f32.mrb[0].mxu0
        %v1046 = vadd.f32 0.0, %v1045
        %v1047 = vpop.f32.mrb[0].mxu0
        %1048 = vmatprep.mubr.f32.mxu0 0.0
        %1049 = vmatmul.mubr.f32.gmra.mrb[0].mxu0 %v931
        %v1050 = vpop.f32.mrb[0].mxu0
        %v1051 = vadd.f32 0.0, %v1050
        %v1052 = vpop.f32.mrb[0].mxu0
        %1053 = vmatprep.mubr.f32.mxu0 0.0
        %1054 = vmatmul.mubr.f32.gmra.mrb[0].mxu0 %v934
        %v1055 = vpop.f32.mrb[0].mxu0
        %v1056 = vadd.f32 0.0, %v1055
        %v1057 = vpop.f32.mrb[0].mxu0
        %1058 = vmatprep.mubr.f32.mxu0 0.0
        %1059 = vmatmul.mubr.f32.gmra.mrb[0].mxu0 %v937
        %v1060 = vpop.f32.mrb[0].mxu0
        %v1061 = vadd.f32 0.0, %v1060
        %v1062 = vpop.f32.mrb[0].mxu0
        %1063 = vmatprep.mubr.f32.mxu0 0.0
        %1064 = vmatmul.mubr.f32.gmra.mrb[0].mxu0 %v940
        %v1065 = vpop.f32.mrb[0].mxu0
        %v1066 = vadd.f32 0.0, %v1065
        %v1067 = vpop.f32.mrb[0].mxu0
        %1068 = vmatprep.mubr.f32.mxu0 0.0
        %1069 = vmatmul.mubr.f32.gmra.mrb[0].mxu0 %v943
        %v1070 = vpop.f32.mrb[0].mxu0
        %v1071 = vadd.f32 0.0, %v1070
        %v1072 = vpop.f32.mrb[0].mxu0
        %1073 = vmatprep.mubr.f32.mxu0 0.0
        %1074 = vmatmul.mubr.f32.gmra.mrb[0].mxu0 %v946
        %v1075 = vpop.f32.mrb[0].mxu0
        %v1076 = vadd.f32 0.0, %v1075
        %v1077 = vpop.f32.mrb[0].mxu0
        %1078 = vmatprep.mubr.f32.mxu0 0.0
        %1079 = vmatmul.mubr.f32.gmra.mrb[0].mxu0 %v949
        %v1080 = vpop.f32.mrb[0].mxu0
        %v1081 = vadd.f32 0.0, %v1080
        %v1082 = vpop.f32.mrb[0].mxu0
        %1083 = vmatprep.mubr.f32.mxu0 0.0
        %1084 = vmatmul.mubr.f32.gmra.mrb[0].mxu0 %v952
        %v1085 = vpop.f32.mrb[0].mxu0
        %v1086 = vadd.f32 0.0, %v1085
        %v1087 = vpop.f32.mrb[0].mxu0
        %1088 = vmatprep.mubr.f32.mxu0 0.0
        %1089 = vmatmul.mubr.f32.gmra.mrb[0].mxu0 %v955
        %v1090 = vpop.f32.mrb[0].mxu0
        %v1091 = vadd.f32 0.0, %v1090
        %v1092 = vpop.f32.mrb[0].mxu0
        %1093 = vmatprep.mubr.f32.mxu0 0.0
        %1094 = vmatmul.mubr.f32.gmra.mrb[0].mxu0 %v958
        %v1095 = vpop.f32.mrb[0].mxu0
        %v1096 = vadd.f32 0.0, %v1095
        %v1097 = vpop.f32.mrb[0].mxu0
        %1098 = vmatprep.mubr.f32.mxu0 0.0
        %1099 = vmatmul.mubr.f32.gmra.mrb[0].mxu0 %v961
        %v1100 = vpop.f32.mrb[0].mxu0
        %v1101 = vadd.f32 0.0, %v1100
        %v1102 = vpop.f32.mrb[0].mxu0
        %1103 = vmatprep.mubr.f32.mxu0 0.0
        %1104 = vmatmul.mubr.f32.gmra.mrb[0].mxu0 %v964
        %v1105 = vpop.f32.mrb[0].mxu0
        %v1106 = vadd.f32 0.0, %v1105
        %v1107 = vpop.f32.mrb[0].mxu0
        %1108 = vmatprep.mubr.f32.mxu0 0.0
        %1109 = vmatmul.mubr.f32.gmra.mrb[0].mxu0 %v967
        %v1110 = vpop.f32.mrb[0].mxu0
        %v1111 = vadd.f32 0.0, %v1110
        %v1112 = vpop.f32.mrb[0].mxu0
        %1113 = vdwg.mxu0
        %v1114 = vmax.f32 %v888, %v1036
        %v1115 = vmax.f32 %v889, %v1041
        %v1116 = vmax.f32 %v890, %v1046
        %v1117 = vmax.f32 %v891, %v1051
        %v1118 = vmax.f32 %v892, %v1056
        %v1119 = vmax.f32 %v893, %v1061
        %v1120 = vmax.f32 %v894, %v1066
        %v1121 = vmax.f32 %v895, %v1071
        %v1122 = vmax.f32 %v896, %v1076
        %v1123 = vmax.f32 %v897, %v1081
        %v1124 = vmax.f32 %v898, %v1086
        %v1125 = vmax.f32 %v899, %v1091
        %v1126 = vmax.f32 %v900, %v1096
        %v1127 = vmax.f32 %v901, %v1101
        %v1128 = vmax.f32 %v902, %v1106
        %v1129 = vmax.f32 %v903, %v1111
        %s1130 = scalar_lea.vmem %s432, 384 [#allocation2]
        %v1131 = vld [vmem:[%s1130] sm:$0xff]
        %v1132 = vld [vmem:[%s1130 + $0x8] sm:$0xff]
        %v1133 = vld [vmem:[%s1130 + $0x10] sm:$0xff]
        %v1134 = vld [vmem:[%s1130 + $0x18] sm:$0xff]
        %v1135 = vld [vmem:[%s1130 + $0x20] sm:$0xff]
        %v1136 = vld [vmem:[%s1130 + $0x28] sm:$0xff]
        %v1137 = vld [vmem:[%s1130 + $0x30] sm:$0xff]
        %v1138 = vld [vmem:[%s1130 + $0x38] sm:$0xff]
        %v1139 = vld [vmem:[%s1130 + $0x40] sm:$0xff]
        %v1140 = vld [vmem:[%s1130 + $0x48] sm:$0xff]
        %v1141 = vld [vmem:[%s1130 + $0x50] sm:$0xff]
        %v1142 = vld [vmem:[%s1130 + $0x58] sm:$0xff]
        %v1143 = vld [vmem:[%s1130 + $0x60] sm:$0xff]
        %v1144 = vld [vmem:[%s1130 + $0x68] sm:$0xff]
        %v1145 = vld [vmem:[%s1130 + $0x70] sm:$0xff]
        %v1146 = vld [vmem:[%s1130 + $0x78] sm:$0xff]
        %v1148 = vsel %vm480, %v1131, 0
        %v1151 = vsel %vm480, %v1132, 0
        %v1154 = vsel %vm480, %v1133, 0
        %v1157 = vsel %vm480, %v1134, 0
        %v1160 = vsel %vm480, %v1135, 0
        %v1163 = vsel %vm480, %v1136, 0
        %v1166 = vsel %vm480, %v1137, 0
        %v1169 = vsel %vm480, %v1138, 0
        %v1172 = vsel %vm480, %v1139, 0
        %v1175 = vsel %vm480, %v1140, 0
        %v1178 = vsel %vm480, %v1141, 0
        %v1181 = vsel %vm480, %v1142, 0
        %v1184 = vsel %vm480, %v1143, 0
        %v1187 = vsel %vm480, %v1144, 0
        %v1190 = vsel %vm480, %v1145, 0
        %v1193 = vsel %vm480, %v1146, 0
        %1195 = vmatprep.subr.mxu0 0.0
        %1196 = vmatpush1.msra.mxu0 %v460
        %1197 = vmatprep.subr.mxu0 0.0
        %1198 = vmatpush1.msra.mxu0 %v461
        %1199 = vmatprep.subr.mxu0 0.0
        %1200 = vmatpush1.msra.mxu0 %v462
        %1201 = vmatprep.subr.mxu0 0.0
        %1202 = vmatpush1.msra.mxu0 %v531
        %1203 = vmatprep.subr.mxu0 0.0
        %1204 = vmatpush1.msra.mxu0 0.0
        %1205 = vmatprep.subr.mxu0 0.0
        %1206 = vmatpush1.msra.mxu0 0.0
        %1207 = vmatprep.subr.mxu0 0.0
        %1208 = vmatpush1.msra.mxu0 0.0
        %1209 = vmatprep.subr.mxu0 0.0
        %1210 = vmatpush1.msra.mxu0 0.0
        %1211 = vmatprep.subr.mxu0 0.0
        %1212 = vmatpush1.msra.mxu0 0.0
        %1213 = vmatprep.subr.mxu0 0.0
        %1214 = vmatpush1.msra.mxu0 0.0
        %1215 = vmatprep.subr.mxu0 0.0
        %1216 = vmatpush1.msra.mxu0 0.0
        %1217 = vmatprep.subr.mxu0 0.0
        %1218 = vmatpush1.msra.mxu0 0.0
        %1219 = vmatprep.subr.mxu0 0.0
        %1220 = vmatpush1.msra.mxu0 0.0
        %1221 = vmatprep.subr.mxu0 0.0
        %1222 = vmatpush1.msra.mxu0 0.0
        %1223 = vmatprep.subr.mxu0 0.0
        %1224 = vmatpush1.msra.mxu0 0.0
        %1225 = vmatprep.subr.mxu0 0.0
        %1226 = vmatpush1.msra.mxu0 0.0
        %1227 = vmatprep.subr.mxu0 0.0
        %1228 = vmatpush1.msra.mxu0 0.0
        %1229 = vmatprep.subr.mxu0 0.0
        %1230 = vmatpush1.msra.mxu0 0.0
        %1231 = vmatprep.subr.mxu0 0.0
        %1232 = vmatpush1.msra.mxu0 0.0
        %1233 = vmatprep.subr.mxu0 0.0
        %1234 = vmatpush1.msra.mxu0 0.0
        %1235 = vmatprep.subr.mxu0 0.0
        %1236 = vmatpush1.msra.mxu0 0.0
        %1237 = vmatprep.subr.mxu0 0.0
        %1238 = vmatpush1.msra.mxu0 0.0
        %1239 = vmatprep.subr.mxu0 0.0
        %1240 = vmatpush1.msra.mxu0 0.0
        %1241 = vmatprep.subr.mxu0 0.0
        %1242 = vmatpush1.msra.mxu0 0.0
        %1243 = vmatprep.subr.mxu0 0.0
        %1244 = vmatpush1.msra.mxu0 0.0
        %1245 = vmatprep.subr.mxu0 0.0
        %1246 = vmatpush1.msra.mxu0 0.0
        %1247 = vmatprep.subr.mxu0 0.0
        %1248 = vmatpush1.msra.mxu0 0.0
        %1249 = vmatprep.subr.mxu0 0.0
        %1250 = vmatpush1.msra.mxu0 0.0
        %1251 = vmatprep.subr.mxu0 0.0
        %1252 = vmatpush1.msra.mxu0 0.0
        %1253 = vmatprep.subr.mxu0 0.0
        %1254 = vmatpush1.msra.mxu0 0.0
        %1255 = vmatprep.subr.mxu0 0.0
        %1256 = vmatpush1.msra.mxu0 0.0
        %1257 = vmatprep.subr.mxu0 0.0
        %1258 = vmatpush1.msra.mxu0 0.0
        %1259 = vmatprep.mubr.f32.mxu0 0.0
        %1260 = vmatmul.mubr.f32.gmra.mrb[0].mxu0 %v1148
        %v1261 = vpop.f32.mrb[0].mxu0
        %v1262 = vadd.f32 0.0, %v1261
        %v1263 = vpop.f32.mrb[0].mxu0
        %1264 = vmatprep.mubr.f32.mxu0 0.0
        %1265 = vmatmul.mubr.f32.gmra.mrb[0].mxu0 %v1151
        %v1266 = vpop.f32.mrb[0].mxu0
        %v1267 = vadd.f32 0.0, %v1266
        %v1268 = vpop.f32.mrb[0].mxu0
        %1269 = vmatprep.mubr.f32.mxu0 0.0
        %1270 = vmatmul.mubr.f32.gmra.mrb[0].mxu0 %v1154
        %v1271 = vpop.f32.mrb[0].mxu0
        %v1272 = vadd.f32 0.0, %v1271
        %v1273 = vpop.f32.mrb[0].mxu0
        %1274 = vmatprep.mubr.f32.mxu0 0.0
        %1275 = vmatmul.mubr.f32.gmra.mrb[0].mxu0 %v1157
        %v1276 = vpop.f32.mrb[0].mxu0
        %v1277 = vadd.f32 0.0, %v1276
        %v1278 = vpop.f32.mrb[0].mxu0
        %1279 = vmatprep.mubr.f32.mxu0 0.0
        %1280 = vmatmul.mubr.f32.gmra.mrb[0].mxu0 %v1160
        %v1281 = vpop.f32.mrb[0].mxu0
        %v1282 = vadd.f32 0.0, %v1281
        %v1283 = vpop.f32.mrb[0].mxu0
        %1284 = vmatprep.mubr.f32.mxu0 0.0
        %1285 = vmatmul.mubr.f32.gmra.mrb[0].mxu0 %v1163
        %v1286 = vpop.f32.mrb[0].mxu0
        %v1287 = vadd.f32 0.0, %v1286
        %v1288 = vpop.f32.mrb[0].mxu0
        %1289 = vmatprep.mubr.f32.mxu0 0.0
        %1290 = vmatmul.mubr.f32.gmra.mrb[0].mxu0 %v1166
        %v1291 = vpop.f32.mrb[0].mxu0
        %v1292 = vadd.f32 0.0, %v1291
        %v1293 = vpop.f32.mrb[0].mxu0
        %1294 = vmatprep.mubr.f32.mxu0 0.0
        %1295 = vmatmul.mubr.f32.gmra.mrb[0].mxu0 %v1169
        %v1296 = vpop.f32.mrb[0].mxu0
        %v1297 = vadd.f32 0.0, %v1296
        %v1298 = vpop.f32.mrb[0].mxu0
        %1299 = vmatprep.mubr.f32.mxu0 0.0
        %1300 = vmatmul.mubr.f32.gmra.mrb[0].mxu0 %v1172
        %v1301 = vpop.f32.mrb[0].mxu0
        %v1302 = vadd.f32 0.0, %v1301
        %v1303 = vpop.f32.mrb[0].mxu0
        %1304 = vmatprep.mubr.f32.mxu0 0.0
        %1305 = vmatmul.mubr.f32.gmra.mrb[0].mxu0 %v1175
        %v1306 = vpop.f32.mrb[0].mxu0
        %v1307 = vadd.f32 0.0, %v1306
        %v1308 = vpop.f32.mrb[0].mxu0
        %1309 = vmatprep.mubr.f32.mxu0 0.0
        %1310 = vmatmul.mubr.f32.gmra.mrb[0].mxu0 %v1178
        %v1311 = vpop.f32.mrb[0].mxu0
        %v1312 = vadd.f32 0.0, %v1311
        %v1313 = vpop.f32.mrb[0].mxu0
        %1314 = vmatprep.mubr.f32.mxu0 0.0
        %1315 = vmatmul.mubr.f32.gmra.mrb[0].mxu0 %v1181
        %v1316 = vpop.f32.mrb[0].mxu0
        %v1317 = vadd.f32 0.0, %v1316
        %v1318 = vpop.f32.mrb[0].mxu0
        %1319 = vmatprep.mubr.f32.mxu0 0.0
        %1320 = vmatmul.mubr.f32.gmra.mrb[0].mxu0 %v1184
        %v1321 = vpop.f32.mrb[0].mxu0
        %v1322 = vadd.f32 0.0, %v1321
        %v1323 = vpop.f32.mrb[0].mxu0
        %1324 = vmatprep.mubr.f32.mxu0 0.0
        %1325 = vmatmul.mubr.f32.gmra.mrb[0].mxu0 %v1187
        %v1326 = vpop.f32.mrb[0].mxu0
        %v1327 = vadd.f32 0.0, %v1326
        %v1328 = vpop.f32.mrb[0].mxu0
        %1329 = vmatprep.mubr.f32.mxu0 0.0
        %1330 = vmatmul.mubr.f32.gmra.mrb[0].mxu0 %v1190
        %v1331 = vpop.f32.mrb[0].mxu0
        %v1332 = vadd.f32 0.0, %v1331
        %v1333 = vpop.f32.mrb[0].mxu0
        %1334 = vmatprep.mubr.f32.mxu0 0.0
        %1335 = vmatmul.mubr.f32.gmra.mrb[0].mxu0 %v1193
        %v1336 = vpop.f32.mrb[0].mxu0
        %v1337 = vadd.f32 0.0, %v1336
        %v1338 = vpop.f32.mrb[0].mxu0
        %1339 = vdwg.mxu0
        %v1340 = vmax.f32 %v1114, %v1262
        %v1341 = vmax.f32 %v1115, %v1267
        %v1342 = vmax.f32 %v1116, %v1272
        %v1343 = vmax.f32 %v1117, %v1277
        %v1344 = vmax.f32 %v1118, %v1282
        %v1345 = vmax.f32 %v1119, %v1287
        %v1346 = vmax.f32 %v1120, %v1292
        %v1347 = vmax.f32 %v1121, %v1297
        %v1348 = vmax.f32 %v1122, %v1302
        %v1349 = vmax.f32 %v1123, %v1307
        %v1350 = vmax.f32 %v1124, %v1312
        %v1351 = vmax.f32 %v1125, %v1317
        %v1352 = vmax.f32 %v1126, %v1322
        %v1353 = vmax.f32 %v1127, %v1327
        %v1354 = vmax.f32 %v1128, %v1332
        %v1355 = vmax.f32 %v1129, %v1337
        %v1356 = vld [vmem:[%s2] sm:$0x1]
        %v1358 = vlaneseq
        %v1359 = vshrl.u32 %v1358, 7
        %v1360 = vsub.s32 0, %v1359
        %v1361 = vrot.slane %v1356, %v1360
        %v1363 = vadd.f32 %v1340, %v1361
        %v1364 = vadd.f32 %v1341, %v1361
        %v1365 = vadd.f32 %v1342, %v1361
        %v1366 = vadd.f32 %v1343, %v1361
        %v1367 = vadd.f32 %v1344, %v1361
        %v1368 = vadd.f32 %v1345, %v1361
        %v1369 = vadd.f32 %v1346, %v1361
        %v1370 = vadd.f32 %v1347, %v1361
        %v1371 = vadd.f32 %v1348, %v1361
        %v1372 = vadd.f32 %v1349, %v1361
        %v1373 = vadd.f32 %v1350, %v1361
        %v1374 = vadd.f32 %v1351, %v1361
        %v1375 = vadd.f32 %v1352, %v1361
        %v1376 = vadd.f32 %v1353, %v1361
        %v1377 = vadd.f32 %v1354, %v1361
        %v1378 = vadd.f32 %v1355, %v1361
        %v1379 = vmax.f32 %v1363, 0.0
        %v1380 = vmax.f32 %v1364, 0.0
        %v1381 = vmax.f32 %v1365, 0.0
        %v1382 = vmax.f32 %v1366, 0.0
        %v1383 = vmax.f32 %v1367, 0.0
        %v1384 = vmax.f32 %v1368, 0.0
        %v1385 = vmax.f32 %v1369, 0.0
        %v1386 = vmax.f32 %v1370, 0.0
        %v1387 = vmax.f32 %v1371, 0.0
        %v1388 = vmax.f32 %v1372, 0.0
        %v1389 = vmax.f32 %v1373, 0.0
        %v1390 = vmax.f32 %v1374, 0.0
        %v1391 = vmax.f32 %v1375, 0.0
        %v1392 = vmax.f32 %v1376, 0.0
        %v1393 = vmax.f32 %v1377, 0.0
        %v1394 = vmax.f32 %v1378, 0.0
        %vm1395 = vcmask 130048
        %1396 = vst.msk [vmem:[%s458] sm:$0xff] %vm1395, %v1379
        %1397 = vst.msk [vmem:[%s458 + $0x8] sm:$0xff] %vm1395, %v1380
        %1398 = vst.msk [vmem:[%s458 + $0x10] sm:$0xff] %vm1395, %v1381
        %1399 = vst.msk [vmem:[%s458 + $0x18] sm:$0xff] %vm1395, %v1382
        %1400 = vst.msk [vmem:[%s458 + $0x20] sm:$0xff] %vm1395, %v1383
        %1401 = vst.msk [vmem:[%s458 + $0x28] sm:$0xff] %vm1395, %v1384
        %1402 = vst.msk [vmem:[%s458 + $0x30] sm:$0xff] %vm1395, %v1385
        %1403 = vst.msk [vmem:[%s458 + $0x38] sm:$0xff] %vm1395, %v1386
        %1404 = vst.msk [vmem:[%s458 + $0x40] sm:$0xff] %vm1395, %v1387
        %1405 = vst.msk [vmem:[%s458 + $0x48] sm:$0xff] %vm1395, %v1388
        %1406 = vst.msk [vmem:[%s458 + $0x50] sm:$0xff] %vm1395, %v1389
        %1407 = vst.msk [vmem:[%s458 + $0x58] sm:$0xff] %vm1395, %v1390
        %1408 = vst.msk [vmem:[%s458 + $0x60] sm:$0xff] %vm1395, %v1391
        %1409 = vst.msk [vmem:[%s458 + $0x68] sm:$0xff] %vm1395, %v1392
        %1410 = vst.msk [vmem:[%s458 + $0x70] sm:$0xff] %vm1395, %v1393
        %1411 = vst.msk [vmem:[%s458 + $0x78] sm:$0xff] %vm1395, %v1394
        %s1412 = smul.u32 16, %s14
        %p1413 = scmp.lt.s32.totalorder %s1412, 31
        %s1414 = scalar_select %p1413, %s1412, 31
        %s1415 = smul.addr %s1414, 8
        %s1416 = scalar_lea.vmem %s3, %s1415
        // Predicated region
        $region71: #{forward.3} parent=65 // pred_check
          %p1417 = pneg %p100
        $region72: #{forward.3} parent=65 // pred_check_branch
          %1419 = sbr.rel (%p1417) target = $region74
        $region73: #{forward.3} parent=65 // pred_region
          %s1420 = smul.u32 16, %s14
        $region74: #{forward.3} parent=65 // pred_fallthru
          _
      $region66: #{forward.3} parent=5 // pred_fallthru
        _
      %p1421 = scmp.le.s32.totalorder 2, %s9
      // Predicated region
      $region75: #{forward.3} parent=5 // pred_check
        %p1422 = pneg %p1421
      $region76: #{forward.3} parent=5 // pred_check_branch
        %1424 = sbr.rel (%p1422) target = $region78
      $region77: #{forward.3} parent=5 // pred_region
        %s1425 = ssub.s32 %s9, 2
        // Predicated region
        $region79: #{forward.3} parent=77 // pred_check
          %p1426 = pneg %p106
        $region80: #{forward.3} parent=77 // pred_check_branch
          %1428 = sbr.rel (%p1426) target = $region82
        $region81: #{forward.3} parent=77 // pred_region
          %s1429 = smul.u32 16, %s15
          %p1430 = scmp.lt.s32.totalorder %s1429, 31
          %s1431 = scalar_select %p1430, %s1429, 31
          %s1432 = smul.addr %s1431, 8
          %s1433 = scalar_lea.vmem %s3, %s1432
        $region82: #{forward.3} parent=77 // pred_fallthru
          _
      $region78: #{forward.3} parent=5 // pred_fallthru
        _
    $region6: #{forward.3} parent=1 // loop_footer
      %s13 = sadd.s32 1, %s9
    $region7: #{forward.3} parent=1 // loop_footer_branch
      %8 = sbr.rel target = $region3
    $region8: #{forward.3} parent=1 // loop_exit
      _

// kernel: forward.4
$region0: #{forward.4}
  #allocation0 [shape = 'u32[]', space=smem, size = 0x4, offset = 0x4, fixed_abs, tag = 'smem constant byte address 0x4 - core index']
  #allocation1 [shape = 'u32[144,128]{1,0:T(1,128)}', space=vmem, size = 0x12000, scoped, tag = 'internal scratch']
  %s0 = inlined_call_operand.vmem [shape: f32[4,64,144], index: 0, kind: input, shape index: {}]
  %s1 = inlined_call_operand.vmem [shape: f32[144,32], index: 1, kind: input, shape index: {}]
  %s2 = inlined_call_operand.vmem [shape: f32[1,32], index: 2, kind: input, shape index: {}]
  %s3 = inlined_call_operand.vmem [shape: f32[64,32], index: 3, kind: output, shape index: {}]
  %s4 = sld [smem:[#allocation0]]
  $region68: #{forward.4} parent=0
    _
  %s6 = ssub.s32 1, %s4
  %s7 = scalar_select 0, %s6, %s4
  $region1: #{forward.4} parent=0
    #allocation2 [shape = 'u8[262144]{0}', space=vmem, size = 0x40000, scoped, tag = 'input window, operand 0']
    loop: start=0, step=1, limit=4
    $region2: #{forward.4} parent=1 // loop_pre_header
      _
    $region3: #{forward.4} parent=1 // loop_header
      %s9 = sphi 0, %s13
      %p10 = scmp.ge.s32.totalorder %s9, 4
      %s19 = sphi 0, %s21
      %s22 = sphi 0, %s19
      %s23 = sphi 0, %s22
      %s39 = sphi 0, %s23
      %s43 = sphi 0, %s43
      %s45 = sphi 0, %s43
      %s46 = sphi 0, %s45
      %s60 = sphi 0, %s46
      %s64 = sphi 0, %s64
      %s66 = sphi 0, %s64
      %s67 = sphi 0, %s66
      %s81 = sphi 0, %s67
      %s87 = sphi 0, %s89
      %s90 = sphi 0, %s87
      %s91 = sphi 0, %s90
      %s107 = sphi 0, %s91
    $region4: #{forward.4} parent=1 // loop_header_branch
      %12 = sbr.rel (%p10) target = $region8
    $region5: #{forward.4} parent=1 // loop_body
      %s14 = ssub.s32 %s9, 1
      %s15 = ssub.s32 %s9, 2
      %s16 = sadd.s32 %s9, 1
      %s17 = ssub.s32 %s9, %s16
      %p18 = scmp.eq.s32.totalorder %s17, 0
      %s20 = sadd.s32 %s19, 1
      %s21 = scalar_select %p18, %s19, %s20
      %p24 = pneg %p18
      %p25 = scmp.eq.s32.totalorder %s9, 1
      %p26 = por %p24, %p25
      %p27 = scmp.ne.s32.totalorder %s19, %s22
      %p28 = scmp.eq.s32.totalorder %s9, 0
      %p29 = por %p27, %p28
      %p30 = scmp.ne.s32.totalorder %s19, %s22
      %p31 = scmp.eq.s32.totalorder %s14, 1
      %p32 = por %p30, %p31
      %p33 = scmp.ne.s32.totalorder %s22, %s23
      %p34 = scmp.eq.s32.totalorder %s14, 0
      %p35 = por %p33, %p34
      %p36 = scmp.ne.s32.totalorder %s22, %s23
      %p37 = scmp.eq.s32.totalorder %s15, 1
      %p38 = por %p36, %p37
      %p40 = scmp.ne.s32.totalorder %s23, %s39
      %p41 = scmp.eq.s32.totalorder %s15, 0
      %p42 = por %p40, %p41
      %s44 = sadd.s32 %s43, 1
      %p47 = scmp.eq.s32.totalorder %s9, 1
      %p48 = scmp.ne.s32.totalorder %s43, %s45
      %p49 = scmp.eq.s32.totalorder %s9, 0
      %p50 = por %p48, %p49
      %p51 = scmp.ne.s32.totalorder %s43, %s45
      %p52 = scmp.eq.s32.totalorder %s14, 1
      %p53 = por %p51, %p52
      %p54 = scmp.ne.s32.totalorder %s45, %s46
      %p55 = scmp.eq.s32.totalorder %s14, 0
      %p56 = por %p54, %p55
      %p57 = scmp.ne.s32.totalorder %s45, %s46
      %p58 = scmp.eq.s32.totalorder %s15, 1
      %p59 = por %p57, %p58
      %p61 = scmp.ne.s32.totalorder %s46, %s60
      %p62 = scmp.eq.s32.totalorder %s15, 0
      %p63 = por %p61, %p62
      %s65 = sadd.s32 %s64, 1
      %p68 = scmp.eq.s32.totalorder %s9, 1
      %p69 = scmp.ne.s32.totalorder %s64, %s66
      %p70 = scmp.eq.s32.totalorder %s9, 0
      %p71 = por %p69, %p70
      %p72 = scmp.ne.s32.totalorder %s64, %s66
      %p73 = scmp.eq.s32.totalorder %s14, 1
      %p74 = por %p72, %p73
      %p75 = scmp.ne.s32.totalorder %s66, %s67
      %p76 = scmp.eq.s32.totalorder %s14, 0
      %p77 = por %p75, %p76
      %p78 = scmp.ne.s32.totalorder %s66, %s67
      %p79 = scmp.eq.s32.totalorder %s15, 1
      %p80 = por %p78, %p79
      %p82 = scmp.ne.s32.totalorder %s67, %s81
      %p83 = scmp.eq.s32.totalorder %s15, 0
      %p84 = por %p82, %p83
      %s85 = ssub.s32 %s9, %s16
      %p86 = scmp.eq.s32.totalorder %s85, 0
      %s88 = sadd.s32 %s87, 1
      %s89 = scalar_select %p86, %s87, %s88
      %p92 = pneg %p86
      %p93 = scmp.eq.s32.totalorder %s9, 1
      %p94 = por %p92, %p93
      %p95 = scmp.ne.s32.totalorder %s87, %s90
      %p96 = scmp.eq.s32.totalorder %s9, 0
      %p97 = por %p95, %p96
      %p98 = scmp.ne.s32.totalorder %s87, %s90
      %p99 = scmp.eq.s32.totalorder %s14, 1
      %p100 = por %p98, %p99
      %p101 = scmp.ne.s32.totalorder %s90, %s91
      %p102 = scmp.eq.s32.totalorder %s14, 0
      %p103 = por %p101, %p102
      %p104 = scmp.ne.s32.totalorder %s90, %s91
      %p105 = scmp.eq.s32.totalorder %s15, 1
      %p106 = por %p104, %p105
      %p108 = scmp.ne.s32.totalorder %s91, %s107
      %p109 = scmp.eq.s32.totalorder %s15, 0
      %p110 = por %p108, %p109
      %p111 = scmp.le.s32.totalorder 1, %s9
      %p112 = scmp.lt.s32.totalorder %s9, 3
      %p113 = pnand %p111, %p112
      %p114 = pneg %p113
      // Predicated region
      $region9: #{forward.4} parent=5 // pred_check
        _
      $region10: #{forward.4} parent=5 // pred_check_branch
        %116 = sbr.rel (%p113) target = $region12
      $region11: #{forward.4} parent=5 // pred_region
        %s117 = ssub.s32 %s9, 1
        // Predicated region
        $region13: #{forward.4} parent=11 // pred_check
          %p118 = pneg %p56
        $region14: #{forward.4} parent=11 // pred_check_branch
          %120 = sbr.rel (%p118) target = $region16
        $region15: #{forward.4} parent=11 // pred_region
          _
        $region16: #{forward.4} parent=11 // pred_fallthru
          _
        // Predicated region
        $region17: #{forward.4} parent=11 // pred_check
          %p121 = pneg %p77
        $region18: #{forward.4} parent=11 // pred_check_branch
          %123 = sbr.rel (%p121) target = $region20
        $region19: #{forward.4} parent=11 // pred_region
          _
        $region20: #{forward.4} parent=11 // pred_fallthru
          _
      $region12: #{forward.4} parent=5 // pred_fallthru
        _
      %p124 = scmp.lt.s32.totalorder %s9, 2
      // Predicated region
      $region21: #{forward.4} parent=5 // pred_check
        %p125 = pneg %p124
      $region22: #{forward.4} parent=5 // pred_check_branch
        %127 = sbr.rel (%p125) target = $region24
      $region23: #{forward.4} parent=5 // pred_region
        // Predicated region
        $region25: #{forward.4} parent=23 // pred_check
          %p128 = pneg %p29
        $region26: #{forward.4} parent=23 // pred_check_branch
          %130 = sbr.rel (%p128) target = $region28
        $region27: #{forward.4} parent=23 // pred_region
          %s131 = sand.u32 %s19, 1
          %s132 = sand.u32 %s19, 1
          %s133 = smul.addr %s132, 256
          %s134 = scalar_lea.vmem [#allocation2], %s133
          %s135 = smul.u32 4, %s9
          %s136 = smul.addr %s135, 2
          %s137 = smul.addr %s136, 8
          %s138 = scalar_lea.vmem %s0, %s137
          // Predicated region
          $region29: #{forward.4} parent=27 // pred_check
            _
          $region30: #{forward.4} parent=27 // pred_check_branch
            %140 = sbr.rel (0) target = $region32
          $region31: #{forward.4} parent=27 // pred_region
            // Predicated region
            $region33: #{forward.4} parent=31 // pred_check
              _
            $region34: #{forward.4} parent=31 // pred_check_branch
              %142 = sbr.rel (0) target = $region36
            $region35: #{forward.4} parent=31 // pred_region
              loop: start=0, step=1, limit=1
              $region37: #{forward.4} parent=35 // loop_pre_header
                _
              $region38: #{forward.4} parent=35 // loop_header
                %s144 = sphi 0, %s148
                %p145 = scmp.ge.s32.totalorder %s144, 1
                %s149 = sphi %s138, %s138
                %s150 = sphi %s134, %s134
              $region39: #{forward.4} parent=35 // loop_header_branch
                %147 = sbr.rel (%p145) target = $region43
              $region40: #{forward.4} parent=35 // loop_body
                %v151 = vld [vmem:[%s149] sm:$0xff]
                %152 = vst [vmem:[%s150] sm:$0xff] %v151
                %v153 = vld [vmem:[%s149 + $0x8] sm:$0xff]
                %154 = vst [vmem:[%s150 + $0x8] sm:$0xff] %v153
                %v155 = vld [vmem:[%s149 + $0x10] sm:$0xff]
                %156 = vst [vmem:[%s150 + $0x10] sm:$0xff] %v155
                %v157 = vld [vmem:[%s149 + $0x18] sm:$0xff]
                %158 = vst [vmem:[%s150 + $0x18] sm:$0xff] %v157
                %v159 = vld [vmem:[%s149 + $0x20] sm:$0xff]
                %160 = vst [vmem:[%s150 + $0x20] sm:$0xff] %v159
                %v161 = vld [vmem:[%s149 + $0x28] sm:$0xff]
                %162 = vst [vmem:[%s150 + $0x28] sm:$0xff] %v161
                %v163 = vld [vmem:[%s149 + $0x30] sm:$0xff]
                %164 = vst [vmem:[%s150 + $0x30] sm:$0xff] %v163
                %v165 = vld [vmem:[%s149 + $0x38] sm:$0xff]
                %166 = vst [vmem:[%s150 + $0x38] sm:$0xff] %v165
                %v167 = vld [vmem:[%s149 + $0x80] sm:$0xff]
                %168 = vst [vmem:[%s150 + $0x40] sm:$0xff] %v167
                %v169 = vld [vmem:[%s149 + $0x88] sm:$0xff]
                %170 = vst [vmem:[%s150 + $0x48] sm:$0xff] %v169
                %v171 = vld [vmem:[%s149 + $0x90] sm:$0xff]
                %172 = vst [vmem:[%s150 + $0x50] sm:$0xff] %v171
                %v173 = vld [vmem:[%s149 + $0x98] sm:$0xff]
                %174 = vst [vmem:[%s150 + $0x58] sm:$0xff] %v173
                %v175 = vld [vmem:[%s149 + $0xa0] sm:$0xff]
                %176 = vst [vmem:[%s150 + $0x60] sm:$0xff] %v175
                %v177 = vld [vmem:[%s149 + $0xa8] sm:$0xff]
                %178 = vst [vmem:[%s150 + $0x68] sm:$0xff] %v177
                %v179 = vld [vmem:[%s149 + $0xb0] sm:$0xff]
                %180 = vst [vmem:[%s150 + $0x70] sm:$0xff] %v179
                %v181 = vld [vmem:[%s149 + $0xb8] sm:$0xff]
                %182 = vst [vmem:[%s150 + $0x78] sm:$0xff] %v181
                %v183 = vld [vmem:[%s149 + $0x100] sm:$0xff]
                %184 = vst [vmem:[%s150 + $0x80] sm:$0xff] %v183
                %v185 = vld [vmem:[%s149 + $0x108] sm:$0xff]
                %186 = vst [vmem:[%s150 + $0x88] sm:$0xff] %v185
                %v187 = vld [vmem:[%s149 + $0x110] sm:$0xff]
                %188 = vst [vmem:[%s150 + $0x90] sm:$0xff] %v187
                %v189 = vld [vmem:[%s149 + $0x118] sm:$0xff]
                %190 = vst [vmem:[%s150 + $0x98] sm:$0xff] %v189
                %v191 = vld [vmem:[%s149 + $0x120] sm:$0xff]
                %192 = vst [vmem:[%s150 + $0xa0] sm:$0xff] %v191
                %v193 = vld [vmem:[%s149 + $0x128] sm:$0xff]
                %194 = vst [vmem:[%s150 + $0xa8] sm:$0xff] %v193
                %v195 = vld [vmem:[%s149 + $0x130] sm:$0xff]
                %196 = vst [vmem:[%s150 + $0xb0] sm:$0xff] %v195
                %v197 = vld [vmem:[%s149 + $0x138] sm:$0xff]
                %198 = vst [vmem:[%s150 + $0xb8] sm:$0xff] %v197
                %v199 = vld [vmem:[%s149 + $0x180] sm:$0xff]
                %200 = vst [vmem:[%s150 + $0xc0] sm:$0xff] %v199
                %v201 = vld [vmem:[%s149 + $0x188] sm:$0xff]
                %202 = vst [vmem:[%s150 + $0xc8] sm:$0xff] %v201
                %v203 = vld [vmem:[%s149 + $0x190] sm:$0xff]
                %204 = vst [vmem:[%s150 + $0xd0] sm:$0xff] %v203
                %v205 = vld [vmem:[%s149 + $0x198] sm:$0xff]
                %206 = vst [vmem:[%s150 + $0xd8] sm:$0xff] %v205
                %v207 = vld [vmem:[%s149 + $0x1a0] sm:$0xff]
                %208 = vst [vmem:[%s150 + $0xe0] sm:$0xff] %v207
                %v209 = vld [vmem:[%s149 + $0x1a8] sm:$0xff]
                %210 = vst [vmem:[%s150 + $0xe8] sm:$0xff] %v209
                %v211 = vld [vmem:[%s149 + $0x1b0] sm:$0xff]
                %212 = vst [vmem:[%s150 + $0xf0] sm:$0xff] %v211
                %v213 = vld [vmem:[%s149 + $0x1b8] sm:$0xff]
                %214 = vst [vmem:[%s150 + $0xf8] sm:$0xff] %v213
              $region41: #{forward.4} parent=35 // loop_footer
                %s148 = sadd.s32 1, %s144
              $region42: #{forward.4} parent=35 // loop_footer_branch
                %143 = sbr.rel target = $region38
              $region43: #{forward.4} parent=35 // loop_exit
                _
            $region36: #{forward.4} parent=31 // pred_fallthru
              _
            // Predicated region
            $region44: #{forward.4} parent=31 // pred_check
              _
            $region45: #{forward.4} parent=31 // pred_check_branch
              %216 = sbr.rel target = $region47
            $region46: #{forward.4} parent=31 // pred_region
              _
            $region47: #{forward.4} parent=31 // pred_fallthru
              _
          $region32: #{forward.4} parent=27 // pred_fallthru
            _
          %217 = vnop
        $region28: #{forward.4} parent=23 // pred_fallthru
          _
      $region24: #{forward.4} parent=5 // pred_fallthru
        _
      %p218 = scmp.le.s32.totalorder 1, %s9
      %p219 = scmp.lt.s32.totalorder %s9, 3
      %p220 = pnand %p218, %p219
      %p221 = pneg %p220
      // Predicated region
      $region48: #{forward.4} parent=5 // pred_check
        _
      $region49: #{forward.4} parent=5 // pred_check_branch
        %223 = sbr.rel (%p220) target = $region51
      $region50: #{forward.4} parent=5 // pred_region
        %s224 = ssub.s32 %s9, 1
        %s225 = sand.u32 %s22, 1
        %s226 = sand.u32 %s22, 1
        %s227 = smul.addr %s226, 256
        %s228 = scalar_lea.vmem [#allocation2], %s227
        // Predicated region
        $region52: #{forward.4} parent=50 // pred_check
          %p229 = pneg %p35
        $region53: #{forward.4} parent=50 // pred_check_branch
          %231 = sbr.rel (%p229) target = $region55
        $region54: #{forward.4} parent=50 // pred_region
          _
        $region55: #{forward.4} parent=50 // pred_fallthru
          _
        %s232 = sand.u32 %s22, 1
        %s233 = sand.u32 %s22, 1
        %s234 = smul.addr %s233, 256
        %s235 = scalar_lea.vmem [#allocation2], %s234
        %p236 = pneg %p35
        %p237 = pneg %p32
        %p238 = pneg %p56
        %p239 = pneg %p53
        %p240 = pneg %p77
        %p241 = pneg %p74
        %p242 = pneg %p103
        %p243 = pneg %p100
        %s244 = smul.u32 4, %s14
        %p245 = scmp.lt.s32.totalorder %s244, 7
        %s246 = scalar_select %p245, %s244, 7
        %s247 = smul.addr %s246, 8
        %s248 = scalar_lea.vmem %s3, %s247
        %s249 = smul.u32 4, %s14
        %s250 = smul.u32 4, %s14
        %p251 = scmp.lt.s32.totalorder %s250, 7
        %s252 = scalar_select %p251, %s250, 7
        %s253 = smul.addr %s252, 8
        %s254 = scalar_lea.vmem %s3, %s253
        %s255 = smul.u32 4, %s14
        %v256 = vld [vmem:[%s1] sm:$0xff]
        %v257 = vld [vmem:[%s1 + $0x8] sm:$0xff]
        %v258 = vld [vmem:[%s1 + $0x10] sm:$0xff]
        %v259 = vld [vmem:[%s1 + $0x18] sm:$0xff]
        %v260 = vld [vmem:[%s1 + $0x20] sm:$0xff]
        %v261 = vld [vmem:[%s1 + $0x28] sm:$0xff]
        %v262 = vld [vmem:[%s1 + $0x30] sm:$0xff]
        %v263 = vld [vmem:[%s1 + $0x38] sm:$0xff]
        %v264 = vld [vmem:[%s1 + $0x40] sm:$0xff]
        %v265 = vld [vmem:[%s1 + $0x48] sm:$0xff]
        %v266 = vld [vmem:[%s1 + $0x50] sm:$0xff]
        %v267 = vld [vmem:[%s1 + $0x58] sm:$0xff]
        %v268 = vld [vmem:[%s1 + $0x60] sm:$0xff]
        %v269 = vld [vmem:[%s1 + $0x68] sm:$0xff]
        %v270 = vld [vmem:[%s1 + $0x70] sm:$0xff]
        %v271 = vld [vmem:[%s1 + $0x78] sm:$0xff]
        %v272 = vld [vmem:[%s1 + $0x80] sm:$0xff]
        %v273 = vld [vmem:[%s1 + $0x88] sm:$0xff]
        %v274 = vld [vmem:[%s228] sm:$0xff]
        %v275 = vld [vmem:[%s228 + $0x8] sm:$0xff]
        %v276 = vld [vmem:[%s228 + $0x10] sm:$0xff]
        %v277 = vld [vmem:[%s228 + $0x18] sm:$0xff]
        %v278 = vld [vmem:[%s228 + $0x20] sm:$0xff]
        %v279 = vld [vmem:[%s228 + $0x28] sm:$0xff]
        %v280 = vld [vmem:[%s228 + $0x30] sm:$0xff]
        %v281 = vld [vmem:[%s228 + $0x38] sm:$0xff]
        %vm282 = vcmask 130048
        %v284 = vsel %vm282, %v275, 0
        %v287 = vsel %vm282, %v277, 0
        %v290 = vsel %vm282, %v279, 0
        %v293 = vsel %vm282, %v281, 0
        %295 = vmatprep.subr.mxu0 0.0
        %296 = vmatpush1.msra.mxu0 %v256
        %297 = vmatprep.subr.mxu0 0.0
        %298 = vmatpush1.msra.mxu0 %v257
        %299 = vmatprep.subr.mxu0 0.0
        %300 = vmatpush1.msra.mxu0 %v258
        %301 = vmatprep.subr.mxu0 0.0
        %302 = vmatpush1.msra.mxu0 %v259
        %303 = vmatprep.subr.mxu0 0.0
        %304 = vmatpush1.msra.mxu0 %v260
        %305 = vmatprep.subr.mxu0 0.0
        %306 = vmatpush1.msra.mxu0 %v261
        %307 = vmatprep.subr.mxu0 0.0
        %308 = vmatpush1.msra.mxu0 %v262
        %309 = vmatprep.subr.mxu0 0.0
        %310 = vmatpush1.msra.mxu0 %v263
        %311 = vmatprep.subr.mxu0 0.0
        %312 = vmatpush1.msra.mxu0 %v264
        %313 = vmatprep.subr.mxu0 0.0
        %314 = vmatpush1.msra.mxu0 %v265
        %315 = vmatprep.subr.mxu0 0.0
        %316 = vmatpush1.msra.mxu0 %v266
        %317 = vmatprep.subr.mxu0 0.0
        %318 = vmatpush1.msra.mxu0 %v267
        %319 = vmatprep.subr.mxu0 0.0
        %320 = vmatpush1.msra.mxu0 %v268
        %321 = vmatprep.subr.mxu0 0.0
        %322 = vmatpush1.msra.mxu0 %v269
        %323 = vmatprep.subr.mxu0 0.0
        %324 = vmatpush1.msra.mxu0 %v270
        %325 = vmatprep.subr.mxu0 0.0
        %326 = vmatpush1.msra.mxu0 %v271
        %327 = vmatprep.subr.mxu0 0.0
        %328 = vmatpush1.msra.mxu0 %v272
        %329 = vmatprep.subr.mxu0 0.0
        %330 = vmatpush1.msra.mxu0 %v273
        %331 = vmatprep.subr.mxu0 0.0
        %332 = vmatpush1.msra.mxu0 0.0
        %333 = vmatprep.subr.mxu0 0.0
        %334 = vmatpush1.msra.mxu0 0.0
        %335 = vmatprep.subr.mxu0 0.0
        %336 = vmatpush1.msra.mxu0 0.0
        %337 = vmatprep.subr.mxu0 0.0
        %338 = vmatpush1.msra.mxu0 0.0
        %339 = vmatprep.subr.mxu0 0.0
        %340 = vmatpush1.msra.mxu0 0.0
        %341 = vmatprep.subr.mxu0 0.0
        %342 = vmatpush1.msra.mxu0 0.0
        %343 = vmatprep.subr.mxu0 0.0
        %344 = vmatpush1.msra.mxu0 0.0
        %345 = vmatprep.subr.mxu0 0.0
        %346 = vmatpush1.msra.mxu0 0.0
        %347 = vmatprep.subr.mxu0 0.0
        %348 = vmatpush1.msra.mxu0 0.0
        %349 = vmatprep.subr.mxu0 0.0
        %350 = vmatpush1.msra.mxu0 0.0
        %351 = vmatprep.subr.mxu0 0.0
        %352 = vmatpush1.msra.mxu0 0.0
        %353 = vmatprep.subr.mxu0 0.0
        %354 = vmatpush1.msra.mxu0 0.0
        %355 = vmatprep.subr.mxu0 0.0
        %356 = vmatpush1.msra.mxu0 0.0
        %357 = vmatprep.subr.mxu0 0.0
        %358 = vmatpush1.msra.mxu0 0.0
        %359 = vmatprep.mubr.f32.mxu0 %v284
        %360 = vmatmul.mubr.f32.gmra.mrb[0].mxu0 %v274
        %v361 = vpop.f32.mrb[0].mxu0
        %v362 = vadd.f32 0.0, %v361
        %v363 = vpop.f32.mrb[0].mxu0
        %364 = vmatprep.mubr.f32.mxu0 %v287
        %365 = vmatmul.mubr.f32.gmra.mrb[0].mxu0 %v276
        %v366 = vpop.f32.mrb[0].mxu0
        %v367 = vadd.f32 0.0, %v366
        %v368 = vpop.f32.mrb[0].mxu0
        %369 = vmatprep.mubr.f32.mxu0 %v290
        %370 = vmatmul.mubr.f32.gmra.mrb[0].mxu0 %v278
        %v371 = vpop.f32.mrb[0].mxu0
        %v372 = vadd.f32 0.0, %v371
        %v373 = vpop.f32.mrb[0].mxu0
        %374 = vmatprep.mubr.f32.mxu0 %v293
        %375 = vmatmul.mubr.f32.gmra.mrb[0].mxu0 %v280
        %v376 = vpop.f32.mrb[0].mxu0
        %v377 = vadd.f32 0.0, %v376
        %v378 = vpop.f32.mrb[0].mxu0
        %379 = vdwg.mxu0
        %s380 = scalar_lea.vmem %s228, 64 [#allocation2]
        %v381 = vld [vmem:[%s380] sm:$0xff]
        %v382 = vld [vmem:[%s380 + $0x8] sm:$0xff]
        %v383 = vld [vmem:[%s380 + $0x10] sm:$0xff]
        %v384 = vld [vmem:[%s380 + $0x18] sm:$0xff]
        %v385 = vld [vmem:[%s380 + $0x20] sm:$0xff]
        %v386 = vld [vmem:[%s380 + $0x28] sm:$0xff]
        %v387 = vld [vmem:[%s380 + $0x30] sm:$0xff]
        %v388 = vld [vmem:[%s380 + $0x38] sm:$0xff]
        %v390 = vsel %vm282, %v382, 0
        %v393 = vsel %vm282, %v384, 0
        %v396 = vsel %vm282, %v386, 0
        %v399 = vsel %vm282, %v388, 0
        %401 = vmatprep.subr.mxu0 0.0
        %402 = vmatpush1.msra.mxu0 %v256
        %403 = vmatprep.subr.mxu0 0.0
        %404 = vmatpush1.msra.mxu0 %v257
        %405 = vmatprep.subr.mxu0 0.0
        %406 = vmatpush1.msra.mxu0 %v258
        %407 = vmatprep.subr.mxu0 0.0
        %408 = vmatpush1.msra.mxu0 %v259
        %409 = vmatprep.subr.mxu0 0.0
        %410 = vmatpush1.msra.mxu0 %v260
        %411 = vmatprep.subr.mxu0 0.0
        %412 = vmatpush1.msra.mxu0 %v261
        %413 = vmatprep.subr.mxu0 0.0
        %414 = vmatpush1.msra.mxu0 %v262
        %415 = vmatprep.subr.mxu0 0.0
        %416 = vmatpush1.msra.mxu0 %v263
        %417 = vmatprep.subr.mxu0 0.0
        %418 = vmatpush1.msra.mxu0 %v264
        %419 = vmatprep.subr.mxu0 0.0
        %420 = vmatpush1.msra.mxu0 %v265
        %421 = vmatprep.subr.mxu0 0.0
        %422 = vmatpush1.msra.mxu0 %v266
        %423 = vmatprep.subr.mxu0 0.0
        %424 = vmatpush1.msra.mxu0 %v267
        %425 = vmatprep.subr.mxu0 0.0
        %426 = vmatpush1.msra.mxu0 %v268
        %427 = vmatprep.subr.mxu0 0.0
        %428 = vmatpush1.msra.mxu0 %v269
        %429 = vmatprep.subr.mxu0 0.0
        %430 = vmatpush1.msra.mxu0 %v270
        %431 = vmatprep.subr.mxu0 0.0
        %432 = vmatpush1.msra.mxu0 %v271
        %433 = vmatprep.subr.mxu0 0.0
        %434 = vmatpush1.msra.mxu0 %v272
        %435 = vmatprep.subr.mxu0 0.0
        %436 = vmatpush1.msra.mxu0 %v273
        %437 = vmatprep.subr.mxu0 0.0
        %438 = vmatpush1.msra.mxu0 0.0
        %439 = vmatprep.subr.mxu0 0.0
        %440 = vmatpush1.msra.mxu0 0.0
        %441 = vmatprep.subr.mxu0 0.0
        %442 = vmatpush1.msra.mxu0 0.0
        %443 = vmatprep.subr.mxu0 0.0
        %444 = vmatpush1.msra.mxu0 0.0
        %445 = vmatprep.subr.mxu0 0.0
        %446 = vmatpush1.msra.mxu0 0.0
        %447 = vmatprep.subr.mxu0 0.0
        %448 = vmatpush1.msra.mxu0 0.0
        %449 = vmatprep.subr.mxu0 0.0
        %450 = vmatpush1.msra.mxu0 0.0
        %451 = vmatprep.subr.mxu0 0.0
        %452 = vmatpush1.msra.mxu0 0.0
        %453 = vmatprep.subr.mxu0 0.0
        %454 = vmatpush1.msra.mxu0 0.0
        %455 = vmatprep.subr.mxu0 0.0
        %456 = vmatpush1.msra.mxu0 0.0
        %457 = vmatprep.subr.mxu0 0.0
        %458 = vmatpush1.msra.mxu0 0.0
        %459 = vmatprep.subr.mxu0 0.0
        %460 = vmatpush1.msra.mxu0 0.0
        %461 = vmatprep.subr.mxu0 0.0
        %462 = vmatpush1.msra.mxu0 0.0
        %463 = vmatprep.subr.mxu0 0.0
        %464 = vmatpush1.msra.mxu0 0.0
        %465 = vmatprep.mubr.f32.mxu0 %v390
        %466 = vmatmul.mubr.f32.gmra.mrb[0].mxu0 %v381
        %v467 = vpop.f32.mrb[0].mxu0
        %v468 = vadd.f32 0.0, %v467
        %v469 = vpop.f32.mrb[0].mxu0
        %470 = vmatprep.mubr.f32.mxu0 %v393
        %471 = vmatmul.mubr.f32.gmra.mrb[0].mxu0 %v383
        %v472 = vpop.f32.mrb[0].mxu0
        %v473 = vadd.f32 0.0, %v472
        %v474 = vpop.f32.mrb[0].mxu0
        %475 = vmatprep.mubr.f32.mxu0 %v396
        %476 = vmatmul.mubr.f32.gmra.mrb[0].mxu0 %v385
        %v477 = vpop.f32.mrb[0].mxu0
        %v478 = vadd.f32 0.0, %v477
        %v479 = vpop.f32.mrb[0].mxu0
        %480 = vmatprep.mubr.f32.mxu0 %v399
        %481 = vmatmul.mubr.f32.gmra.mrb[0].mxu0 %v387
        %v482 = vpop.f32.mrb[0].mxu0
        %v483 = vadd.f32 0.0, %v482
        %v484 = vpop.f32.mrb[0].mxu0
        %485 = vdwg.mxu0
        %v486 = vmax.f32 %v362, %v468
        %v487 = vmax.f32 %v367, %v473
        %v488 = vmax.f32 %v372, %v478
        %v489 = vmax.f32 %v377, %v483
        %s490 = scalar_lea.vmem %s228, 128 [#allocation2]
        %v491 = vld [vmem:[%s490] sm:$0xff]
        %v492 = vld [vmem:[%s490 + $0x8] sm:$0xff]
        %v493 = vld [vmem:[%s490 + $0x10] sm:$0xff]
        %v494 = vld [vmem:[%s490 + $0x18] sm:$0xff]
        %v495 = vld [vmem:[%s490 + $0x20] sm:$0xff]
        %v496 = vld [vmem:[%s490 + $0x28] sm:$0xff]
        %v497 = vld [vmem:[%s490 + $0x30] sm:$0xff]
        %v498 = vld [vmem:[%s490 + $0x38] sm:$0xff]
        %v500 = vsel %vm282, %v492, 0
        %v503 = vsel %vm282, %v494, 0
        %v506 = vsel %vm282, %v496, 0
        %v509 = vsel %vm282, %v498, 0
        %511 = vmatprep.subr.mxu0 0.0
        %512 = vmatpush1.msra.mxu0 %v256
        %513 = vmatprep.subr.mxu0 0.0
        %514 = vmatpush1.msra.mxu0 %v257
        %515 = vmatprep.subr.mxu0 0.0
        %516 = vmatpush1.msra.mxu0 %v258
        %517 = vmatprep.subr.mxu0 0.0
        %518 = vmatpush1.msra.mxu0 %v259
        %519 = vmatprep.subr.mxu0 0.0
        %520 = vmatpush1.msra.mxu0 %v260
        %521 = vmatprep.subr.mxu0 0.0
        %522 = vmatpush1.msra.mxu0 %v261
        %523 = vmatprep.subr.mxu0 0.0
        %524 = vmatpush1.msra.mxu0 %v262
        %525 = vmatprep.subr.mxu0 0.0
        %526 = vmatpush1.msra.mxu0 %v263
        %527 = vmatprep.subr.mxu0 0.0
        %528 = vmatpush1.msra.mxu0 %v264
        %529 = vmatprep.subr.mxu0 0.0
        %530 = vmatpush1.msra.mxu0 %v265
        %531 = vmatprep.subr.mxu0 0.0
        %532 = vmatpush1.msra.mxu0 %v266
        %533 = vmatprep.subr.mxu0 0.0
        %534 = vmatpush1.msra.mxu0 %v267
        %535 = vmatprep.subr.mxu0 0.0
        %536 = vmatpush1.msra.mxu0 %v268
        %537 = vmatprep.subr.mxu0 0.0
        %538 = vmatpush1.msra.mxu0 %v269
        %539 = vmatprep.subr.mxu0 0.0
        %540 = vmatpush1.msra.mxu0 %v270
        %541 = vmatprep.subr.mxu0 0.0
        %542 = vmatpush1.msra.mxu0 %v271
        %543 = vmatprep.subr.mxu0 0.0
        %544 = vmatpush1.msra.mxu0 %v272
        %545 = vmatprep.subr.mxu0 0.0
        %546 = vmatpush1.msra.mxu0 %v273
        %547 = vmatprep.subr.mxu0 0.0
        %548 = vmatpush1.msra.mxu0 0.0
        %549 = vmatprep.subr.mxu0 0.0
        %550 = vmatpush1.msra.mxu0 0.0
        %551 = vmatprep.subr.mxu0 0.0
        %552 = vmatpush1.msra.mxu0 0.0
        %553 = vmatprep.subr.mxu0 0.0
        %554 = vmatpush1.msra.mxu0 0.0
        %555 = vmatprep.subr.mxu0 0.0
        %556 = vmatpush1.msra.mxu0 0.0
        %557 = vmatprep.subr.mxu0 0.0
        %558 = vmatpush1.msra.mxu0 0.0
        %559 = vmatprep.subr.mxu0 0.0
        %560 = vmatpush1.msra.mxu0 0.0
        %561 = vmatprep.subr.mxu0 0.0
        %562 = vmatpush1.msra.mxu0 0.0
        %563 = vmatprep.subr.mxu0 0.0
        %564 = vmatpush1.msra.mxu0 0.0
        %565 = vmatprep.subr.mxu0 0.0
        %566 = vmatpush1.msra.mxu0 0.0
        %567 = vmatprep.subr.mxu0 0.0
        %568 = vmatpush1.msra.mxu0 0.0
        %569 = vmatprep.subr.mxu0 0.0
        %570 = vmatpush1.msra.mxu0 0.0
        %571 = vmatprep.subr.mxu0 0.0
        %572 = vmatpush1.msra.mxu0 0.0
        %573 = vmatprep.subr.mxu0 0.0
        %574 = vmatpush1.msra.mxu0 0.0
        %575 = vmatprep.mubr.f32.mxu0 %v500
        %576 = vmatmul.mubr.f32.gmra.mrb[0].mxu0 %v491
        %v577 = vpop.f32.mrb[0].mxu0
        %v578 = vadd.f32 0.0, %v577
        %v579 = vpop.f32.mrb[0].mxu0
        %580 = vmatprep.mubr.f32.mxu0 %v503
        %581 = vmatmul.mubr.f32.gmra.mrb[0].mxu0 %v493
        %v582 = vpop.f32.mrb[0].mxu0
        %v583 = vadd.f32 0.0, %v582
        %v584 = vpop.f32.mrb[0].mxu0
        %585 = vmatprep.mubr.f32.mxu0 %v506
        %586 = vmatmul.mubr.f32.gmra.mrb[0].mxu0 %v495
        %v587 = vpop.f32.mrb[0].mxu0
        %v588 = vadd.f32 0.0, %v587
        %v589 = vpop.f32.mrb[0].mxu0
        %590 = vmatprep.mubr.f32.mxu0 %v509
        %591 = vmatmul.mubr.f32.gmra.mrb[0].mxu0 %v497
        %v592 = vpop.f32.mrb[0].mxu0
        %v593 = vadd.f32 0.0, %v592
        %v594 = vpop.f32.mrb[0].mxu0
        %595 = vdwg.mxu0
        %v596 = vmax.f32 %v486, %v578
        %v597 = vmax.f32 %v487, %v583
        %v598 = vmax.f32 %v488, %v588
        %v599 = vmax.f32 %v489, %v593
        %s600 = scalar_lea.vmem %s228, 192 [#allocation2]
        %v601 = vld [vmem:[%s600] sm:$0xff]
        %v602 = vld [vmem:[%s600 + $0x8] sm:$0xff]
        %v603 = vld [vmem:[%s600 + $0x10] sm:$0xff]
        %v604 = vld [vmem:[%s600 + $0x18] sm:$0xff]
        %v605 = vld [vmem:[%s600 + $0x20] sm:$0xff]
        %v606 = vld [vmem:[%s600 + $0x28] sm:$0xff]
        %v607 = vld [vmem:[%s600 + $0x30] sm:$0xff]
        %v608 = vld [vmem:[%s600 + $0x38] sm:$0xff]
        %v610 = vsel %vm282, %v602, 0
        %v613 = vsel %vm282, %v604, 0
        %v616 = vsel %vm282, %v606, 0
        %v619 = vsel %vm282, %v608, 0
        %621 = vmatprep.subr.mxu0 0.0
        %622 = vmatpush1.msra.mxu0 %v256
        %623 = vmatprep.subr.mxu0 0.0
        %624 = vmatpush1.msra.mxu0 %v257
        %625 = vmatprep.subr.mxu0 0.0
        %626 = vmatpush1.msra.mxu0 %v258
        %627 = vmatprep.subr.mxu0 0.0
        %628 = vmatpush1.msra.mxu0 %v259
        %629 = vmatprep.subr.mxu0 0.0
        %630 = vmatpush1.msra.mxu0 %v260
        %631 = vmatprep.subr.mxu0 0.0
        %632 = vmatpush1.msra.mxu0 %v261
        %633 = vmatprep.subr.mxu0 0.0
        %634 = vmatpush1.msra.mxu0 %v262
        %635 = vmatprep.subr.mxu0 0.0
        %636 = vmatpush1.msra.mxu0 %v263
        %637 = vmatprep.subr.mxu0 0.0
        %638 = vmatpush1.msra.mxu0 %v264
        %639 = vmatprep.subr.mxu0 0.0
        %640 = vmatpush1.msra.mxu0 %v265
        %641 = vmatprep.subr.mxu0 0.0
        %642 = vmatpush1.msra.mxu0 %v266
        %643 = vmatprep.subr.mxu0 0.0
        %644 = vmatpush1.msra.mxu0 %v267
        %645 = vmatprep.subr.mxu0 0.0
        %646 = vmatpush1.msra.mxu0 %v268
        %647 = vmatprep.subr.mxu0 0.0
        %648 = vmatpush1.msra.mxu0 %v269
        %649 = vmatprep.subr.mxu0 0.0
        %650 = vmatpush1.msra.mxu0 %v270
        %651 = vmatprep.subr.mxu0 0.0
        %652 = vmatpush1.msra.mxu0 %v271
        %653 = vmatprep.subr.mxu0 0.0
        %654 = vmatpush1.msra.mxu0 %v272
        %655 = vmatprep.subr.mxu0 0.0
        %656 = vmatpush1.msra.mxu0 %v273
        %657 = vmatprep.subr.mxu0 0.0
        %658 = vmatpush1.msra.mxu0 0.0
        %659 = vmatprep.subr.mxu0 0.0
        %660 = vmatpush1.msra.mxu0 0.0
        %661 = vmatprep.subr.mxu0 0.0
        %662 = vmatpush1.msra.mxu0 0.0
        %663 = vmatprep.subr.mxu0 0.0
        %664 = vmatpush1.msra.mxu0 0.0
        %665 = vmatprep.subr.mxu0 0.0
        %666 = vmatpush1.msra.mxu0 0.0
        %667 = vmatprep.subr.mxu0 0.0
        %668 = vmatpush1.msra.mxu0 0.0
        %669 = vmatprep.subr.mxu0 0.0
        %670 = vmatpush1.msra.mxu0 0.0
        %671 = vmatprep.subr.mxu0 0.0
        %672 = vmatpush1.msra.mxu0 0.0
        %673 = vmatprep.subr.mxu0 0.0
        %674 = vmatpush1.msra.mxu0 0.0
        %675 = vmatprep.subr.mxu0 0.0
        %676 = vmatpush1.msra.mxu0 0.0
        %677 = vmatprep.subr.mxu0 0.0
        %678 = vmatpush1.msra.mxu0 0.0
        %679 = vmatprep.subr.mxu0 0.0
        %680 = vmatpush1.msra.mxu0 0.0
        %681 = vmatprep.subr.mxu0 0.0
        %682 = vmatpush1.msra.mxu0 0.0
        %683 = vmatprep.subr.mxu0 0.0
        %684 = vmatpush1.msra.mxu0 0.0
        %685 = vmatprep.mubr.f32.mxu0 %v610
        %686 = vmatmul.mubr.f32.gmra.mrb[0].mxu0 %v601
        %v687 = vpop.f32.mrb[0].mxu0
        %v688 = vadd.f32 0.0, %v687
        %v689 = vpop.f32.mrb[0].mxu0
        %690 = vmatprep.mubr.f32.mxu0 %v613
        %691 = vmatmul.mubr.f32.gmra.mrb[0].mxu0 %v603
        %v692 = vpop.f32.mrb[0].mxu0
        %v693 = vadd.f32 0.0, %v692
        %v694 = vpop.f32.mrb[0].mxu0
        %695 = vmatprep.mubr.f32.mxu0 %v616
        %696 = vmatmul.mubr.f32.gmra.mrb[0].mxu0 %v605
        %v697 = vpop.f32.mrb[0].mxu0
        %v698 = vadd.f32 0.0, %v697
        %v699 = vpop.f32.mrb[0].mxu0
        %700 = vmatprep.mubr.f32.mxu0 %v619
        %701 = vmatmul.mubr.f32.gmra.mrb[0].mxu0 %v607
        %v702 = vpop.f32.mrb[0].mxu0
        %v703 = vadd.f32 0.0, %v702
        %v704 = vpop.f32.mrb[0].mxu0
        %705 = vdwg.mxu0
        %v706 = vmax.f32 %v596, %v688
        %v707 = vmax.f32 %v597, %v693
        %v708 = vmax.f32 %v598, %v698
        %v709 = vmax.f32 %v599, %v703
        %v710 = vld [vmem:[%s2] sm:$0x1]
        %v712 = vlaneseq
        %v713 = vshrl.u32 %v712, 7
        %v714 = vsub.s32 0, %v713
        %v715 = vrot.slane %v710, %v714
        %v717 = vadd.f32 %v706, %v715
        %v718 = vadd.f32 %v707, %v715
        %v719 = vadd.f32 %v708, %v715
        %v720 = vadd.f32 %v709, %v715
        %v721 = vmax.f32 %v717, 0.0
        %v722 = vmax.f32 %v718, 0.0
        %v723 = vmax.f32 %v719, 0.0
        %v724 = vmax.f32 %v720, 0.0
        %vm725 = vcmask 261120
        %726 = vst.msk [vmem:[%s254] sm:$0xff] %vm725, %v721
        %727 = vst.msk [vmem:[%s254 + $0x8] sm:$0xff] %vm725, %v722
        %728 = vst.msk [vmem:[%s254 + $0x10] sm:$0xff] %vm725, %v723
        %729 = vst.msk [vmem:[%s254 + $0x18] sm:$0xff] %vm725, %v724
        %s730 = smul.u32 4, %s14
        %p731 = scmp.lt.s32.totalorder %s730, 7
        %s732 = scalar_select %p731, %s730, 7
        %s733 = smul.addr %s732, 8
        %s734 = scalar_lea.vmem %s3, %s733
        // Predicated region
        $region56: #{forward.4} parent=50 // pred_check
          %p735 = pneg %p100
        $region57: #{forward.4} parent=50 // pred_check_branch
          %737 = sbr.rel (%p735) target = $region59
        $region58: #{forward.4} parent=50 // pred_region
          %s738 = smul.u32 4, %s14
        $region59: #{forward.4} parent=50 // pred_fallthru
          _
      $region51: #{forward.4} parent=5 // pred_fallthru
        _
      %p739 = scmp.le.s32.totalorder 2, %s9
      // Predicated region
      $region60: #{forward.4} parent=5 // pred_check
        %p740 = pneg %p739
      $region61: #{forward.4} parent=5 // pred_check_branch
        %742 = sbr.rel (%p740) target = $region63
      $region62: #{forward.4} parent=5 // pred_region
        %s743 = ssub.s32 %s9, 2
        // Predicated region
        $region64: #{forward.4} parent=62 // pred_check
          %p744 = pneg %p106
        $region65: #{forward.4} parent=62 // pred_check_branch
          %746 = sbr.rel (%p744) target = $region67
        $region66: #{forward.4} parent=62 // pred_region
          %s747 = smul.u32 4, %s15
          %p748 = scmp.lt.s32.totalorder %s747, 7
          %s749 = scalar_select %p748, %s747, 7
          %s750 = smul.addr %s749, 8
          %s751 = scalar_lea.vmem %s3, %s750
        $region67: #{forward.4} parent=62 // pred_fallthru
          _
      $region63: #{forward.4} parent=5 // pred_fallthru
        _
    $region6: #{forward.4} parent=1 // loop_footer
      %s13 = sadd.s32 1, %s9
    $region7: #{forward.4} parent=1 // loop_footer_branch
      %8 = sbr.rel target = $region3
    $region8: #{forward.4} parent=1 // loop_exit
      _

// kernel: forward.5
$region0: #{forward.5}
  #allocation0 [shape = 'u32[]', space=smem, size = 0x4, offset = 0x4, fixed_abs, tag = 'smem constant byte address 0x4 - core index']
  #allocation1 [shape = 'u32[144,128]{1,0:T(1,128)}', space=vmem, size = 0x12000, scoped, tag = 'internal scratch']
  #allocation2 [shape = 'f32[1,1]{1,0:T(1,128)S(1)}', space=vmem, size = 0x200, scoped, tag = 'scoped memory for forward.5']
  %s0 = inlined_call_operand.vmem [shape: f32[2,8], index: 0, kind: input, shape index: {}]
  %s1 = inlined_call_operand.vmem [shape: f32[1,256], index: 1, kind: input, shape index: {}]
  %s2 = inlined_call_operand.vmem [shape: f32[64,256], index: 2, kind: input, shape index: {}]
  %s3 = inlined_call_operand.vmem [shape: f32[1,256], index: 3, kind: input, shape index: {}]
  %s4 = inlined_call_operand.vmem [shape: f32[4,512], index: 4, kind: input, shape index: {}]
  %s5 = inlined_call_operand.vmem [shape: f32[512,128], index: 5, kind: input, shape index: {}]
  %s6 = inlined_call_operand.vmem [shape: f32[1,128], index: 6, kind: input, shape index: {}]
  %s7 = inlined_call_operand.vmem [shape: f32[512,128], index: 7, kind: input, shape index: {}]
  %s8 = inlined_call_operand.vmem [shape: f32[1,128], index: 8, kind: input, shape index: {}]
  %s9 = inlined_call_operand.vmem [shape: f32[2,16], index: 9, kind: input, shape index: {}]
  %s10 = inlined_call_operand.vmem [shape: f32[16,64], index: 10, kind: input, shape index: {}]
  %s11 = inlined_call_operand.vmem [shape: f32[1,64], index: 11, kind: input, shape index: {}]
  %s12 = inlined_call_operand.vmem [shape: f32[64,128], index: 12, kind: input, shape index: {}]
  %s13 = inlined_call_operand.vmem [shape: f32[1,128], index: 13, kind: input, shape index: {}]
  %s14 = inlined_call_operand.vmem [shape: f32[384,128], index: 14, kind: input, shape index: {}]
  %s15 = inlined_call_operand.vmem [shape: f32[1,128], index: 15, kind: input, shape index: {}]
  %s16 = inlined_call_operand.vmem [shape: f32[128,1], index: 16, kind: input, shape index: {}]
  %s17 = inlined_call_operand.<no memory space> [shape: f32[1,1], index: 17, kind: input, shape index: {}]
  %s18 = inlined_call_operand.vmem [shape: f32[2,1], index: 18, kind: output, shape index: {}]
  %s19 = sld [smem:[#allocation0]]
  $region82: #{forward.5} parent=0
    _
  %s21 = ssub.s32 1, %s19
  %s22 = scalar_select 0, %s21, %s19
  %v23 = vstv %s17
  %24 = vst [vmem:[#allocation2] sm:$0x1] %v23
  // Predicated region
  $region2: #{forward.5} parent=0 // pred_check
    _
  $region3: #{forward.5} parent=0 // pred_check_branch
    %26 = sbr.rel (0) target = $region5
  $region4: #{forward.5} parent=0 // pred_region
    _
  $region5: #{forward.5} parent=0 // pred_fallthru
    _
  // Predicated region
  $region6: #{forward.5} parent=0 // pred_check
    _
  $region7: #{forward.5} parent=0 // pred_check_branch
    %28 = sbr.rel (0) target = $region9
  $region8: #{forward.5} parent=0 // pred_region
    _
  $region9: #{forward.5} parent=0 // pred_fallthru
    _
  // Predicated region
  $region10: #{forward.5} parent=0 // pred_check
    _
  $region11: #{forward.5} parent=0 // pred_check_branch
    %30 = sbr.rel (0) target = $region13
  $region12: #{forward.5} parent=0 // pred_region
    _
  $region13: #{forward.5} parent=0 // pred_fallthru
    _
  // Predicated region
  $region14: #{forward.5} parent=0 // pred_check
    _
  $region15: #{forward.5} parent=0 // pred_check_branch
    %32 = sbr.rel (0) target = $region17
  $region16: #{forward.5} parent=0 // pred_region
    _
  $region17: #{forward.5} parent=0 // pred_fallthru
    _
  // Predicated region
  $region18: #{forward.5} parent=0 // pred_check
    _
  $region19: #{forward.5} parent=0 // pred_check_branch
    %34 = sbr.rel (0) target = $region21
  $region20: #{forward.5} parent=0 // pred_region
    _
  $region21: #{forward.5} parent=0 // pred_fallthru
    _
  // Predicated region
  $region22: #{forward.5} parent=0 // pred_check
    _
  $region23: #{forward.5} parent=0 // pred_check_branch
    %36 = sbr.rel (0) target = $region25
  $region24: #{forward.5} parent=0 // pred_region
    _
  $region25: #{forward.5} parent=0 // pred_fallthru
    _
  // Predicated region
  $region26: #{forward.5} parent=0 // pred_check
    _
  $region27: #{forward.5} parent=0 // pred_check_branch
    %38 = sbr.rel (0) target = $region29
  $region28: #{forward.5} parent=0 // pred_region
    _
  $region29: #{forward.5} parent=0 // pred_fallthru
    _
  // Predicated region
  $region30: #{forward.5} parent=0 // pred_check
    _
  $region31: #{forward.5} parent=0 // pred_check_branch
    %40 = sbr.rel (0) target = $region33
  $region32: #{forward.5} parent=0 // pred_region
    _
  $region33: #{forward.5} parent=0 // pred_fallthru
    _
  // Predicated region
  $region34: #{forward.5} parent=0 // pred_check
    _
  $region35: #{forward.5} parent=0 // pred_check_branch
    %42 = sbr.rel (0) target = $region37
  $region36: #{forward.5} parent=0 // pred_region
    _
  $region37: #{forward.5} parent=0 // pred_fallthru
    _
  // Predicated region
  $region38: #{forward.5} parent=0 // pred_check
    _
  $region39: #{forward.5} parent=0 // pred_check_branch
    %44 = sbr.rel (0) target = $region41
  $region40: #{forward.5} parent=0 // pred_region
    _
  $region41: #{forward.5} parent=0 // pred_fallthru
    _
  // Predicated region
  $region42: #{forward.5} parent=0 // pred_check
    _
  $region43: #{forward.5} parent=0 // pred_check_branch
    %46 = sbr.rel (0) target = $region45
  $region44: #{forward.5} parent=0 // pred_region
    _
  $region45: #{forward.5} parent=0 // pred_fallthru
    _
  // Predicated region
  $region46: #{forward.5} parent=0 // pred_check
    _
  $region47: #{forward.5} parent=0 // pred_check_branch
    %48 = sbr.rel (0) target = $region49
  $region48: #{forward.5} parent=0 // pred_region
    _
  $region49: #{forward.5} parent=0 // pred_fallthru
    _
  // Predicated region
  $region50: #{forward.5} parent=0 // pred_check
    _
  $region51: #{forward.5} parent=0 // pred_check_branch
    %50 = sbr.rel (0) target = $region53
  $region52: #{forward.5} parent=0 // pred_region
    _
  $region53: #{forward.5} parent=0 // pred_fallthru
    _
  // Predicated region
  $region54: #{forward.5} parent=0 // pred_check
    _
  $region55: #{forward.5} parent=0 // pred_check_branch
    %52 = sbr.rel (0) target = $region57
  $region56: #{forward.5} parent=0 // pred_region
    _
  $region57: #{forward.5} parent=0 // pred_fallthru
    _
  // Predicated region
  $region58: #{forward.5} parent=0 // pred_check
    _
  $region59: #{forward.5} parent=0 // pred_check_branch
    %54 = sbr.rel (0) target = $region61
  $region60: #{forward.5} parent=0 // pred_region
    _
  $region61: #{forward.5} parent=0 // pred_fallthru
    _
  // Predicated region
  $region62: #{forward.5} parent=0 // pred_check
    _
  $region63: #{forward.5} parent=0 // pred_check_branch
    %56 = sbr.rel (0) target = $region65
  $region64: #{forward.5} parent=0 // pred_region
    _
  $region65: #{forward.5} parent=0 // pred_fallthru
    _
  // Predicated region
  $region66: #{forward.5} parent=0 // pred_check
    _
  $region67: #{forward.5} parent=0 // pred_check_branch
    %58 = sbr.rel (0) target = $region69
  $region68: #{forward.5} parent=0 // pred_region
    _
  $region69: #{forward.5} parent=0 // pred_fallthru
    _
  // Predicated region
  $region70: #{forward.5} parent=0 // pred_check
    _
  $region71: #{forward.5} parent=0 // pred_check_branch
    %60 = sbr.rel (0) target = $region73
  $region72: #{forward.5} parent=0 // pred_region
    _
  $region73: #{forward.5} parent=0 // pred_fallthru
    _
  %v61 = vld [vmem:[%s4] sm:$0xff]
  %v62 = vld [vmem:[%s4 + $0x8] sm:$0xff]
  %v63 = vld [vmem:[%s5] sm:$0xff]
  %v64 = vld [vmem:[%s5 + $0x8] sm:$0xff]
  %v65 = vld [vmem:[%s5 + $0x10] sm:$0xff]
  %v66 = vld [vmem:[%s5 + $0x18] sm:$0xff]
  %v67 = vld [vmem:[%s5 + $0x20] sm:$0xff]
  %v68 = vld [vmem:[%s5 + $0x28] sm:$0xff]
  %v69 = vld [vmem:[%s5 + $0x30] sm:$0xff]
  %v70 = vld [vmem:[%s5 + $0x38] sm:$0xff]
  %v71 = vld [vmem:[%s5 + $0x40] sm:$0xff]
  %v72 = vld [vmem:[%s5 + $0x48] sm:$0xff]
  %v73 = vld [vmem:[%s5 + $0x50] sm:$0xff]
  %v74 = vld [vmem:[%s5 + $0x58] sm:$0xff]
  %v75 = vld [vmem:[%s5 + $0x60] sm:$0xff]
  %v76 = vld [vmem:[%s5 + $0x68] sm:$0xff]
  %v77 = vld [vmem:[%s5 + $0x70] sm:$0xff]
  %v78 = vld [vmem:[%s5 + $0x78] sm:$0xff]
  %v79 = vld [vmem:[%s5 + $0x80] sm:$0xff]
  %v80 = vld [vmem:[%s5 + $0x88] sm:$0xff]
  %v81 = vld [vmem:[%s5 + $0x90] sm:$0xff]
  %v82 = vld [vmem:[%s5 + $0x98] sm:$0xff]
  %v83 = vld [vmem:[%s5 + $0xa0] sm:$0xff]
  %v84 = vld [vmem:[%s5 + $0xa8] sm:$0xff]
  %v85 = vld [vmem:[%s5 + $0xb0] sm:$0xff]
  %v86 = vld [vmem:[%s5 + $0xb8] sm:$0xff]
  %v87 = vld [vmem:[%s5 + $0xc0] sm:$0xff]
  %v88 = vld [vmem:[%s5 + $0xc8] sm:$0xff]
  %v89 = vld [vmem:[%s5 + $0xd0] sm:$0xff]
  %v90 = vld [vmem:[%s5 + $0xd8] sm:$0xff]
  %v91 = vld [vmem:[%s5 + $0xe0] sm:$0xff]
  %v92 = vld [vmem:[%s5 + $0xe8] sm:$0xff]
  %v93 = vld [vmem:[%s5 + $0xf0] sm:$0xff]
  %v94 = vld [vmem:[%s5 + $0xf8] sm:$0xff]
  %v95 = vld [vmem:[%s5 + $0x100] sm:$0xff]
  %v96 = vld [vmem:[%s5 + $0x108] sm:$0xff]
  %v97 = vld [vmem:[%s5 + $0x110] sm:$0xff]
  %v98 = vld [vmem:[%s5 + $0x118] sm:$0xff]
  %v99 = vld [vmem:[%s5 + $0x120] sm:$0xff]
  %v100 = vld [vmem:[%s5 + $0x128] sm:$0xff]
  %v101 = vld [vmem:[%s5 + $0x130] sm:$0xff]
  %v102 = vld [vmem:[%s5 + $0x138] sm:$0xff]
  %v103 = vld [vmem:[%s5 + $0x140] sm:$0xff]
  %v104 = vld [vmem:[%s5 + $0x148] sm:$0xff]
  %v105 = vld [vmem:[%s5 + $0x150] sm:$0xff]
  %v106 = vld [vmem:[%s5 + $0x158] sm:$0xff]
  %v107 = vld [vmem:[%s5 + $0x160] sm:$0xff]
  %v108 = vld [vmem:[%s5 + $0x168] sm:$0xff]
  %v109 = vld [vmem:[%s5 + $0x170] sm:$0xff]
  %v110 = vld [vmem:[%s5 + $0x178] sm:$0xff]
  %v111 = vld [vmem:[%s5 + $0x180] sm:$0xff]
  %v112 = vld [vmem:[%s5 + $0x188] sm:$0xff]
  %v113 = vld [vmem:[%s5 + $0x190] sm:$0xff]
  %v114 = vld [vmem:[%s5 + $0x198] sm:$0xff]
  %v115 = vld [vmem:[%s5 + $0x1a0] sm:$0xff]
  %v116 = vld [vmem:[%s5 + $0x1a8] sm:$0xff]
  %v117 = vld [vmem:[%s5 + $0x1b0] sm:$0xff]
  %v118 = vld [vmem:[%s5 + $0x1b8] sm:$0xff]
  %v119 = vld [vmem:[%s5 + $0x1c0] sm:$0xff]
  %v120 = vld [vmem:[%s5 + $0x1c8] sm:$0xff]
  %v121 = vld [vmem:[%s5 + $0x1d0] sm:$0xff]
  %v122 = vld [vmem:[%s5 + $0x1d8] sm:$0xff]
  %v123 = vld [vmem:[%s5 + $0x1e0] sm:$0xff]
  %v124 = vld [vmem:[%s5 + $0x1e8] sm:$0xff]
  %v125 = vld [vmem:[%s5 + $0x1f0] sm:$0xff]
  %v126 = vld [vmem:[%s5 + $0x1f8] sm:$0xff]
  %v127 = vld [vmem:[%s6] sm:$0x1]
  %v129 = vlaneseq
  %v130 = vshrl.u32 %v129, 7
  %v131 = vsub.s32 0, %v130
  %v132 = vrot.slane %v127, %v131
  %v136 = vcombine.high %v61, %v61
  %v137 = vcombine.high %v62, %v62
  %140 = vmatprep.subr.mxu0 0.0
  %141 = vmatpush1.msra.mxu0 %v63
  %142 = vmatprep.subr.mxu0 0.0
  %143 = vmatpush1.msra.mxu0 %v64
  %144 = vmatprep.subr.mxu0 0.0
  %145 = vmatpush1.msra.mxu0 %v65
  %146 = vmatprep.subr.mxu0 0.0
  %147 = vmatpush1.msra.mxu0 %v66
  %148 = vmatprep.subr.mxu0 0.0
  %149 = vmatpush1.msra.mxu0 %v67
  %150 = vmatprep.subr.mxu0 0.0
  %151 = vmatpush1.msra.mxu0 %v68
  %152 = vmatprep.subr.mxu0 0.0
  %153 = vmatpush1.msra.mxu0 %v69
  %154 = vmatprep.subr.mxu0 0.0
  %155 = vmatpush1.msra.mxu0 %v70
  %156 = vmatprep.subr.mxu0 0.0
  %157 = vmatpush1.msra.mxu0 %v71
  %158 = vmatprep.subr.mxu0 0.0
  %159 = vmatpush1.msra.mxu0 %v72
  %160 = vmatprep.subr.mxu0 0.0
  %161 = vmatpush1.msra.mxu0 %v73
  %162 = vmatprep.subr.mxu0 0.0
  %163 = vmatpush1.msra.mxu0 %v74
  %164 = vmatprep.subr.mxu0 0.0
  %165 = vmatpush1.msra.mxu0 %v75
  %166 = vmatprep.subr.mxu0 0.0
  %167 = vmatpush1.msra.mxu0 %v76
  %168 = vmatprep.subr.mxu0 0.0
  %169 = vmatpush1.msra.mxu0 %v77
  %170 = vmatprep.subr.mxu0 0.0
  %171 = vmatpush1.msra.mxu0 %v78
  %172 = vmatprep.subr.mxu0 0.0
  %173 = vmatpush1.msra.mxu0 %v79
  %174 = vmatprep.subr.mxu0 0.0
  %175 = vmatpush1.msra.mxu0 %v80
  %176 = vmatprep.subr.mxu0 0.0
  %177 = vmatpush1.msra.mxu0 %v81
  %178 = vmatprep.subr.mxu0 0.0
  %179 = vmatpush1.msra.mxu0 %v82
  %180 = vmatprep.subr.mxu0 0.0
  %181 = vmatpush1.msra.mxu0 %v83
  %182 = vmatprep.subr.mxu0 0.0
  %183 = vmatpush1.msra.mxu0 %v84
  %184 = vmatprep.subr.mxu0 0.0
  %185 = vmatpush1.msra.mxu0 %v85
  %186 = vmatprep.subr.mxu0 0.0
  %187 = vmatpush1.msra.mxu0 %v86
  %188 = vmatprep.subr.mxu0 0.0
  %189 = vmatpush1.msra.mxu0 %v87
  %190 = vmatprep.subr.mxu0 0.0
  %191 = vmatpush1.msra.mxu0 %v88
  %192 = vmatprep.subr.mxu0 0.0
  %193 = vmatpush1.msra.mxu0 %v89
  %194 = vmatprep.subr.mxu0 0.0
  %195 = vmatpush1.msra.mxu0 %v90
  %196 = vmatprep.subr.mxu0 0.0
  %197 = vmatpush1.msra.mxu0 %v91
  %198 = vmatprep.subr.mxu0 0.0
  %199 = vmatpush1.msra.mxu0 %v92
  %200 = vmatprep.subr.mxu0 0.0
  %201 = vmatpush1.msra.mxu0 %v93
  %202 = vmatprep.subr.mxu0 0.0
  %203 = vmatpush1.msra.mxu0 %v94
  %204 = vmatprep.mubr.f32.mxu0 %v136
  %205 = vmatmul.mubr.f32.gmra.mrb[0].mxu0 %v61
  %v206 = vpop.f32.mrb[0].mxu0
  %v207 = vadd.f32 %v132, %v206
  %v208 = vpop.f32.mrb[0].mxu0
  %209 = vdwg.mxu0
  %210 = vmatprep.subr.mxu0 0.0
  %211 = vmatpush1.msra.mxu0 %v95
  %212 = vmatprep.subr.mxu0 0.0
  %213 = vmatpush1.msra.mxu0 %v96
  %214 = vmatprep.subr.mxu0 0.0
  %215 = vmatpush1.msra.mxu0 %v97
  %216 = vmatprep.subr.mxu0 0.0
  %217 = vmatpush1.msra.mxu0 %v98
  %218 = vmatprep.subr.mxu0 0.0
  %219 = vmatpush1.msra.mxu0 %v99
  %220 = vmatprep.subr.mxu0 0.0
  %221 = vmatpush1.msra.mxu0 %v100
  %222 = vmatprep.subr.mxu0 0.0
  %223 = vmatpush1.msra.mxu0 %v101
  %224 = vmatprep.subr.mxu0 0.0
  %225 = vmatpush1.msra.mxu0 %v102
  %226 = vmatprep.subr.mxu0 0.0
  %227 = vmatpush1.msra.mxu0 %v103
  %228 = vmatprep.subr.mxu0 0.0
  %229 = vmatpush1.msra.mxu0 %v104
  %230 = vmatprep.subr.mxu0 0.0
  %231 = vmatpush1.msra.mxu0 %v105
  %232 = vmatprep.subr.mxu0 0.0
  %233 = vmatpush1.msra.mxu0 %v106
  %234 = vmatprep.subr.mxu0 0.0
  %235 = vmatpush1.msra.mxu0 %v107
  %236 = vmatprep.subr.mxu0 0.0
  %237 = vmatpush1.msra.mxu0 %v108
  %238 = vmatprep.subr.mxu0 0.0
  %239 = vmatpush1.msra.mxu0 %v109
  %240 = vmatprep.subr.mxu0 0.0
  %241 = vmatpush1.msra.mxu0 %v110
  %242 = vmatprep.subr.mxu0 0.0
  %243 = vmatpush1.msra.mxu0 %v111
  %244 = vmatprep.subr.mxu0 0.0
  %245 = vmatpush1.msra.mxu0 %v112
  %246 = vmatprep.subr.mxu0 0.0
  %247 = vmatpush1.msra.mxu0 %v113
  %248 = vmatprep.subr.mxu0 0.0
  %249 = vmatpush1.msra.mxu0 %v114
  %250 = vmatprep.subr.mxu0 0.0
  %251 = vmatpush1.msra.mxu0 %v115
  %252 = vmatprep.subr.mxu0 0.0
  %253 = vmatpush1.msra.mxu0 %v116
  %254 = vmatprep.subr.mxu0 0.0
  %255 = vmatpush1.msra.mxu0 %v117
  %256 = vmatprep.subr.mxu0 0.0
  %257 = vmatpush1.msra.mxu0 %v118
  %258 = vmatprep.subr.mxu0 0.0
  %259 = vmatpush1.msra.mxu0 %v119
  %260 = vmatprep.subr.mxu0 0.0
  %261 = vmatpush1.msra.mxu0 %v120
  %262 = vmatprep.subr.mxu0 0.0
  %263 = vmatpush1.msra.mxu0 %v121
  %264 = vmatprep.subr.mxu0 0.0
  %265 = vmatpush1.msra.mxu0 %v122
  %266 = vmatprep.subr.mxu0 0.0
  %267 = vmatpush1.msra.mxu0 %v123
  %268 = vmatprep.subr.mxu0 0.0
  %269 = vmatpush1.msra.mxu0 %v124
  %270 = vmatprep.subr.mxu0 0.0
  %271 = vmatpush1.msra.mxu0 %v125
  %272 = vmatprep.subr.mxu0 0.0
  %273 = vmatpush1.msra.mxu0 %v126
  %274 = vmatprep.mubr.f32.mxu0 %v137
  %275 = vmatmul.mubr.f32.gmra.mrb[0].mxu0 %v62
  %v276 = vpop.f32.mrb[0].mxu0
  %v277 = vadd.f32 %v207, %v276
  %v278 = vpop.f32.mrb[0].mxu0
  %279 = vdwg.mxu0
  %v280 = vmax.f32 %v277, 0.0
  %v282 = vrot.slane %v280, 2
  %v284 = vadd.f32 %v280, %v282
  %v285 = vld [vmem:[%s0] sm:$0x3]
  %v286 = vld [vmem:[%s1] sm:$0x3]
  %v287 = vld [vmem:[%s2] sm:$0xff]
  %v288 = vld [vmem:[%s2 + $0x8] sm:$0xff]
  %v289 = vld [vmem:[%s2 + $0x10] sm:$0xff]
  %v290 = vld [vmem:[%s2 + $0x18] sm:$0xff]
  %v291 = vld [vmem:[%s2 + $0x20] sm:$0xff]
  %v292 = vld [vmem:[%s2 + $0x28] sm:$0xff]
  %v293 = vld [vmem:[%s2 + $0x30] sm:$0xff]
  %v294 = vld [vmem:[%s2 + $0x38] sm:$0xff]
  %v295 = vld [vmem:[%s2 + $0x40] sm:$0xff]
  %v296 = vld [vmem:[%s2 + $0x48] sm:$0xff]
  %v297 = vld [vmem:[%s2 + $0x50] sm:$0xff]
  %v298 = vld [vmem:[%s2 + $0x58] sm:$0xff]
  %v299 = vld [vmem:[%s2 + $0x60] sm:$0xff]
  %v300 = vld [vmem:[%s2 + $0x68] sm:$0xff]
  %v301 = vld [vmem:[%s2 + $0x70] sm:$0xff]
  %v302 = vld [vmem:[%s2 + $0x78] sm:$0xff]
  %v303 = vld [vmem:[%s3] sm:$0x3]
  %v304 = vlaneseq
  %v305 = vshrl.u32 %v304, 7
  %v306 = vsub.s32 0, %v305
  %v307 = vrot.slane %v285, %v306
  %309 = vbcast.lane.b32.xlu0 %v307, 256
  %v310 = vpop.permute.xlu0 %309
  %v311 = vlaneseq
  %v312 = vshrl.u32 %v311, 7
  %v313 = vsub.s32 1, %v312
  %v314 = vrot.slane %v285, %v313
  %316 = vbcast.lane.b32.xlu0 %v314, 256
  %v317 = vpop.permute.xlu0 %316
  %v319 = vlaneseq
  %v320 = vshrl.u32 %v319, 7
  %v321 = vsub.s32 0, %v320
  %v322 = vrot.slane %v286, %v321
  %v323 = vlaneseq
  %v324 = vshrl.u32 %v323, 7
  %v325 = vsub.s32 1, %v324
  %v326 = vrot.slane %v286, %v325
  %v329 = vmul.f32 %v310, %v322
  %v330 = vmul.f32 %v310, %v326
  %v331 = vmul.f32 %v317, %v322
  %v332 = vmul.f32 %v317, %v326
  %vm333 = vcmask 523264
  %v335 = vsel %vm333, 0.0, 0
  %337 = vmatprep.subr.mxu0 %v288
  %338 = vmatpush1.msra.mxu0 %v287
  %339 = vmatprep.subr.mxu0 %v290
  %340 = vmatpush1.msra.mxu0 %v289
  %341 = vmatprep.subr.mxu0 %v292
  %342 = vmatpush1.msra.mxu0 %v291
  %343 = vmatprep.subr.mxu0 %v294
  %344 = vmatpush1.msra.mxu0 %v293
  %345 = vmatprep.subr.mxu0 %v296
  %346 = vmatpush1.msra.mxu0 %v295
  %347 = vmatprep.subr.mxu0 %v298
  %348 = vmatpush1.msra.mxu0 %v297
  %349 = vmatprep.subr.mxu0 %v300
  %350 = vmatpush1.msra.mxu0 %v299
  %351 = vmatprep.subr.mxu0 %v302
  %352 = vmatpush1.msra.mxu0 %v301
  %353 = vmatprep.subr.mxu0 0.0
  %354 = vmatpush1.msra.mxu0 0.0
  %355 = vmatprep.subr.mxu0 0.0
  %356 = vmatpush1.msra.mxu0 0.0
  %357 = vmatprep.subr.mxu0 0.0
  %358 = vmatpush1.msra.mxu0 0.0
  %359 = vmatprep.subr.mxu0 0.0
  %360 = vmatpush1.msra.mxu0 0.0
  %361 = vmatprep.subr.mxu0 0.0
  %362 = vmatpush1.msra.mxu0 0.0
  %363 = vmatprep.subr.mxu0 0.0
  %364 = vmatpush1.msra.mxu0 0.0
  %365 = vmatprep.subr.mxu0 0.0
  %366 = vmatpush1.msra.mxu0 0.0
  %367 = vmatprep.subr.mxu0 0.0
  %368 = vmatpush1.msra.mxu0 0.0
  %369 = vmatprep.subr.mxu0 0.0
  %370 = vmatpush1.msra.mxu0 0.0
  %371 = vmatprep.subr.mxu0 0.0
  %372 = vmatpush1.msra.mxu0 0.0
  %373 = vmatprep.subr.mxu0 0.0
  %374 = vmatpush1.msra.mxu0 0.0
  %375 = vmatprep.subr.mxu0 0.0
  %376 = vmatpush1.msra.mxu0 0.0
  %377 = vmatprep.subr.mxu0 0.0
  %378 = vmatpush1.msra.mxu0 0.0
  %379 = vmatprep.subr.mxu0 0.0
  %380 = vmatpush1.msra.mxu0 0.0
  %381 = vmatprep.subr.mxu0 0.0
  %382 = vmatpush1.msra.mxu0 0.0
  %383 = vmatprep.subr.mxu0 0.0
  %384 = vmatpush1.msra.mxu0 0.0
  %385 = vmatprep.subr.mxu0 0.0
  %386 = vmatpush1.msra.mxu0 0.0
  %387 = vmatprep.subr.mxu0 0.0
  %388 = vmatpush1.msra.mxu0 0.0
  %389 = vmatprep.subr.mxu0 0.0
  %390 = vmatpush1.msra.mxu0 0.0
  %391 = vmatprep.subr.mxu0 0.0
  %392 = vmatpush1.msra.mxu0 0.0
  %393 = vmatprep.subr.mxu0 0.0
  %394 = vmatpush1.msra.mxu0 0.0
  %395 = vmatprep.subr.mxu0 0.0
  %396 = vmatpush1.msra.mxu0 0.0
  %397 = vmatprep.subr.mxu0 0.0
  %398 = vmatpush1.msra.mxu0 0.0
  %399 = vmatprep.subr.mxu0 0.0
  %400 = vmatpush1.msra.mxu0 0.0
  %401 = vmatprep.mubr.f32.mxu0 0.0
  %402 = vmatmul.mubr.f32.gmra.mrb[0].mxu0 %v335
  %v403 = vpop.f32.mrb[0].mxu0
  %v404 = vadd.f32 0.0, %v403
  %v405 = vpop.f32.mrb[0].mxu0
  %v406 = vadd.f32 0.0, %v405
  %407 = vdwg.mxu0
  %v410 = vrot.slane %v404, 1
  %v411 = vrot.slane %v406, 1
  %v416 = vadd.f32 %v329, %v404
  %v417 = vadd.f32 %v330, %v406
  %v418 = vadd.f32 %v331, %v410
  %v419 = vadd.f32 %v332, %v411
  %v421 = vlaneseq
  %v422 = vshrl.u32 %v421, 7
  %v423 = vsub.s32 0, %v422
  %v424 = vrot.slane %v303, %v423
  %v425 = vlaneseq
  %v426 = vshrl.u32 %v425, 7
  %v427 = vsub.s32 1, %v426
  %v428 = vrot.slane %v303, %v427
  %v431 = vadd.f32 %v416, %v424
  %v432 = vadd.f32 %v417, %v428
  %v433 = vadd.f32 %v418, %v424
  %v434 = vadd.f32 %v419, %v428
  %v435 = vxor.u32 %v431, 2147483648
  %v436 = vxor.u32 %v433, 2147483648
  %v437 = vmul.f32 %v435, 1.442695
  %v438 = vpow.pop %v437
  %v439 = vmul.f32 %v436, 1.442695
  %v440 = vpow.pop %v439
  %v441 = vadd.f32 %v438, 1.0
  %v442 = vadd.f32 %v440, 1.0
  %v443 = vrcp.pop %v441
  %v444 = vmul.f32 1.0, %v443
  %v445 = vrcp.pop %v442
  %v446 = vmul.f32 1.0, %v445
  %v447 = vtanh.pop %v432
  %v448 = vtanh.pop %v434
  %v449 = vxor.u32 %v432, 2147483648
  %v450 = vxor.u32 %v434, 2147483648
  %v451 = vmul.f32 %v449, 1.442695
  %v452 = vpow.pop %v451
  %v453 = vmul.f32 %v450, 1.442695
  %v454 = vpow.pop %v453
  %v455 = vadd.f32 %v452, 1.0
  %v456 = vadd.f32 %v454, 1.0
  %v457 = vrcp.pop %v455
  %v458 = vmul.f32 1.0, %v457
  %v459 = vrcp.pop %v456
  %v460 = vmul.f32 1.0, %v459
  %v461 = vmul.f32 %v444, 0.0
  %v462 = vmul.f32 %v446, 0.0
  %v463 = vmul.f32 %v444, %v447
  %v464 = vmul.f32 %v446, %v448
  %467 = vrot.lane.b32.xlu0 %v463, 64
  %v468 = vpop.permute.xlu0 %467
  %469 = vrot.lane.b32.xlu0 %v464, 64
  %v470 = vpop.permute.xlu0 %469
  %v473 = vadd.f32 %v461, %v468
  %v474 = vadd.f32 %v462, %v470
  %v475 = vtanh.pop %v473
  %v476 = vtanh.pop %v474
  %v477 = vmul.f32 %v458, %v475
  %v478 = vmul.f32 %v460, %v476
  %v481 = vrot.slane %v478, 7
  %vm482 = vcmask 1041409
  %v483 = vsel %vm482, %v481, %v477
  %484 = vrot.lane.b32.xlu0 %v483, 64
  %v485 = vpop.permute.xlu0 %484
  %v486 = vsel %vm333, %v485, 0
  %488 = vmatprep.subr.mxu0 %v288
  %489 = vmatpush1.msra.mxu0 %v287
  %490 = vmatprep.subr.mxu0 %v290
  %491 = vmatpush1.msra.mxu0 %v289
  %492 = vmatprep.subr.mxu0 %v292
  %493 = vmatpush1.msra.mxu0 %v291
  %494 = vmatprep.subr.mxu0 %v294
  %495 = vmatpush1.msra.mxu0 %v293
  %496 = vmatprep.subr.mxu0 %v296
  %497 = vmatpush1.msra.mxu0 %v295
  %498 = vmatprep.subr.mxu0 %v298
  %499 = vmatpush1.msra.mxu0 %v297
  %500 = vmatprep.subr.mxu0 %v300
  %501 = vmatpush1.msra.mxu0 %v299
  %502 = vmatprep.subr.mxu0 %v302
  %503 = vmatpush1.msra.mxu0 %v301
  %504 = vmatprep.subr.mxu0 0.0
  %505 = vmatpush1.msra.mxu0 0.0
  %506 = vmatprep.subr.mxu0 0.0
  %507 = vmatpush1.msra.mxu0 0.0
  %508 = vmatprep.subr.mxu0 0.0
  %509 = vmatpush1.msra.mxu0 0.0
  %510 = vmatprep.subr.mxu0 0.0
  %511 = vmatpush1.msra.mxu0 0.0
  %512 = vmatprep.subr.mxu0 0.0
  %513 = vmatpush1.msra.mxu0 0.0
  %514 = vmatprep.subr.mxu0 0.0
  %515 = vmatpush1.msra.mxu0 0.0
  %516 = vmatprep.subr.mxu0 0.0
  %517 = vmatpush1.msra.mxu0 0.0
  %518 = vmatprep.subr.mxu0 0.0
  %519 = vmatpush1.msra.mxu0 0.0
  %520 = vmatprep.subr.mxu0 0.0
  %521 = vmatpush1.msra.mxu0 0.0
  %522 = vmatprep.subr.mxu0 0.0
  %523 = vmatpush1.msra.mxu0 0.0
  %524 = vmatprep.subr.mxu0 0.0
  %525 = vmatpush1.msra.mxu0 0.0
  %526 = vmatprep.subr.mxu0 0.0
  %527 = vmatpush1.msra.mxu0 0.0
  %528 = vmatprep.subr.mxu0 0.0
  %529 = vmatpush1.msra.mxu0 0.0
  %530 = vmatprep.subr.mxu0 0.0
  %531 = vmatpush1.msra.mxu0 0.0
  %532 = vmatprep.subr.mxu0 0.0
  %533 = vmatpush1.msra.mxu0 0.0
  %534 = vmatprep.subr.mxu0 0.0
  %535 = vmatpush1.msra.mxu0 0.0
  %536 = vmatprep.subr.mxu0 0.0
  %537 = vmatpush1.msra.mxu0 0.0
  %538 = vmatprep.subr.mxu0 0.0
  %539 = vmatpush1.msra.mxu0 0.0
  %540 = vmatprep.subr.mxu0 0.0
  %541 = vmatpush1.msra.mxu0 0.0
  %542 = vmatprep.subr.mxu0 0.0
  %543 = vmatpush1.msra.mxu0 0.0
  %544 = vmatprep.subr.mxu0 0.0
  %545 = vmatpush1.msra.mxu0 0.0
  %546 = vmatprep.subr.mxu0 0.0
  %547 = vmatpush1.msra.mxu0 0.0
  %548 = vmatprep.subr.mxu0 0.0
  %549 = vmatpush1.msra.mxu0 0.0
  %550 = vmatprep.subr.mxu0 0.0
  %551 = vmatpush1.msra.mxu0 0.0
  %552 = vmatprep.mubr.f32.mxu0 0.0
  %553 = vmatmul.mubr.f32.gmra.mrb[0].mxu0 %v486
  %v554 = vpop.f32.mrb[0].mxu0
  %v555 = vadd.f32 0.0, %v554
  %v556 = vpop.f32.mrb[0].mxu0
  %v557 = vadd.f32 0.0, %v556
  %558 = vdwg.mxu0
  %v561 = vrot.slane %v555, 7
  %v562 = vrot.slane %v557, 7
  %v567 = vadd.f32 %v329, %v561
  %v568 = vadd.f32 %v330, %v562
  %v569 = vadd.f32 %v331, %v555
  %v570 = vadd.f32 %v332, %v557
  %v571 = vadd.f32 %v567, %v424
  %v572 = vadd.f32 %v568, %v428
  %v573 = vadd.f32 %v569, %v424
  %v574 = vadd.f32 %v570, %v428
  %v575 = vxor.u32 %v571, 2147483648
  %v576 = vxor.u32 %v573, 2147483648
  %v577 = vmul.f32 %v575, 1.442695
  %v578 = vpow.pop %v577
  %v579 = vmul.f32 %v576, 1.442695
  %v580 = vpow.pop %v579
  %v581 = vadd.f32 %v578, 1.0
  %v582 = vadd.f32 %v580, 1.0
  %v583 = vrcp.pop %v581
  %v584 = vmul.f32 1.0, %v583
  %v585 = vrcp.pop %v582
  %v586 = vmul.f32 1.0, %v585
  %v587 = vtanh.pop %v572
  %v588 = vtanh.pop %v574
  %v589 = vxor.u32 %v572, 2147483648
  %v590 = vxor.u32 %v574, 2147483648
  %v591 = vmul.f32 %v589, 1.442695
  %v592 = vpow.pop %v591
  %v593 = vmul.f32 %v590, 1.442695
  %v594 = vpow.pop %v593
  %v595 = vadd.f32 %v592, 1.0
  %v596 = vadd.f32 %v594, 1.0
  %v597 = vrcp.pop %v595
  %v598 = vmul.f32 1.0, %v597
  %v599 = vrcp.pop %v596
  %v600 = vmul.f32 1.0, %v599
  %v603 = vrot.slane %v473, 7
  %v604 = vrot.slane %v474, 7
  %v607 = vmul.f32 %v584, %v603
  %v608 = vmul.f32 %v586, %v604
  %v609 = vmul.f32 %v584, %v587
  %v610 = vmul.f32 %v586, %v588
  %613 = vrot.lane.b32.xlu0 %v609, 64
  %v614 = vpop.permute.xlu0 %613
  %615 = vrot.lane.b32.xlu0 %v610, 64
  %v616 = vpop.permute.xlu0 %615
  %v619 = vadd.f32 %v607, %v614
  %v620 = vadd.f32 %v608, %v616
  %v621 = vtanh.pop %v619
  %v622 = vtanh.pop %v620
  %v623 = vmul.f32 %v598, %v621
  %v624 = vmul.f32 %v600, %v622
  %v627 = vrot.slane %v623, 1
  %v628 = vsel %vm482, %v624, %v627
  %629 = vrot.lane.b32.xlu0 %v628, 64
  %v630 = vpop.permute.xlu0 %629
  %v631 = vsel %vm333, %v630, 0
  %633 = vmatprep.subr.mxu0 %v288
  %634 = vmatpush1.msra.mxu0 %v287
  %635 = vmatprep.subr.mxu0 %v290
  %636 = vmatpush1.msra.mxu0 %v289
  %637 = vmatprep.subr.mxu0 %v292
  %638 = vmatpush1.msra.mxu0 %v291
  %639 = vmatprep.subr.mxu0 %v294
  %640 = vmatpush1.msra.mxu0 %v293
  %641 = vmatprep.subr.mxu0 %v296
  %642 = vmatpush1.msra.mxu0 %v295
  %643 = vmatprep.subr.mxu0 %v298
  %644 = vmatpush1.msra.mxu0 %v297
  %645 = vmatprep.subr.mxu0 %v300
  %646 = vmatpush1.msra.mxu0 %v299
  %647 = vmatprep.subr.mxu0 %v302
  %648 = vmatpush1.msra.mxu0 %v301
  %649 = vmatprep.subr.mxu0 0.0
  %650 = vmatpush1.msra.mxu0 0.0
  %651 = vmatprep.subr.mxu0 0.0
  %652 = vmatpush1.msra.mxu0 0.0
  %653 = vmatprep.subr.mxu0 0.0
  %654 = vmatpush1.msra.mxu0 0.0
  %655 = vmatprep.subr.mxu0 0.0
  %656 = vmatpush1.msra.mxu0 0.0
  %657 = vmatprep.subr.mxu0 0.0
  %658 = vmatpush1.msra.mxu0 0.0
  %659 = vmatprep.subr.mxu0 0.0
  %660 = vmatpush1.msra.mxu0 0.0
  %661 = vmatprep.subr.mxu0 0.0
  %662 = vmatpush1.msra.mxu0 0.0
  %663 = vmatprep.subr.mxu0 0.0
  %664 = vmatpush1.msra.mxu0 0.0
  %665 = vmatprep.subr.mxu0 0.0
  %666 = vmatpush1.msra.mxu0 0.0
  %667 = vmatprep.subr.mxu0 0.0
  %668 = vmatpush1.msra.mxu0 0.0
  %669 = vmatprep.subr.mxu0 0.0
  %670 = vmatpush1.msra.mxu0 0.0
  %671 = vmatprep.subr.mxu0 0.0
  %672 = vmatpush1.msra.mxu0 0.0
  %673 = vmatprep.subr.mxu0 0.0
  %674 = vmatpush1.msra.mxu0 0.0
  %675 = vmatprep.subr.mxu0 0.0
  %676 = vmatpush1.msra.mxu0 0.0
  %677 = vmatprep.subr.mxu0 0.0
  %678 = vmatpush1.msra.mxu0 0.0
  %679 = vmatprep.subr.mxu0 0.0
  %680 = vmatpush1.msra.mxu0 0.0
  %681 = vmatprep.subr.mxu0 0.0
  %682 = vmatpush1.msra.mxu0 0.0
  %683 = vmatprep.subr.mxu0 0.0
  %684 = vmatpush1.msra.mxu0 0.0
  %685 = vmatprep.subr.mxu0 0.0
  %686 = vmatpush1.msra.mxu0 0.0
  %687 = vmatprep.subr.mxu0 0.0
  %688 = vmatpush1.msra.mxu0 0.0
  %689 = vmatprep.subr.mxu0 0.0
  %690 = vmatpush1.msra.mxu0 0.0
  %691 = vmatprep.subr.mxu0 0.0
  %692 = vmatpush1.msra.mxu0 0.0
  %693 = vmatprep.subr.mxu0 0.0
  %694 = vmatpush1.msra.mxu0 0.0
  %695 = vmatprep.subr.mxu0 0.0
  %696 = vmatpush1.msra.mxu0 0.0
  %697 = vmatprep.mubr.f32.mxu0 0.0
  %698 = vmatmul.mubr.f32.gmra.mrb[0].mxu0 %v631
  %v699 = vpop.f32.mrb[0].mxu0
  %v700 = vadd.f32 0.0, %v699
  %v701 = vpop.f32.mrb[0].mxu0
  %v702 = vadd.f32 0.0, %v701
  %703 = vdwg.mxu0
  %v706 = vrot.slane %v700, 6
  %v707 = vrot.slane %v702, 6
  %v708 = vrot.slane %v700, 7
  %v709 = vrot.slane %v702, 7
  %v714 = vadd.f32 %v329, %v706
  %v715 = vadd.f32 %v330, %v707
  %v716 = vadd.f32 %v331, %v708
  %v717 = vadd.f32 %v332, %v709
  %v718 = vadd.f32 %v714, %v424
  %v719 = vadd.f32 %v715, %v428
  %v720 = vadd.f32 %v716, %v424
  %v721 = vadd.f32 %v717, %v428
  %v722 = vxor.u32 %v718, 2147483648
  %v723 = vxor.u32 %v720, 2147483648
  %v724 = vmul.f32 %v722, 1.442695
  %v725 = vpow.pop %v724
  %v726 = vmul.f32 %v723, 1.442695
  %v727 = vpow.pop %v726
  %v728 = vadd.f32 %v725, 1.0
  %v729 = vadd.f32 %v727, 1.0
  %v730 = vrcp.pop %v728
  %v731 = vmul.f32 1.0, %v730
  %v732 = vrcp.pop %v729
  %v733 = vmul.f32 1.0, %v732
  %v734 = vtanh.pop %v719
  %v735 = vtanh.pop %v721
  %v736 = vxor.u32 %v719, 2147483648
  %v737 = vxor.u32 %v721, 2147483648
  %v738 = vmul.f32 %v736, 1.442695
  %v739 = vpow.pop %v738
  %v740 = vmul.f32 %v737, 1.442695
  %v741 = vpow.pop %v740
  %v742 = vadd.f32 %v739, 1.0
  %v743 = vadd.f32 %v741, 1.0
  %v744 = vrcp.pop %v742
  %v745 = vmul.f32 1.0, %v744
  %v746 = vrcp.pop %v743
  %v747 = vmul.f32 1.0, %v746
  %v750 = vrot.slane %v619, 7
  %v751 = vrot.slane %v620, 7
  %v754 = vmul.f32 %v731, %v750
  %v755 = vmul.f32 %v733, %v751
  %v756 = vmul.f32 %v731, %v734
  %v757 = vmul.f32 %v733, %v735
  %760 = vrot.lane.b32.xlu0 %v756, 64
  %v761 = vpop.permute.xlu0 %760
  %762 = vrot.lane.b32.xlu0 %v757, 64
  %v763 = vpop.permute.xlu0 %762
  %v766 = vadd.f32 %v754, %v761
  %v767 = vadd.f32 %v755, %v763
  %v768 = vtanh.pop %v766
  %v769 = vtanh.pop %v767
  %v770 = vmul.f32 %v745, %v768
  %v771 = vmul.f32 %v747, %v769
  %v774 = vrot.slane %v770, 2
  %v775 = vrot.slane %v771, 1
  %v776 = vsel %vm482, %v775, %v774
  %777 = vrot.lane.b32.xlu0 %v776, 64
  %v778 = vpop.permute.xlu0 %777
  %v779 = vsel %vm333, %v778, 0
  %781 = vmatprep.subr.mxu0 %v288
  %782 = vmatpush1.msra.mxu0 %v287
  %783 = vmatprep.subr.mxu0 %v290
  %784 = vmatpush1.msra.mxu0 %v289
  %785 = vmatprep.subr.mxu0 %v292
  %786 = vmatpush1.msra.mxu0 %v291
  %787 = vmatprep.subr.mxu0 %v294
  %788 = vmatpush1.msra.mxu0 %v293
  %789 = vmatprep.subr.mxu0 %v296
  %790 = vmatpush1.msra.mxu0 %v295
  %791 = vmatprep.subr.mxu0 %v298
  %792 = vmatpush1.msra.mxu0 %v297
  %793 = vmatprep.subr.mxu0 %v300
  %794 = vmatpush1.msra.mxu0 %v299
  %795 = vmatprep.subr.mxu0 %v302
  %796 = vmatpush1.msra.mxu0 %v301
  %797 = vmatprep.subr.mxu0 0.0
  %798 = vmatpush1.msra.mxu0 0.0
  %799 = vmatprep.subr.mxu0 0.0
  %800 = vmatpush1.msra.mxu0 0.0
  %801 = vmatprep.subr.mxu0 0.0
  %802 = vmatpush1.msra.mxu0 0.0
  %803 = vmatprep.subr.mxu0 0.0
  %804 = vmatpush1.msra.mxu0 0.0
  %805 = vmatprep.subr.mxu0 0.0
  %806 = vmatpush1.msra.mxu0 0.0
  %807 = vmatprep.subr.mxu0 0.0
  %808 = vmatpush1.msra.mxu0 0.0
  %809 = vmatprep.subr.mxu0 0.0
  %810 = vmatpush1.msra.mxu0 0.0
  %811 = vmatprep.subr.mxu0 0.0
  %812 = vmatpush1.msra.mxu0 0.0
  %813 = vmatprep.subr.mxu0 0.0
  %814 = vmatpush1.msra.mxu0 0.0
  %815 = vmatprep.subr.mxu0 0.0
  %816 = vmatpush1.msra.mxu0 0.0
  %817 = vmatprep.subr.mxu0 0.0
  %818 = vmatpush1.msra.mxu0 0.0
  %819 = vmatprep.subr.mxu0 0.0
  %820 = vmatpush1.msra.mxu0 0.0
  %821 = vmatprep.subr.mxu0 0.0
  %822 = vmatpush1.msra.mxu0 0.0
  %823 = vmatprep.subr.mxu0 0.0
  %824 = vmatpush1.msra.mxu0 0.0
  %825 = vmatprep.subr.mxu0 0.0
  %826 = vmatpush1.msra.mxu0 0.0
  %827 = vmatprep.subr.mxu0 0.0
  %828 = vmatpush1.msra.mxu0 0.0
  %829 = vmatprep.subr.mxu0 0.0
  %830 = vmatpush1.msra.mxu0 0.0
  %831 = vmatprep.subr.mxu0 0.0
  %832 = vmatpush1.msra.mxu0 0.0
  %833 = vmatprep.subr.mxu0 0.0
  %834 = vmatpush1.msra.mxu0 0.0
  %835 = vmatprep.subr.mxu0 0.0
  %836 = vmatpush1.msra.mxu0 0.0
  %837 = vmatprep.subr.mxu0 0.0
  %838 = vmatpush1.msra.mxu0 0.0
  %839 = vmatprep.subr.mxu0 0.0
  %840 = vmatpush1.msra.mxu0 0.0
  %841 = vmatprep.subr.mxu0 0.0
  %842 = vmatpush1.msra.mxu0 0.0
  %843 = vmatprep.subr.mxu0 0.0
  %844 = vmatpush1.msra.mxu0 0.0
  %845 = vmatprep.mubr.f32.mxu0 0.0
  %846 = vmatmul.mubr.f32.gmra.mrb[0].mxu0 %v779
  %v847 = vpop.f32.mrb[0].mxu0
  %v848 = vadd.f32 0.0, %v847
  %v849 = vpop.f32.mrb[0].mxu0
  %v850 = vadd.f32 0.0, %v849
  %851 = vdwg.mxu0
  %v854 = vrot.slane %v848, 5
  %v855 = vrot.slane %v850, 5
  %v856 = vrot.slane %v848, 6
  %v857 = vrot.slane %v850, 6
  %v862 = vadd.f32 %v329, %v854
  %v863 = vadd.f32 %v330, %v855
  %v864 = vadd.f32 %v331, %v856
  %v865 = vadd.f32 %v332, %v857
  %v866 = vadd.f32 %v862, %v424
  %v867 = vadd.f32 %v863, %v428
  %v868 = vadd.f32 %v864, %v424
  %v869 = vadd.f32 %v865, %v428
  %v870 = vxor.u32 %v866, 2147483648
  %v871 = vxor.u32 %v868, 2147483648
  %v872 = vmul.f32 %v870, 1.442695
  %v873 = vpow.pop %v872
  %v874 = vmul.f32 %v871, 1.442695
  %v875 = vpow.pop %v874
  %v876 = vadd.f32 %v873, 1.0
  %v877 = vadd.f32 %v875, 1.0
  %v878 = vrcp.pop %v876
  %v879 = vmul.f32 1.0, %v878
  %v880 = vrcp.pop %v877
  %v881 = vmul.f32 1.0, %v880
  %v882 = vtanh.pop %v867
  %v883 = vtanh.pop %v869
  %v884 = vxor.u32 %v867, 2147483648
  %v885 = vxor.u32 %v869, 2147483648
  %v886 = vmul.f32 %v884, 1.442695
  %v887 = vpow.pop %v886
  %v888 = vmul.f32 %v885, 1.442695
  %v889 = vpow.pop %v888
  %v890 = vadd.f32 %v887, 1.0
  %v891 = vadd.f32 %v889, 1.0
  %v892 = vrcp.pop %v890
  %v893 = vmul.f32 1.0, %v892
  %v894 = vrcp.pop %v891
  %v895 = vmul.f32 1.0, %v894
  %v898 = vrot.slane %v766, 7
  %v899 = vrot.slane %v767, 7
  %v902 = vmul.f32 %v879, %v898
  %v903 = vmul.f32 %v881, %v899
  %v904 = vmul.f32 %v879, %v882
  %v905 = vmul.f32 %v881, %v883
  %908 = vrot.lane.b32.xlu0 %v904, 64
  %v909 = vpop.permute.xlu0 %908
  %910 = vrot.lane.b32.xlu0 %v905, 64
  %v911 = vpop.permute.xlu0 %910
  %v914 = vadd.f32 %v902, %v909
  %v915 = vadd.f32 %v903, %v911
  %v916 = vtanh.pop %v914
  %v917 = vtanh.pop %v915
  %v918 = vmul.f32 %v893, %v916
  %v919 = vmul.f32 %v895, %v917
  %v922 = vrot.slane %v918, 3
  %v923 = vrot.slane %v919, 2
  %v924 = vsel %vm482, %v923, %v922
  %925 = vrot.lane.b32.xlu0 %v924, 64
  %v926 = vpop.permute.xlu0 %925
  %v927 = vsel %vm333, %v926, 0
  %929 = vmatprep.subr.mxu0 %v288
  %930 = vmatpush1.msra.mxu0 %v287
  %931 = vmatprep.subr.mxu0 %v290
  %932 = vmatpush1.msra.mxu0 %v289
  %933 = vmatprep.subr.mxu0 %v292
  %934 = vmatpush1.msra.mxu0 %v291
  %935 = vmatprep.subr.mxu0 %v294
  %936 = vmatpush1.msra.mxu0 %v293
  %937 = vmatprep.subr.mxu0 %v296
  %938 = vmatpush1.msra.mxu0 %v295
  %939 = vmatprep.subr.mxu0 %v298
  %940 = vmatpush1.msra.mxu0 %v297
  %941 = vmatprep.subr.mxu0 %v300
  %942 = vmatpush1.msra.mxu0 %v299
  %943 = vmatprep.subr.mxu0 %v302
  %944 = vmatpush1.msra.mxu0 %v301
  %945 = vmatprep.subr.mxu0 0.0
  %946 = vmatpush1.msra.mxu0 0.0
  %947 = vmatprep.subr.mxu0 0.0
  %948 = vmatpush1.msra.mxu0 0.0
  %949 = vmatprep.subr.mxu0 0.0
  %950 = vmatpush1.msra.mxu0 0.0
  %951 = vmatprep.subr.mxu0 0.0
  %952 = vmatpush1.msra.mxu0 0.0
  %953 = vmatprep.subr.mxu0 0.0
  %954 = vmatpush1.msra.mxu0 0.0
  %955 = vmatprep.subr.mxu0 0.0
  %956 = vmatpush1.msra.mxu0 0.0
  %957 = vmatprep.subr.mxu0 0.0
  %958 = vmatpush1.msra.mxu0 0.0
  %959 = vmatprep.subr.mxu0 0.0
  %960 = vmatpush1.msra.mxu0 0.0
  %961 = vmatprep.subr.mxu0 0.0
  %962 = vmatpush1.msra.mxu0 0.0
  %963 = vmatprep.subr.mxu0 0.0
  %964 = vmatpush1.msra.mxu0 0.0
  %965 = vmatprep.subr.mxu0 0.0
  %966 = vmatpush1.msra.mxu0 0.0
  %967 = vmatprep.subr.mxu0 0.0
  %968 = vmatpush1.msra.mxu0 0.0
  %969 = vmatprep.subr.mxu0 0.0
  %970 = vmatpush1.msra.mxu0 0.0
  %971 = vmatprep.subr.mxu0 0.0
  %972 = vmatpush1.msra.mxu0 0.0
  %973 = vmatprep.subr.mxu0 0.0
  %974 = vmatpush1.msra.mxu0 0.0
  %975 = vmatprep.subr.mxu0 0.0
  %976 = vmatpush1.msra.mxu0 0.0
  %977 = vmatprep.subr.mxu0 0.0
  %978 = vmatpush1.msra.mxu0 0.0
  %979 = vmatprep.subr.mxu0 0.0
  %980 = vmatpush1.msra.mxu0 0.0
  %981 = vmatprep.subr.mxu0 0.0
  %982 = vmatpush1.msra.mxu0 0.0
  %983 = vmatprep.subr.mxu0 0.0
  %984 = vmatpush1.msra.mxu0 0.0
  %985 = vmatprep.subr.mxu0 0.0
  %986 = vmatpush1.msra.mxu0 0.0
  %987 = vmatprep.subr.mxu0 0.0
  %988 = vmatpush1.msra.mxu0 0.0
  %989 = vmatprep.subr.mxu0 0.0
  %990 = vmatpush1.msra.mxu0 0.0
  %991 = vmatprep.subr.mxu0 0.0
  %992 = vmatpush1.msra.mxu0 0.0
  %993 = vmatprep.mubr.f32.mxu0 0.0
  %994 = vmatmul.mubr.f32.gmra.mrb[0].mxu0 %v927
  %v995 = vpop.f32.mrb[0].mxu0
  %v996 = vadd.f32 0.0, %v995
  %v997 = vpop.f32.mrb[0].mxu0
  %v998 = vadd.f32 0.0, %v997
  %999 = vdwg.mxu0
  %v1002 = vrot.slane %v996, 4
  %v1003 = vrot.slane %v998, 4
  %v1004 = vrot.slane %v996, 5
  %v1005 = vrot.slane %v998, 5
  %v1010 = vadd.f32 %v329, %v1002
  %v1011 = vadd.f32 %v330, %v1003
  %v1012 = vadd.f32 %v331, %v1004
  %v1013 = vadd.f32 %v332, %v1005
  %v1014 = vadd.f32 %v1010, %v424
  %v1015 = vadd.f32 %v1011, %v428
  %v1016 = vadd.f32 %v1012, %v424
  %v1017 = vadd.f32 %v1013, %v428
  %v1018 = vxor.u32 %v1014, 2147483648
  %v1019 = vxor.u32 %v1016, 2147483648
  %v1020 = vmul.f32 %v1018, 1.442695
  %v1021 = vpow.pop %v1020
  %v1022 = vmul.f32 %v1019, 1.442695
  %v1023 = vpow.pop %v1022
  %v1024 = vadd.f32 %v1021, 1.0
  %v1025 = vadd.f32 %v1023, 1.0
  %v1026 = vrcp.pop %v1024
  %v1027 = vmul.f32 1.0, %v1026
  %v1028 = vrcp.pop %v1025
  %v1029 = vmul.f32 1.0, %v1028
  %v1030 = vtanh.pop %v1015
  %v1031 = vtanh.pop %v1017
  %v1032 = vxor.u32 %v1015, 2147483648
  %v1033 = vxor.u32 %v1017, 2147483648
  %v1034 = vmul.f32 %v1032, 1.442695
  %v1035 = vpow.pop %v1034
  %v1036 = vmul.f32 %v1033, 1.442695
  %v1037 = vpow.pop %v1036
  %v1038 = vadd.f32 %v1035, 1.0
  %v1039 = vadd.f32 %v1037, 1.0
  %v1040 = vrcp.pop %v1038
  %v1041 = vmul.f32 1.0, %v1040
  %v1042 = vrcp.pop %v1039
  %v1043 = vmul.f32 1.0, %v1042
  %v1046 = vrot.slane %v914, 7
  %v1047 = vrot.slane %v915, 7
  %v1050 = vmul.f32 %v1027, %v1046
  %v1051 = vmul.f32 %v1029, %v1047
  %v1052 = vmul.f32 %v1027, %v1030
  %v1053 = vmul.f32 %v1029, %v1031
  %1056 = vrot.lane.b32.xlu0 %v1052, 64
  %v1057 = vpop.permute.xlu0 %1056
  %1058 = vrot.lane.b32.xlu0 %v1053, 64
  %v1059 = vpop.permute.xlu0 %1058
  %v1062 = vadd.f32 %v1050, %v1057
  %v1063 = vadd.f32 %v1051, %v1059
  %v1064 = vtanh.pop %v1062
  %v1065 = vtanh.pop %v1063
  %v1066 = vmul.f32 %v1041, %v1064
  %v1067 = vmul.f32 %v1043, %v1065
  %v1070 = vrot.slane %v1066, 4
  %v1071 = vrot.slane %v1067, 3
  %v1072 = vsel %vm482, %v1071, %v1070
  %1073 = vrot.lane.b32.xlu0 %v1072, 64
  %v1074 = vpop.permute.xlu0 %1073
  %v1075 = vsel %vm333, %v1074, 0
  %1077 = vmatprep.subr.mxu0 %v288
  %1078 = vmatpush1.msra.mxu0 %v287
  %1079 = vmatprep.subr.mxu0 %v290
  %1080 = vmatpush1.msra.mxu0 %v289
  %1081 = vmatprep.subr.mxu0 %v292
  %1082 = vmatpush1.msra.mxu0 %v291
  %1083 = vmatprep.subr.mxu0 %v294
  %1084 = vmatpush1.msra.mxu0 %v293
  %1085 = vmatprep.subr.mxu0 %v296
  %1086 = vmatpush1.msra.mxu0 %v295
  %1087 = vmatprep.subr.mxu0 %v298
  %1088 = vmatpush1.msra.mxu0 %v297
  %1089 = vmatprep.subr.mxu0 %v300
  %1090 = vmatpush1.msra.mxu0 %v299
  %1091 = vmatprep.subr.mxu0 %v302
  %1092 = vmatpush1.msra.mxu0 %v301
  %1093 = vmatprep.subr.mxu0 0.0
  %1094 = vmatpush1.msra.mxu0 0.0
  %1095 = vmatprep.subr.mxu0 0.0
  %1096 = vmatpush1.msra.mxu0 0.0
  %1097 = vmatprep.subr.mxu0 0.0
  %1098 = vmatpush1.msra.mxu0 0.0
  %1099 = vmatprep.subr.mxu0 0.0
  %1100 = vmatpush1.msra.mxu0 0.0
  %1101 = vmatprep.subr.mxu0 0.0
  %1102 = vmatpush1.msra.mxu0 0.0
  %1103 = vmatprep.subr.mxu0 0.0
  %1104 = vmatpush1.msra.mxu0 0.0
  %1105 = vmatprep.subr.mxu0 0.0
  %1106 = vmatpush1.msra.mxu0 0.0
  %1107 = vmatprep.subr.mxu0 0.0
  %1108 = vmatpush1.msra.mxu0 0.0
  %1109 = vmatprep.subr.mxu0 0.0
  %1110 = vmatpush1.msra.mxu0 0.0
  %1111 = vmatprep.subr.mxu0 0.0
  %1112 = vmatpush1.msra.mxu0 0.0
  %1113 = vmatprep.subr.mxu0 0.0
  %1114 = vmatpush1.msra.mxu0 0.0
  %1115 = vmatprep.subr.mxu0 0.0
  %1116 = vmatpush1.msra.mxu0 0.0
  %1117 = vmatprep.subr.mxu0 0.0
  %1118 = vmatpush1.msra.mxu0 0.0
  %1119 = vmatprep.subr.mxu0 0.0
  %1120 = vmatpush1.msra.mxu0 0.0
  %1121 = vmatprep.subr.mxu0 0.0
  %1122 = vmatpush1.msra.mxu0 0.0
  %1123 = vmatprep.subr.mxu0 0.0
  %1124 = vmatpush1.msra.mxu0 0.0
  %1125 = vmatprep.subr.mxu0 0.0
  %1126 = vmatpush1.msra.mxu0 0.0
  %1127 = vmatprep.subr.mxu0 0.0
  %1128 = vmatpush1.msra.mxu0 0.0
  %1129 = vmatprep.subr.mxu0 0.0
  %1130 = vmatpush1.msra.mxu0 0.0
  %1131 = vmatprep.subr.mxu0 0.0
  %1132 = vmatpush1.msra.mxu0 0.0
  %1133 = vmatprep.subr.mxu0 0.0
  %1134 = vmatpush1.msra.mxu0 0.0
  %1135 = vmatprep.subr.mxu0 0.0
  %1136 = vmatpush1.msra.mxu0 0.0
  %1137 = vmatprep.subr.mxu0 0.0
  %1138 = vmatpush1.msra.mxu0 0.0
  %1139 = vmatprep.subr.mxu0 0.0
  %1140 = vmatpush1.msra.mxu0 0.0
  %1141 = vmatprep.mubr.f32.mxu0 0.0
  %1142 = vmatmul.mubr.f32.gmra.mrb[0].mxu0 %v1075
  %v1143 = vpop.f32.mrb[0].mxu0
  %v1144 = vadd.f32 0.0, %v1143
  %v1145 = vpop.f32.mrb[0].mxu0
  %v1146 = vadd.f32 0.0, %v1145
  %1147 = vdwg.mxu0
  %v1150 = vrot.slane %v1144, 3
  %v1151 = vrot.slane %v1146, 3
  %v1152 = vrot.slane %v1144, 4
  %v1153 = vrot.slane %v1146, 4
  %v1158 = vadd.f32 %v329, %v1150
  %v1159 = vadd.f32 %v330, %v1151
  %v1160 = vadd.f32 %v331, %v1152
  %v1161 = vadd.f32 %v332, %v1153
  %v1162 = vadd.f32 %v1158, %v424
  %v1163 = vadd.f32 %v1159, %v428
  %v1164 = vadd.f32 %v1160, %v424
  %v1165 = vadd.f32 %v1161, %v428
  %v1166 = vxor.u32 %v1162, 2147483648
  %v1167 = vxor.u32 %v1164, 2147483648
  %v1168 = vmul.f32 %v1166, 1.442695
  %v1169 = vpow.pop %v1168
  %v1170 = vmul.f32 %v1167, 1.442695
  %v1171 = vpow.pop %v1170
  %v1172 = vadd.f32 %v1169, 1.0
  %v1173 = vadd.f32 %v1171, 1.0
  %v1174 = vrcp.pop %v1172
  %v1175 = vmul.f32 1.0, %v1174
  %v1176 = vrcp.pop %v1173
  %v1177 = vmul.f32 1.0, %v1176
  %v1178 = vtanh.pop %v1163
  %v1179 = vtanh.pop %v1165
  %v1180 = vxor.u32 %v1163, 2147483648
  %v1181 = vxor.u32 %v1165, 2147483648
  %v1182 = vmul.f32 %v1180, 1.442695
  %v1183 = vpow.pop %v1182
  %v1184 = vmul.f32 %v1181, 1.442695
  %v1185 = vpow.pop %v1184
  %v1186 = vadd.f32 %v1183, 1.0
  %v1187 = vadd.f32 %v1185, 1.0
  %v1188 = vrcp.pop %v1186
  %v1189 = vmul.f32 1.0, %v1188
  %v1190 = vrcp.pop %v1187
  %v1191 = vmul.f32 1.0, %v1190
  %v1194 = vrot.slane %v1062, 7
  %v1195 = vrot.slane %v1063, 7
  %v1198 = vmul.f32 %v1175, %v1194
  %v1199 = vmul.f32 %v1177, %v1195
  %v1200 = vmul.f32 %v1175, %v1178
  %v1201 = vmul.f32 %v1177, %v1179
  %1204 = vrot.lane.b32.xlu0 %v1200, 64
  %v1205 = vpop.permute.xlu0 %1204
  %1206 = vrot.lane.b32.xlu0 %v1201, 64
  %v1207 = vpop.permute.xlu0 %1206
  %v1210 = vadd.f32 %v1198, %v1205
  %v1211 = vadd.f32 %v1199, %v1207
  %v1212 = vtanh.pop %v1210
  %v1213 = vtanh.pop %v1211
  %v1214 = vmul.f32 %v1189, %v1212
  %v1215 = vmul.f32 %v1191, %v1213
  %v1218 = vrot.slane %v1214, 5
  %v1219 = vrot.slane %v1215, 4
  %v1220 = vsel %vm482, %v1219, %v1218
  %1221 = vrot.lane.b32.xlu0 %v1220, 64
  %v1222 = vpop.permute.xlu0 %1221
  %v1223 = vsel %vm333, %v1222, 0
  %1225 = vmatprep.subr.mxu0 %v288
  %1226 = vmatpush1.msra.mxu0 %v287
  %1227 = vmatprep.subr.mxu0 %v290
  %1228 = vmatpush1.msra.mxu0 %v289
  %1229 = vmatprep.subr.mxu0 %v292
  %1230 = vmatpush1.msra.mxu0 %v291
  %1231 = vmatprep.subr.mxu0 %v294
  %1232 = vmatpush1.msra.mxu0 %v293
  %1233 = vmatprep.subr.mxu0 %v296
  %1234 = vmatpush1.msra.mxu0 %v295
  %1235 = vmatprep.subr.mxu0 %v298
  %1236 = vmatpush1.msra.mxu0 %v297
  %1237 = vmatprep.subr.mxu0 %v300
  %1238 = vmatpush1.msra.mxu0 %v299
  %1239 = vmatprep.subr.mxu0 %v302
  %1240 = vmatpush1.msra.mxu0 %v301
  %1241 = vmatprep.subr.mxu0 0.0
  %1242 = vmatpush1.msra.mxu0 0.0
  %1243 = vmatprep.subr.mxu0 0.0
  %1244 = vmatpush1.msra.mxu0 0.0
  %1245 = vmatprep.subr.mxu0 0.0
  %1246 = vmatpush1.msra.mxu0 0.0
  %1247 = vmatprep.subr.mxu0 0.0
  %1248 = vmatpush1.msra.mxu0 0.0
  %1249 = vmatprep.subr.mxu0 0.0
  %1250 = vmatpush1.msra.mxu0 0.0
  %1251 = vmatprep.subr.mxu0 0.0
  %1252 = vmatpush1.msra.mxu0 0.0
  %1253 = vmatprep.subr.mxu0 0.0
  %1254 = vmatpush1.msra.mxu0 0.0
  %1255 = vmatprep.subr.mxu0 0.0
  %1256 = vmatpush1.msra.mxu0 0.0
  %1257 = vmatprep.subr.mxu0 0.0
  %1258 = vmatpush1.msra.mxu0 0.0
  %1259 = vmatprep.subr.mxu0 0.0
  %1260 = vmatpush1.msra.mxu0 0.0
  %1261 = vmatprep.subr.mxu0 0.0
  %1262 = vmatpush1.msra.mxu0 0.0
  %1263 = vmatprep.subr.mxu0 0.0
  %1264 = vmatpush1.msra.mxu0 0.0
  %1265 = vmatprep.subr.mxu0 0.0
  %1266 = vmatpush1.msra.mxu0 0.0
  %1267 = vmatprep.subr.mxu0 0.0
  %1268 = vmatpush1.msra.mxu0 0.0
  %1269 = vmatprep.subr.mxu0 0.0
  %1270 = vmatpush1.msra.mxu0 0.0
  %1271 = vmatprep.subr.mxu0 0.0
  %1272 = vmatpush1.msra.mxu0 0.0
  %1273 = vmatprep.subr.mxu0 0.0
  %1274 = vmatpush1.msra.mxu0 0.0
  %1275 = vmatprep.subr.mxu0 0.0
  %1276 = vmatpush1.msra.mxu0 0.0
  %1277 = vmatprep.subr.mxu0 0.0
  %1278 = vmatpush1.msra.mxu0 0.0
  %1279 = vmatprep.subr.mxu0 0.0
  %1280 = vmatpush1.msra.mxu0 0.0
  %1281 = vmatprep.subr.mxu0 0.0
  %1282 = vmatpush1.msra.mxu0 0.0
  %1283 = vmatprep.subr.mxu0 0.0
  %1284 = vmatpush1.msra.mxu0 0.0
  %1285 = vmatprep.subr.mxu0 0.0
  %1286 = vmatpush1.msra.mxu0 0.0
  %1287 = vmatprep.subr.mxu0 0.0
  %1288 = vmatpush1.msra.mxu0 0.0
  %1289 = vmatprep.mubr.f32.mxu0 0.0
  %1290 = vmatmul.mubr.f32.gmra.mrb[0].mxu0 %v1223
  %v1291 = vpop.f32.mrb[0].mxu0
  %v1292 = vadd.f32 0.0, %v1291
  %v1293 = vpop.f32.mrb[0].mxu0
  %v1294 = vadd.f32 0.0, %v1293
  %1295 = vdwg.mxu0
  %v1298 = vrot.slane %v1292, 2
  %v1299 = vrot.slane %v1294, 2
  %v1300 = vrot.slane %v1292, 3
  %v1301 = vrot.slane %v1294, 3
  %v1306 = vadd.f32 %v329, %v1298
  %v1307 = vadd.f32 %v330, %v1299
  %v1308 = vadd.f32 %v331, %v1300
  %v1309 = vadd.f32 %v332, %v1301
  %v1310 = vadd.f32 %v1306, %v424
  %v1311 = vadd.f32 %v1307, %v428
  %v1312 = vadd.f32 %v1308, %v424
  %v1313 = vadd.f32 %v1309, %v428
  %v1314 = vxor.u32 %v1310, 2147483648
  %v1315 = vxor.u32 %v1312, 2147483648
  %v1316 = vmul.f32 %v1314, 1.442695
  %v1317 = vpow.pop %v1316
  %v1318 = vmul.f32 %v1315, 1.442695
  %v1319 = vpow.pop %v1318
  %v1320 = vadd.f32 %v1317, 1.0
  %v1321 = vadd.f32 %v1319, 1.0
  %v1322 = vrcp.pop %v1320
  %v1323 = vmul.f32 1.0, %v1322
  %v1324 = vrcp.pop %v1321
  %v1325 = vmul.f32 1.0, %v1324
  %v1326 = vtanh.pop %v1311
  %v1327 = vtanh.pop %v1313
  %v1328 = vxor.u32 %v1311, 2147483648
  %v1329 = vxor.u32 %v1313, 2147483648
  %v1330 = vmul.f32 %v1328, 1.442695
  %v1331 = vpow.pop %v1330
  %v1332 = vmul.f32 %v1329, 1.442695
  %v1333 = vpow.pop %v1332
  %v1334 = vadd.f32 %v1331, 1.0
  %v1335 = vadd.f32 %v1333, 1.0
  %v1336 = vrcp.pop %v1334
  %v1337 = vmul.f32 1.0, %v1336
  %v1338 = vrcp.pop %v1335
  %v1339 = vmul.f32 1.0, %v1338
  %v1342 = vrot.slane %v1210, 7
  %v1343 = vrot.slane %v1211, 7
  %v1346 = vmul.f32 %v1323, %v1342
  %v1347 = vmul.f32 %v1325, %v1343
  %v1348 = vmul.f32 %v1323, %v1326
  %v1349 = vmul.f32 %v1325, %v1327
  %1352 = vrot.lane.b32.xlu0 %v1348, 64
  %v1353 = vpop.permute.xlu0 %1352
  %1354 = vrot.lane.b32.xlu0 %v1349, 64
  %v1355 = vpop.permute.xlu0 %1354
  %v1358 = vadd.f32 %v1346, %v1353
  %v1359 = vadd.f32 %v1347, %v1355
  %v1360 = vtanh.pop %v1358
  %v1361 = vtanh.pop %v1359
  %v1362 = vmul.f32 %v1337, %v1360
  %v1363 = vmul.f32 %v1339, %v1361
  %v1366 = vrot.slane %v1362, 6
  %v1367 = vrot.slane %v1363, 5
  %v1368 = vsel %vm482, %v1367, %v1366
  %1369 = vrot.lane.b32.xlu0 %v1368, 64
  %v1370 = vpop.permute.xlu0 %1369
  %v1371 = vsel %vm333, %v1370, 0
  %1373 = vmatprep.subr.mxu0 %v288
  %1374 = vmatpush1.msra.mxu0 %v287
  %1375 = vmatprep.subr.mxu0 %v290
  %1376 = vmatpush1.msra.mxu0 %v289
  %1377 = vmatprep.subr.mxu0 %v292
  %1378 = vmatpush1.msra.mxu0 %v291
  %1379 = vmatprep.subr.mxu0 %v294
  %1380 = vmatpush1.msra.mxu0 %v293
  %1381 = vmatprep.subr.mxu0 %v296
  %1382 = vmatpush1.msra.mxu0 %v295
  %1383 = vmatprep.subr.mxu0 %v298
  %1384 = vmatpush1.msra.mxu0 %v297
  %1385 = vmatprep.subr.mxu0 %v300
  %1386 = vmatpush1.msra.mxu0 %v299
  %1387 = vmatprep.subr.mxu0 %v302
  %1388 = vmatpush1.msra.mxu0 %v301
  %1389 = vmatprep.subr.mxu0 0.0
  %1390 = vmatpush1.msra.mxu0 0.0
  %1391 = vmatprep.subr.mxu0 0.0
  %1392 = vmatpush1.msra.mxu0 0.0
  %1393 = vmatprep.subr.mxu0 0.0
  %1394 = vmatpush1.msra.mxu0 0.0
  %1395 = vmatprep.subr.mxu0 0.0
  %1396 = vmatpush1.msra.mxu0 0.0
  %1397 = vmatprep.subr.mxu0 0.0
  %1398 = vmatpush1.msra.mxu0 0.0
  %1399 = vmatprep.subr.mxu0 0.0
  %1400 = vmatpush1.msra.mxu0 0.0
  %1401 = vmatprep.subr.mxu0 0.0
  %1402 = vmatpush1.msra.mxu0 0.0
  %1403 = vmatprep.subr.mxu0 0.0
  %1404 = vmatpush1.msra.mxu0 0.0
  %1405 = vmatprep.subr.mxu0 0.0
  %1406 = vmatpush1.msra.mxu0 0.0
  %1407 = vmatprep.subr.mxu0 0.0
  %1408 = vmatpush1.msra.mxu0 0.0
  %1409 = vmatprep.subr.mxu0 0.0
  %1410 = vmatpush1.msra.mxu0 0.0
  %1411 = vmatprep.subr.mxu0 0.0
  %1412 = vmatpush1.msra.mxu0 0.0
  %1413 = vmatprep.subr.mxu0 0.0
  %1414 = vmatpush1.msra.mxu0 0.0
  %1415 = vmatprep.subr.mxu0 0.0
  %1416 = vmatpush1.msra.mxu0 0.0
  %1417 = vmatprep.subr.mxu0 0.0
  %1418 = vmatpush1.msra.mxu0 0.0
  %1419 = vmatprep.subr.mxu0 0.0
  %1420 = vmatpush1.msra.mxu0 0.0
  %1421 = vmatprep.subr.mxu0 0.0
  %1422 = vmatpush1.msra.mxu0 0.0
  %1423 = vmatprep.subr.mxu0 0.0
  %1424 = vmatpush1.msra.mxu0 0.0
  %1425 = vmatprep.subr.mxu0 0.0
  %1426 = vmatpush1.msra.mxu0 0.0
  %1427 = vmatprep.subr.mxu0 0.0
  %1428 = vmatpush1.msra.mxu0 0.0
  %1429 = vmatprep.subr.mxu0 0.0
  %1430 = vmatpush1.msra.mxu0 0.0
  %1431 = vmatprep.subr.mxu0 0.0
  %1432 = vmatpush1.msra.mxu0 0.0
  %1433 = vmatprep.subr.mxu0 0.0
  %1434 = vmatpush1.msra.mxu0 0.0
  %1435 = vmatprep.subr.mxu0 0.0
  %1436 = vmatpush1.msra.mxu0 0.0
  %1437 = vmatprep.mubr.f32.mxu0 0.0
  %1438 = vmatmul.mubr.f32.gmra.mrb[0].mxu0 %v1371
  %v1439 = vpop.f32.mrb[0].mxu0
  %v1440 = vadd.f32 0.0, %v1439
  %v1441 = vpop.f32.mrb[0].mxu0
  %v1442 = vadd.f32 0.0, %v1441
  %1443 = vdwg.mxu0
  %v1446 = vrot.slane %v1440, 1
  %v1447 = vrot.slane %v1442, 1
  %v1448 = vrot.slane %v1440, 2
  %v1449 = vrot.slane %v1442, 2
  %v1454 = vadd.f32 %v329, %v1446
  %v1455 = vadd.f32 %v330, %v1447
  %v1456 = vadd.f32 %v331, %v1448
  %v1457 = vadd.f32 %v332, %v1449
  %v1458 = vadd.f32 %v1454, %v424
  %v1459 = vadd.f32 %v1455, %v428
  %v1460 = vadd.f32 %v1456, %v424
  %v1461 = vadd.f32 %v1457, %v428
  %v1462 = vxor.u32 %v1458, 2147483648
  %v1463 = vxor.u32 %v1460, 2147483648
  %v1464 = vmul.f32 %v1462, 1.442695
  %v1465 = vpow.pop %v1464
  %v1466 = vmul.f32 %v1463, 1.442695
  %v1467 = vpow.pop %v1466
  %v1468 = vadd.f32 %v1465, 1.0
  %v1469 = vadd.f32 %v1467, 1.0
  %v1470 = vrcp.pop %v1468
  %v1471 = vmul.f32 1.0, %v1470
  %v1472 = vrcp.pop %v1469
  %v1473 = vmul.f32 1.0, %v1472
  %v1474 = vtanh.pop %v1459
  %v1475 = vtanh.pop %v1461
  %v1476 = vxor.u32 %v1459, 2147483648
  %v1477 = vxor.u32 %v1461, 2147483648
  %v1478 = vmul.f32 %v1476, 1.442695
  %v1479 = vpow.pop %v1478
  %v1480 = vmul.f32 %v1477, 1.442695
  %v1481 = vpow.pop %v1480
  %v1482 = vadd.f32 %v1479, 1.0
  %v1483 = vadd.f32 %v1481, 1.0
  %v1484 = vrcp.pop %v1482
  %v1485 = vmul.f32 1.0, %v1484
  %v1486 = vrcp.pop %v1483
  %v1487 = vmul.f32 1.0, %v1486
  %v1490 = vrot.slane %v1358, 7
  %v1491 = vrot.slane %v1359, 7
  %v1494 = vmul.f32 %v1471, %v1490
  %v1495 = vmul.f32 %v1473, %v1491
  %v1496 = vmul.f32 %v1471, %v1474
  %v1497 = vmul.f32 %v1473, %v1475
  %1500 = vrot.lane.b32.xlu0 %v1496, 64
  %v1501 = vpop.permute.xlu0 %1500
  %1502 = vrot.lane.b32.xlu0 %v1497, 64
  %v1503 = vpop.permute.xlu0 %1502
  %v1506 = vadd.f32 %v1494, %v1501
  %v1507 = vadd.f32 %v1495, %v1503
  %v1508 = vtanh.pop %v1506
  %v1509 = vtanh.pop %v1507
  %v1510 = vmul.f32 %v1485, %v1508
  %v1511 = vmul.f32 %v1487, %v1509
  %v1521 = vrot.slane %v1510, 7
  %v1522 = vrot.slane %v1511, 6
  %v1523 = vsel %vm482, %v1522, %v1521
  %v1525 = vsel %vm333, %v485, %v628
  %v1526 = vsel %vm333, %v778, %v924
  %v1527 = vsel %vm333, %v1074, %v1220
  %v1528 = vsel %vm333, %v1370, %v1523
  %v1529 = vld [vmem:[%s7] sm:$0xff]
  %v1530 = vld [vmem:[%s7 + $0x8] sm:$0xff]
  %v1531 = vld [vmem:[%s7 + $0x10] sm:$0xff]
  %v1532 = vld [vmem:[%s7 + $0x18] sm:$0xff]
  %v1533 = vld [vmem:[%s7 + $0x20] sm:$0xff]
  %v1534 = vld [vmem:[%s7 + $0x28] sm:$0xff]
  %v1535 = vld [vmem:[%s7 + $0x30] sm:$0xff]
  %v1536 = vld [vmem:[%s7 + $0x38] sm:$0xff]
  %v1537 = vld [vmem:[%s7 + $0x40] sm:$0xff]
  %v1538 = vld [vmem:[%s7 + $0x48] sm:$0xff]
  %v1539 = vld [vmem:[%s7 + $0x50] sm:$0xff]
  %v1540 = vld [vmem:[%s7 + $0x58] sm:$0xff]
  %v1541 = vld [vmem:[%s7 + $0x60] sm:$0xff]
  %v1542 = vld [vmem:[%s7 + $0x68] sm:$0xff]
  %v1543 = vld [vmem:[%s7 + $0x70] sm:$0xff]
  %v1544 = vld [vmem:[%s7 + $0x78] sm:$0xff]
  %v1545 = vld [vmem:[%s7 + $0x80] sm:$0xff]
  %v1546 = vld [vmem:[%s7 + $0x88] sm:$0xff]
  %v1547 = vld [vmem:[%s7 + $0x90] sm:$0xff]
  %v1548 = vld [vmem:[%s7 + $0x98] sm:$0xff]
  %v1549 = vld [vmem:[%s7 + $0xa0] sm:$0xff]
  %v1550 = vld [vmem:[%s7 + $0xa8] sm:$0xff]
  %v1551 = vld [vmem:[%s7 + $0xb0] sm:$0xff]
  %v1552 = vld [vmem:[%s7 + $0xb8] sm:$0xff]
  %v1553 = vld [vmem:[%s7 + $0xc0] sm:$0xff]
  %v1554 = vld [vmem:[%s7 + $0xc8] sm:$0xff]
  %v1555 = vld [vmem:[%s7 + $0xd0] sm:$0xff]
  %v1556 = vld [vmem:[%s7 + $0xd8] sm:$0xff]
  %v1557 = vld [vmem:[%s7 + $0xe0] sm:$0xff]
  %v1558 = vld [vmem:[%s7 + $0xe8] sm:$0xff]
  %v1559 = vld [vmem:[%s7 + $0xf0] sm:$0xff]
  %v1560 = vld [vmem:[%s7 + $0xf8] sm:$0xff]
  %v1561 = vld [vmem:[%s7 + $0x100] sm:$0xff]
  %v1562 = vld [vmem:[%s7 + $0x108] sm:$0xff]
  %v1563 = vld [vmem:[%s7 + $0x110] sm:$0xff]
  %v1564 = vld [vmem:[%s7 + $0x118] sm:$0xff]
  %v1565 = vld [vmem:[%s7 + $0x120] sm:$0xff]
  %v1566 = vld [vmem:[%s7 + $0x128] sm:$0xff]
  %v1567 = vld [vmem:[%s7 + $0x130] sm:$0xff]
  %v1568 = vld [vmem:[%s7 + $0x138] sm:$0xff]
  %v1569 = vld [vmem:[%s7 + $0x140] sm:$0xff]
  %v1570 = vld [vmem:[%s7 + $0x148] sm:$0xff]
  %v1571 = vld [vmem:[%s7 + $0x150] sm:$0xff]
  %v1572 = vld [vmem:[%s7 + $0x158] sm:$0xff]
  %v1573 = vld [vmem:[%s7 + $0x160] sm:$0xff]
  %v1574 = vld [vmem:[%s7 + $0x168] sm:$0xff]
  %v1575 = vld [vmem:[%s7 + $0x170] sm:$0xff]
  %v1576 = vld [vmem:[%s7 + $0x178] sm:$0xff]
  %v1577 = vld [vmem:[%s7 + $0x180] sm:$0xff]
  %v1578 = vld [vmem:[%s7 + $0x188] sm:$0xff]
  %v1579 = vld [vmem:[%s7 + $0x190] sm:$0xff]
  %v1580 = vld [vmem:[%s7 + $0x198] sm:$0xff]
  %v1581 = vld [vmem:[%s7 + $0x1a0] sm:$0xff]
  %v1582 = vld [vmem:[%s7 + $0x1a8] sm:$0xff]
  %v1583 = vld [vmem:[%s7 + $0x1b0] sm:$0xff]
  %v1584 = vld [vmem:[%s7 + $0x1b8] sm:$0xff]
  %v1585 = vld [vmem:[%s7 + $0x1c0] sm:$0xff]
  %v1586 = vld [vmem:[%s7 + $0x1c8] sm:$0xff]
  %v1587 = vld [vmem:[%s7 + $0x1d0] sm:$0xff]
  %v1588 = vld [vmem:[%s7 + $0x1d8] sm:$0xff]
  %v1589 = vld [vmem:[%s7 + $0x1e0] sm:$0xff]
  %v1590 = vld [vmem:[%s7 + $0x1e8] sm:$0xff]
  %v1591 = vld [vmem:[%s7 + $0x1f0] sm:$0xff]
  %v1592 = vld [vmem:[%s7 + $0x1f8] sm:$0xff]
  %v1593 = vld [vmem:[%s8] sm:$0x1]
  %v1595 = vlaneseq
  %v1596 = vshrl.u32 %v1595, 7
  %v1597 = vsub.s32 0, %v1596
  %v1598 = vrot.slane %v1593, %v1597
  %1600 = vmatprep.subr.mxu0 0.0
  %1601 = vmatpush1.msra.mxu0 %v1529
  %1602 = vmatprep.subr.mxu0 0.0
  %1603 = vmatpush1.msra.mxu0 %v1530
  %1604 = vmatprep.subr.mxu0 0.0
  %1605 = vmatpush1.msra.mxu0 %v1531
  %1606 = vmatprep.subr.mxu0 0.0
  %1607 = vmatpush1.msra.mxu0 %v1532
  %1608 = vmatprep.subr.mxu0 0.0
  %1609 = vmatpush1.msra.mxu0 %v1533
  %1610 = vmatprep.subr.mxu0 0.0
  %1611 = vmatpush1.msra.mxu0 %v1534
  %1612 = vmatprep.subr.mxu0 0.0
  %1613 = vmatpush1.msra.mxu0 %v1535
  %1614 = vmatprep.subr.mxu0 0.0
  %1615 = vmatpush1.msra.mxu0 %v1536
  %1616 = vmatprep.subr.mxu0 0.0
  %1617 = vmatpush1.msra.mxu0 %v1537
  %1618 = vmatprep.subr.mxu0 0.0
  %1619 = vmatpush1.msra.mxu0 %v1538
  %1620 = vmatprep.subr.mxu0 0.0
  %1621 = vmatpush1.msra.mxu0 %v1539
  %1622 = vmatprep.subr.mxu0 0.0
  %1623 = vmatpush1.msra.mxu0 %v1540
  %1624 = vmatprep.subr.mxu0 0.0
  %1625 = vmatpush1.msra.mxu0 %v1541
  %1626 = vmatprep.subr.mxu0 0.0
  %1627 = vmatpush1.msra.mxu0 %v1542
  %1628 = vmatprep.subr.mxu0 0.0
  %1629 = vmatpush1.msra.mxu0 %v1543
  %1630 = vmatprep.subr.mxu0 0.0
  %1631 = vmatpush1.msra.mxu0 %v1544
  %1632 = vmatprep.subr.mxu0 0.0
  %1633 = vmatpush1.msra.mxu0 %v1545
  %1634 = vmatprep.subr.mxu0 0.0
  %1635 = vmatpush1.msra.mxu0 %v1546
  %1636 = vmatprep.subr.mxu0 0.0
  %1637 = vmatpush1.msra.mxu0 %v1547
  %1638 = vmatprep.subr.mxu0 0.0
  %1639 = vmatpush1.msra.mxu0 %v1548
  %1640 = vmatprep.subr.mxu0 0.0
  %1641 = vmatpush1.msra.mxu0 %v1549
  %1642 = vmatprep.subr.mxu0 0.0
  %1643 = vmatpush1.msra.mxu0 %v1550
  %1644 = vmatprep.subr.mxu0 0.0
  %1645 = vmatpush1.msra.mxu0 %v1551
  %1646 = vmatprep.subr.mxu0 0.0
  %1647 = vmatpush1.msra.mxu0 %v1552
  %1648 = vmatprep.subr.mxu0 0.0
  %1649 = vmatpush1.msra.mxu0 %v1553
  %1650 = vmatprep.subr.mxu0 0.0
  %1651 = vmatpush1.msra.mxu0 %v1554
  %1652 = vmatprep.subr.mxu0 0.0
  %1653 = vmatpush1.msra.mxu0 %v1555
  %1654 = vmatprep.subr.mxu0 0.0
  %1655 = vmatpush1.msra.mxu0 %v1556
  %1656 = vmatprep.subr.mxu0 0.0
  %1657 = vmatpush1.msra.mxu0 %v1557
  %1658 = vmatprep.subr.mxu0 0.0
  %1659 = vmatpush1.msra.mxu0 %v1558
  %1660 = vmatprep.subr.mxu0 0.0
  %1661 = vmatpush1.msra.mxu0 %v1559
  %1662 = vmatprep.subr.mxu0 0.0
  %1663 = vmatpush1.msra.mxu0 %v1560
  %1664 = vmatprep.mubr.f32.mxu0 %v1526
  %1665 = vmatmul.mubr.f32.gmra.mrb[0].mxu0 %v1525
  %v1666 = vpop.f32.mrb[0].mxu0
  %v1667 = vadd.f32 %v1598, %v1666
  %v1668 = vpop.f32.mrb[0].mxu0
  %1669 = vdwg.mxu0
  %1670 = vmatprep.subr.mxu0 0.0
  %1671 = vmatpush1.msra.mxu0 %v1561
  %1672 = vmatprep.subr.mxu0 0.0
  %1673 = vmatpush1.msra.mxu0 %v1562
  %1674 = vmatprep.subr.mxu0 0.0
  %1675 = vmatpush1.msra.mxu0 %v1563
  %1676 = vmatprep.subr.mxu0 0.0
  %1677 = vmatpush1.msra.mxu0 %v1564
  %1678 = vmatprep.subr.mxu0 0.0
  %1679 = vmatpush1.msra.mxu0 %v1565
  %1680 = vmatprep.subr.mxu0 0.0
  %1681 = vmatpush1.msra.mxu0 %v1566
  %1682 = vmatprep.subr.mxu0 0.0
  %1683 = vmatpush1.msra.mxu0 %v1567
  %1684 = vmatprep.subr.mxu0 0.0
  %1685 = vmatpush1.msra.mxu0 %v1568
  %1686 = vmatprep.subr.mxu0 0.0
  %1687 = vmatpush1.msra.mxu0 %v1569
  %1688 = vmatprep.subr.mxu0 0.0
  %1689 = vmatpush1.msra.mxu0 %v1570
  %1690 = vmatprep.subr.mxu0 0.0
  %1691 = vmatpush1.msra.mxu0 %v1571
  %1692 = vmatprep.subr.mxu0 0.0
  %1693 = vmatpush1.msra.mxu0 %v1572
  %1694 = vmatprep.subr.mxu0 0.0
  %1695 = vmatpush1.msra.mxu0 %v1573
  %1696 = vmatprep.subr.mxu0 0.0
  %1697 = vmatpush1.msra.mxu0 %v1574
  %1698 = vmatprep.subr.mxu0 0.0
  %1699 = vmatpush1.msra.mxu0 %v1575
  %1700 = vmatprep.subr.mxu0 0.0
  %1701 = vmatpush1.msra.mxu0 %v1576
  %1702 = vmatprep.subr.mxu0 0.0
  %1703 = vmatpush1.msra.mxu0 %v1577
  %1704 = vmatprep.subr.mxu0 0.0
  %1705 = vmatpush1.msra.mxu0 %v1578
  %1706 = vmatprep.subr.mxu0 0.0
  %1707 = vmatpush1.msra.mxu0 %v1579
  %1708 = vmatprep.subr.mxu0 0.0
  %1709 = vmatpush1.msra.mxu0 %v1580
  %1710 = vmatprep.subr.mxu0 0.0
  %1711 = vmatpush1.msra.mxu0 %v1581
  %1712 = vmatprep.subr.mxu0 0.0
  %1713 = vmatpush1.msra.mxu0 %v1582
  %1714 = vmatprep.subr.mxu0 0.0
  %1715 = vmatpush1.msra.mxu0 %v1583
  %1716 = vmatprep.subr.mxu0 0.0
  %1717 = vmatpush1.msra.mxu0 %v1584
  %1718 = vmatprep.subr.mxu0 0.0
  %1719 = vmatpush1.msra.mxu0 %v1585
  %1720 = vmatprep.subr.mxu0 0.0
  %1721 = vmatpush1.msra.mxu0 %v1586
  %1722 = vmatprep.subr.mxu0 0.0
  %1723 = vmatpush1.msra.mxu0 %v1587
  %1724 = vmatprep.subr.mxu0 0.0
  %1725 = vmatpush1.msra.mxu0 %v1588
  %1726 = vmatprep.subr.mxu0 0.0
  %1727 = vmatpush1.msra.mxu0 %v1589
  %1728 = vmatprep.subr.mxu0 0.0
  %1729 = vmatpush1.msra.mxu0 %v1590
  %1730 = vmatprep.subr.mxu0 0.0
  %1731 = vmatpush1.msra.mxu0 %v1591
  %1732 = vmatprep.subr.mxu0 0.0
  %1733 = vmatpush1.msra.mxu0 %v1592
  %1734 = vmatprep.mubr.f32.mxu0 %v1528
  %1735 = vmatmul.mubr.f32.gmra.mrb[0].mxu0 %v1527
  %v1736 = vpop.f32.mrb[0].mxu0
  %v1737 = vadd.f32 %v1667, %v1736
  %v1738 = vpop.f32.mrb[0].mxu0
  %1739 = vdwg.mxu0
  %v1740 = vld [vmem:[%s9] sm:$0x3]
  %v1741 = vld [vmem:[%s10] sm:$0xff]
  %v1742 = vld [vmem:[%s10 + $0x8] sm:$0xff]
  %v1743 = vld [vmem:[%s11] sm:$0x1]
  %v1745 = vlaneseq
  %v1746 = vshrl.u32 %v1745, 7
  %v1747 = vsub.s32 0, %v1746
  %v1748 = vrot.slane %v1743, %v1747
  %vm1750 = vcmask 130048
  %v1752 = vsel %vm1750, %v1740, 0
  %1754 = vmatprep.subr.mxu0 0.0
  %1755 = vmatpush1.msra.mxu0 %v1741
  %1756 = vmatprep.subr.mxu0 0.0
  %1757 = vmatpush1.msra.mxu0 %v1742
  %1758 = vmatprep.subr.mxu0 0.0
  %1759 = vmatpush1.msra.mxu0 0.0
  %1760 = vmatprep.subr.mxu0 0.0
  %1761 = vmatpush1.msra.mxu0 0.0
  %1762 = vmatprep.subr.mxu0 0.0
  %1763 = vmatpush1.msra.mxu0 0.0
  %1764 = vmatprep.subr.mxu0 0.0
  %1765 = vmatpush1.msra.mxu0 0.0
  %1766 = vmatprep.subr.mxu0 0.0
  %1767 = vmatpush1.msra.mxu0 0.0
  %1768 = vmatprep.subr.mxu0 0.0
  %1769 = vmatpush1.msra.mxu0 0.0
  %1770 = vmatprep.subr.mxu0 0.0
  %1771 = vmatpush1.msra.mxu0 0.0
  %1772 = vmatprep.subr.mxu0 0.0
  %1773 = vmatpush1.msra.mxu0 0.0
  %1774 = vmatprep.subr.mxu0 0.0
  %1775 = vmatpush1.msra.mxu0 0.0
  %1776 = vmatprep.subr.mxu0 0.0
  %1777 = vmatpush1.msra.mxu0 0.0
  %1778 = vmatprep.subr.mxu0 0.0
  %1779 = vmatpush1.msra.mxu0 0.0
  %1780 = vmatprep.subr.mxu0 0.0
  %1781 = vmatpush1.msra.mxu0 0.0
  %1782 = vmatprep.subr.mxu0 0.0
  %1783 = vmatpush1.msra.mxu0 0.0
  %1784 = vmatprep.subr.mxu0 0.0
  %1785 = vmatpush1.msra.mxu0 0.0
  %1786 = vmatprep.subr.mxu0 0.0
  %1787 = vmatpush1.msra.mxu0 0.0
  %1788 = vmatprep.subr.mxu0 0.0
  %1789 = vmatpush1.msra.mxu0 0.0
  %1790 = vmatprep.subr.mxu0 0.0
  %1791 = vmatpush1.msra.mxu0 0.0
  %1792 = vmatprep.subr.mxu0 0.0
  %1793 = vmatpush1.msra.mxu0 0.0
  %1794 = vmatprep.subr.mxu0 0.0
  %1795 = vmatpush1.msra.mxu0 0.0
  %1796 = vmatprep.subr.mxu0 0.0
  %1797 = vmatpush1.msra.mxu0 0.0
  %1798 = vmatprep.subr.mxu0 0.0
  %1799 = vmatpush1.msra.mxu0 0.0
  %1800 = vmatprep.subr.mxu0 0.0
  %1801 = vmatpush1.msra.mxu0 0.0
  %1802 = vmatprep.subr.mxu0 0.0
  %1803 = vmatpush1.msra.mxu0 0.0
  %1804 = vmatprep.subr.mxu0 0.0
  %1805 = vmatpush1.msra.mxu0 0.0
  %1806 = vmatprep.subr.mxu0 0.0
  %1807 = vmatpush1.msra.mxu0 0.0
  %1808 = vmatprep.subr.mxu0 0.0
  %1809 = vmatpush1.msra.mxu0 0.0
  %1810 = vmatprep.subr.mxu0 0.0
  %1811 = vmatpush1.msra.mxu0 0.0
  %1812 = vmatprep.subr.mxu0 0.0
  %1813 = vmatpush1.msra.mxu0 0.0
  %1814 = vmatprep.subr.mxu0 0.0
  %1815 = vmatpush1.msra.mxu0 0.0
  %1816 = vmatprep.subr.mxu0 0.0
  %1817 = vmatpush1.msra.mxu0 0.0
  %1818 = vmatprep.mubr.f32.mxu0 0.0
  %1819 = vmatmul.mubr.f32.gmra.mrb[0].mxu0 %v1752
  %v1820 = vpop.f32.mrb[0].mxu0
  %v1821 = vadd.f32 %v1748, %v1820
  %v1822 = vpop.f32.mrb[0].mxu0
  %1823 = vdwg.mxu0
  %v1824 = vmax.f32 %v1821, 0.0
  %v1825 = vld [vmem:[%s12] sm:$0xff]
  %v1826 = vld [vmem:[%s12 + $0x8] sm:$0xff]
  %v1827 = vld [vmem:[%s12 + $0x10] sm:$0xff]
  %v1828 = vld [vmem:[%s12 + $0x18] sm:$0xff]
  %v1829 = vld [vmem:[%s12 + $0x20] sm:$0xff]
  %v1830 = vld [vmem:[%s12 + $0x28] sm:$0xff]
  %v1831 = vld [vmem:[%s12 + $0x30] sm:$0xff]
  %v1832 = vld [vmem:[%s12 + $0x38] sm:$0xff]
  %v1833 = vld [vmem:[%s13] sm:$0x1]
  %v1835 = vlaneseq
  %v1836 = vshrl.u32 %v1835, 7
  %v1837 = vsub.s32 0, %v1836
  %v1838 = vrot.slane %v1833, %v1837
  %v1841 = vsel %vm333, %v1824, 0
  %1843 = vmatprep.subr.mxu0 0.0
  %1844 = vmatpush1.msra.mxu0 %v1825
  %1845 = vmatprep.subr.mxu0 0.0
  %1846 = vmatpush1.msra.mxu0 %v1826
  %1847 = vmatprep.subr.mxu0 0.0
  %1848 = vmatpush1.msra.mxu0 %v1827
  %1849 = vmatprep.subr.mxu0 0.0
  %1850 = vmatpush1.msra.mxu0 %v1828
  %1851 = vmatprep.subr.mxu0 0.0
  %1852 = vmatpush1.msra.mxu0 %v1829
  %1853 = vmatprep.subr.mxu0 0.0
  %1854 = vmatpush1.msra.mxu0 %v1830
  %1855 = vmatprep.subr.mxu0 0.0
  %1856 = vmatpush1.msra.mxu0 %v1831
  %1857 = vmatprep.subr.mxu0 0.0
  %1858 = vmatpush1.msra.mxu0 %v1832
  %1859 = vmatprep.subr.mxu0 0.0
  %1860 = vmatpush1.msra.mxu0 0.0
  %1861 = vmatprep.subr.mxu0 0.0
  %1862 = vmatpush1.msra.mxu0 0.0
  %1863 = vmatprep.subr.mxu0 0.0
  %1864 = vmatpush1.msra.mxu0 0.0
  %1865 = vmatprep.subr.mxu0 0.0
  %1866 = vmatpush1.msra.mxu0 0.0
  %1867 = vmatprep.subr.mxu0 0.0
  %1868 = vmatpush1.msra.mxu0 0.0
  %1869 = vmatprep.subr.mxu0 0.0
  %1870 = vmatpush1.msra.mxu0 0.0
  %1871 = vmatprep.subr.mxu0 0.0
  %1872 = vmatpush1.msra.mxu0 0.0
  %1873 = vmatprep.subr.mxu0 0.0
  %1874 = vmatpush1.msra.mxu0 0.0
  %1875 = vmatprep.subr.mxu0 0.0
  %1876 = vmatpush1.msra.mxu0 0.0
  %1877 = vmatprep.subr.mxu0 0.0
  %1878 = vmatpush1.msra.mxu0 0.0
  %1879 = vmatprep.subr.mxu0 0.0
  %1880 = vmatpush1.msra.mxu0 0.0
  %1881 = vmatprep.subr.mxu0 0.0
  %1882 = vmatpush1.msra.mxu0 0.0
  %1883 = vmatprep.subr.mxu0 0.0
  %1884 = vmatpush1.msra.mxu0 0.0
  %1885 = vmatprep.subr.mxu0 0.0
  %1886 = vmatpush1.msra.mxu0 0.0
  %1887 = vmatprep.subr.mxu0 0.0
  %1888 = vmatpush1.msra.mxu0 0.0
  %1889 = vmatprep.subr.mxu0 0.0
  %1890 = vmatpush1.msra.mxu0 0.0
  %1891 = vmatprep.subr.mxu0 0.0
  %1892 = vmatpush1.msra.mxu0 0.0
  %1893 = vmatprep.subr.mxu0 0.0
  %1894 = vmatpush1.msra.mxu0 0.0
  %1895 = vmatprep.subr.mxu0 0.0
  %1896 = vmatpush1.msra.mxu0 0.0
  %1897 = vmatprep.subr.mxu0 0.0
  %1898 = vmatpush1.msra.mxu0 0.0
  %1899 = vmatprep.subr.mxu0 0.0
  %1900 = vmatpush1.msra.mxu0 0.0
  %1901 = vmatprep.subr.mxu0 0.0
  %1902 = vmatpush1.msra.mxu0 0.0
  %1903 = vmatprep.subr.mxu0 0.0
  %1904 = vmatpush1.msra.mxu0 0.0
  %1905 = vmatprep.subr.mxu0 0.0
  %1906 = vmatpush1.msra.mxu0 0.0
  %1907 = vmatprep.mubr.f32.mxu0 0.0
  %1908 = vmatmul.mubr.f32.gmra.mrb[0].mxu0 %v1841
  %v1909 = vpop.f32.mrb[0].mxu0
  %v1910 = vadd.f32 %v1838, %v1909
  %v1911 = vpop.f32.mrb[0].mxu0
  %1912 = vdwg.mxu0
  %v1913 = vmax.f32 %v1910, 0.0
  %v1914 = vld [vmem:[%s14] sm:$0xff]
  %v1915 = vld [vmem:[%s14 + $0x8] sm:$0xff]
  %v1916 = vld [vmem:[%s14 + $0x10] sm:$0xff]
  %v1917 = vld [vmem:[%s14 + $0x18] sm:$0xff]
  %v1918 = vld [vmem:[%s14 + $0x20] sm:$0xff]
  %v1919 = vld [vmem:[%s14 + $0x28] sm:$0xff]
  %v1920 = vld [vmem:[%s14 + $0x30] sm:$0xff]
  %v1921 = vld [vmem:[%s14 + $0x38] sm:$0xff]
  %v1922 = vld [vmem:[%s14 + $0x40] sm:$0xff]
  %v1923 = vld [vmem:[%s14 + $0x48] sm:$0xff]
  %v1924 = vld [vmem:[%s14 + $0x50] sm:$0xff]
  %v1925 = vld [vmem:[%s14 + $0x58] sm:$0xff]
  %v1926 = vld [vmem:[%s14 + $0x60] sm:$0xff]
  %v1927 = vld [vmem:[%s14 + $0x68] sm:$0xff]
  %v1928 = vld [vmem:[%s14 + $0x70] sm:$0xff]
  %v1929 = vld [vmem:[%s14 + $0x78] sm:$0xff]
  %v1930 = vld [vmem:[%s14 + $0x80] sm:$0xff]
  %v1931 = vld [vmem:[%s14 + $0x88] sm:$0xff]
  %v1932 = vld [vmem:[%s14 + $0x90] sm:$0xff]
  %v1933 = vld [vmem:[%s14 + $0x98] sm:$0xff]
  %v1934 = vld [vmem:[%s14 + $0xa0] sm:$0xff]
  %v1935 = vld [vmem:[%s14 + $0xa8] sm:$0xff]
  %v1936 = vld [vmem:[%s14 + $0xb0] sm:$0xff]
  %v1937 = vld [vmem:[%s14 + $0xb8] sm:$0xff]
  %v1938 = vld [vmem:[%s14 + $0xc0] sm:$0xff]
  %v1939 = vld [vmem:[%s14 + $0xc8] sm:$0xff]
  %v1940 = vld [vmem:[%s14 + $0xd0] sm:$0xff]
  %v1941 = vld [vmem:[%s14 + $0xd8] sm:$0xff]
  %v1942 = vld [vmem:[%s14 + $0xe0] sm:$0xff]
  %v1943 = vld [vmem:[%s14 + $0xe8] sm:$0xff]
  %v1944 = vld [vmem:[%s14 + $0xf0] sm:$0xff]
  %v1945 = vld [vmem:[%s14 + $0xf8] sm:$0xff]
  %1946 = vmatprep.subr.mxu0 0.0
  %1947 = vmatpush1.msra.mxu0 %v1930
  %1948 = vmatprep.subr.mxu0 0.0
  %1949 = vmatpush1.msra.mxu0 %v1931
  %1950 = vmatprep.subr.mxu0 0.0
  %1951 = vmatpush1.msra.mxu0 %v1932
  %1952 = vmatprep.subr.mxu0 0.0
  %1953 = vmatpush1.msra.mxu0 %v1933
  %1954 = vmatprep.subr.mxu0 0.0
  %1955 = vmatpush1.msra.mxu0 %v1934
  %1956 = vmatprep.subr.mxu0 0.0
  %1957 = vmatpush1.msra.mxu0 %v1935
  %1958 = vmatprep.subr.mxu0 0.0
  %1959 = vmatpush1.msra.mxu0 %v1936
  %1960 = vmatprep.subr.mxu0 0.0
  %1961 = vmatpush1.msra.mxu0 %v1937
  %1962 = vmatprep.subr.mxu0 0.0
  %1963 = vmatpush1.msra.mxu0 %v1938
  %1964 = vmatprep.subr.mxu0 0.0
  %1965 = vmatpush1.msra.mxu0 %v1939
  %1966 = vmatprep.subr.mxu0 0.0
  %1967 = vmatpush1.msra.mxu0 %v1940
  %1968 = vmatprep.subr.mxu0 0.0
  %1969 = vmatpush1.msra.mxu0 %v1941
  %1970 = vmatprep.subr.mxu0 0.0
  %1971 = vmatpush1.msra.mxu0 %v1942
  %1972 = vmatprep.subr.mxu0 0.0
  %1973 = vmatpush1.msra.mxu0 %v1943
  %1974 = vmatprep.subr.mxu0 0.0
  %1975 = vmatpush1.msra.mxu0 %v1944
  %1976 = vmatprep.subr.mxu0 0.0
  %1977 = vmatpush1.msra.mxu0 %v1945
  %1978 = vmatprep.subr.mxu0 0.0
  %1979 = vmatpush1.msra.mxu0 0.0
  %1980 = vmatprep.subr.mxu0 0.0
  %1981 = vmatpush1.msra.mxu0 0.0
  %1982 = vmatprep.subr.mxu0 0.0
  %1983 = vmatpush1.msra.mxu0 0.0
  %1984 = vmatprep.subr.mxu0 0.0
  %1985 = vmatpush1.msra.mxu0 0.0
  %1986 = vmatprep.subr.mxu0 0.0
  %1987 = vmatpush1.msra.mxu0 0.0
  %1988 = vmatprep.subr.mxu0 0.0
  %1989 = vmatpush1.msra.mxu0 0.0
  %1990 = vmatprep.subr.mxu0 0.0
  %1991 = vmatpush1.msra.mxu0 0.0
  %1992 = vmatprep.subr.mxu0 0.0
  %1993 = vmatpush1.msra.mxu0 0.0
  %1994 = vmatprep.subr.mxu0 0.0
  %1995 = vmatpush1.msra.mxu0 0.0
  %1996 = vmatprep.subr.mxu0 0.0
  %1997 = vmatpush1.msra.mxu0 0.0
  %1998 = vmatprep.subr.mxu0 0.0
  %1999 = vmatpush1.msra.mxu0 0.0
  %2000 = vmatprep.subr.mxu0 0.0
  %2001 = vmatpush1.msra.mxu0 0.0
  %2002 = vmatprep.subr.mxu0 0.0
  %2003 = vmatpush1.msra.mxu0 0.0
  %2004 = vmatprep.subr.mxu0 0.0
  %2005 = vmatpush1.msra.mxu0 0.0
  %2006 = vmatprep.subr.mxu0 0.0
  %2007 = vmatpush1.msra.mxu0 0.0
  %2008 = vmatprep.subr.mxu0 0.0
  %2009 = vmatpush1.msra.mxu0 0.0
  %2010 = vmatprep.mubr.f32.mxu0 0.0
  %2011 = vmatmul.mubr.f32.gmra.mrb[0].mxu0 %v1737
  %v2012 = vpop.f32.mrb[0].mxu0
  %v2013 = vadd.f32 0.0, %v2012
  %v2014 = vpop.f32.mrb[0].mxu0
  %2015 = vdwg.mxu0
  %2016 = vmatprep.subr.mxu0 0.0
  %2017 = vmatpush1.msra.mxu0 %v1914
  %2018 = vmatprep.subr.mxu0 0.0
  %2019 = vmatpush1.msra.mxu0 %v1915
  %2020 = vmatprep.subr.mxu0 0.0
  %2021 = vmatpush1.msra.mxu0 %v1916
  %2022 = vmatprep.subr.mxu0 0.0
  %2023 = vmatpush1.msra.mxu0 %v1917
  %2024 = vmatprep.subr.mxu0 0.0
  %2025 = vmatpush1.msra.mxu0 %v1918
  %2026 = vmatprep.subr.mxu0 0.0
  %2027 = vmatpush1.msra.mxu0 %v1919
  %2028 = vmatprep.subr.mxu0 0.0
  %2029 = vmatpush1.msra.mxu0 %v1920
  %2030 = vmatprep.subr.mxu0 0.0
  %2031 = vmatpush1.msra.mxu0 %v1921
  %2032 = vmatprep.subr.mxu0 0.0
  %2033 = vmatpush1.msra.mxu0 %v1922
  %2034 = vmatprep.subr.mxu0 0.0
  %2035 = vmatpush1.msra.mxu0 %v1923
  %2036 = vmatprep.subr.mxu0 0.0
  %2037 = vmatpush1.msra.mxu0 %v1924
  %2038 = vmatprep.subr.mxu0 0.0
  %2039 = vmatpush1.msra.mxu0 %v1925
  %2040 = vmatprep.subr.mxu0 0.0
  %2041 = vmatpush1.msra.mxu0 %v1926
  %2042 = vmatprep.subr.mxu0 0.0
  %2043 = vmatpush1.msra.mxu0 %v1927
  %2044 = vmatprep.subr.mxu0 0.0
  %2045 = vmatpush1.msra.mxu0 %v1928
  %2046 = vmatprep.subr.mxu0 0.0
  %2047 = vmatpush1.msra.mxu0 %v1929
  %2048 = vmatprep.subr.mxu0 0.0
  %2049 = vmatpush1.msra.mxu0 0.0
  %2050 = vmatprep.subr.mxu0 0.0
  %2051 = vmatpush1.msra.mxu0 0.0
  %2052 = vmatprep.subr.mxu0 0.0
  %2053 = vmatpush1.msra.mxu0 0.0
  %2054 = vmatprep.subr.mxu0 0.0
  %2055 = vmatpush1.msra.mxu0 0.0
  %2056 = vmatprep.subr.mxu0 0.0
  %2057 = vmatpush1.msra.mxu0 0.0
  %2058 = vmatprep.subr.mxu0 0.0
  %2059 = vmatpush1.msra.mxu0 0.0
  %2060 = vmatprep.subr.mxu0 0.0
  %2061 = vmatpush1.msra.mxu0 0.0
  %2062 = vmatprep.subr.mxu0 0.0
  %2063 = vmatpush1.msra.mxu0 0.0
  %2064 = vmatprep.subr.mxu0 0.0
  %2065 = vmatpush1.msra.mxu0 0.0
  %2066 = vmatprep.subr.mxu0 0.0
  %2067 = vmatpush1.msra.mxu0 0.0
  %2068 = vmatprep.subr.mxu0 0.0
  %2069 = vmatpush1.msra.mxu0 0.0
  %2070 = vmatprep.subr.mxu0 0.0
  %2071 = vmatpush1.msra.mxu0 0.0
  %2072 = vmatprep.subr.mxu0 0.0
  %2073 = vmatpush1.msra.mxu0 0.0
  %2074 = vmatprep.subr.mxu0 0.0
  %2075 = vmatpush1.msra.mxu0 0.0
  %2076 = vmatprep.subr.mxu0 0.0
  %2077 = vmatpush1.msra.mxu0 0.0
  %2078 = vmatprep.subr.mxu0 0.0
  %2079 = vmatpush1.msra.mxu0 0.0
  %2080 = vmatprep.mubr.f32.mxu0 0.0
  %2081 = vmatmul.mubr.f32.gmra.mrb[0].mxu0 %v284
  %v2082 = vpop.f32.mrb[0].mxu0
  %v2083 = vadd.f32 %v2013, %v2082
  %v2084 = vpop.f32.mrb[0].mxu0
  %2085 = vdwg.mxu0
  %v2086 = vld [vmem:[%s14 + $0x100] sm:$0xff]
  %v2087 = vld [vmem:[%s14 + $0x108] sm:$0xff]
  %v2088 = vld [vmem:[%s14 + $0x110] sm:$0xff]
  %v2089 = vld [vmem:[%s14 + $0x118] sm:$0xff]
  %v2090 = vld [vmem:[%s14 + $0x120] sm:$0xff]
  %v2091 = vld [vmem:[%s14 + $0x128] sm:$0xff]
  %v2092 = vld [vmem:[%s14 + $0x130] sm:$0xff]
  %v2093 = vld [vmem:[%s14 + $0x138] sm:$0xff]
  %v2094 = vld [vmem:[%s14 + $0x140] sm:$0xff]
  %v2095 = vld [vmem:[%s14 + $0x148] sm:$0xff]
  %v2096 = vld [vmem:[%s14 + $0x150] sm:$0xff]
  %v2097 = vld [vmem:[%s14 + $0x158] sm:$0xff]
  %v2098 = vld [vmem:[%s14 + $0x160] sm:$0xff]
  %v2099 = vld [vmem:[%s14 + $0x168] sm:$0xff]
  %v2100 = vld [vmem:[%s14 + $0x170] sm:$0xff]
  %v2101 = vld [vmem:[%s14 + $0x178] sm:$0xff]
  %2102 = vmatprep.subr.mxu0 0.0
  %2103 = vmatpush1.msra.mxu0 %v2086
  %2104 = vmatprep.subr.mxu0 0.0
  %2105 = vmatpush1.msra.mxu0 %v2087
  %2106 = vmatprep.subr.mxu0 0.0
  %2107 = vmatpush1.msra.mxu0 %v2088
  %2108 = vmatprep.subr.mxu0 0.0
  %2109 = vmatpush1.msra.mxu0 %v2089
  %2110 = vmatprep.subr.mxu0 0.0
  %2111 = vmatpush1.msra.mxu0 %v2090
  %2112 = vmatprep.subr.mxu0 0.0
  %2113 = vmatpush1.msra.mxu0 %v2091
  %2114 = vmatprep.subr.mxu0 0.0
  %2115 = vmatpush1.msra.mxu0 %v2092
  %2116 = vmatprep.subr.mxu0 0.0
  %2117 = vmatpush1.msra.mxu0 %v2093
  %2118 = vmatprep.subr.mxu0 0.0
  %2119 = vmatpush1.msra.mxu0 %v2094
  %2120 = vmatprep.subr.mxu0 0.0
  %2121 = vmatpush1.msra.mxu0 %v2095
  %2122 = vmatprep.subr.mxu0 0.0
  %2123 = vmatpush1.msra.mxu0 %v2096
  %2124 = vmatprep.subr.mxu0 0.0
  %2125 = vmatpush1.msra.mxu0 %v2097
  %2126 = vmatprep.subr.mxu0 0.0
  %2127 = vmatpush1.msra.mxu0 %v2098
  %2128 = vmatprep.subr.mxu0 0.0
  %2129 = vmatpush1.msra.mxu0 %v2099
  %2130 = vmatprep.subr.mxu0 0.0
  %2131 = vmatpush1.msra.mxu0 %v2100
  %2132 = vmatprep.subr.mxu0 0.0
  %2133 = vmatpush1.msra.mxu0 %v2101
  %2134 = vmatprep.subr.mxu0 0.0
  %2135 = vmatpush1.msra.mxu0 0.0
  %2136 = vmatprep.subr.mxu0 0.0
  %2137 = vmatpush1.msra.mxu0 0.0
  %2138 = vmatprep.subr.mxu0 0.0
  %2139 = vmatpush1.msra.mxu0 0.0
  %2140 = vmatprep.subr.mxu0 0.0
  %2141 = vmatpush1.msra.mxu0 0.0
  %2142 = vmatprep.subr.mxu0 0.0
  %2143 = vmatpush1.msra.mxu0 0.0
  %2144 = vmatprep.subr.mxu0 0.0
  %2145 = vmatpush1.msra.mxu0 0.0
  %2146 = vmatprep.subr.mxu0 0.0
  %2147 = vmatpush1.msra.mxu0 0.0
  %2148 = vmatprep.subr.mxu0 0.0
  %2149 = vmatpush1.msra.mxu0 0.0
  %2150 = vmatprep.subr.mxu0 0.0
  %2151 = vmatpush1.msra.mxu0 0.0
  %2152 = vmatprep.subr.mxu0 0.0
  %2153 = vmatpush1.msra.mxu0 0.0
  %2154 = vmatprep.subr.mxu0 0.0
  %2155 = vmatpush1.msra.mxu0 0.0
  %2156 = vmatprep.subr.mxu0 0.0
  %2157 = vmatpush1.msra.mxu0 0.0
  %2158 = vmatprep.subr.mxu0 0.0
  %2159 = vmatpush1.msra.mxu0 0.0
  %2160 = vmatprep.subr.mxu0 0.0
  %2161 = vmatpush1.msra.mxu0 0.0
  %2162 = vmatprep.subr.mxu0 0.0
  %2163 = vmatpush1.msra.mxu0 0.0
  %2164 = vmatprep.subr.mxu0 0.0
  %2165 = vmatpush1.msra.mxu0 0.0
  %2166 = vmatprep.mubr.f32.mxu0 0.0
  %2167 = vmatmul.mubr.f32.gmra.mrb[0].mxu0 %v1913
  %v2168 = vpop.f32.mrb[0].mxu0
  %v2169 = vadd.f32 0.0, %v2168
  %v2170 = vpop.f32.mrb[0].mxu0
  %2171 = vdwg.mxu0
  %v2172 = vadd.f32 %v2083, %v2169
  %v2173 = vld [vmem:[%s15] sm:$0x1]
  %v2175 = vlaneseq
  %v2176 = vshrl.u32 %v2175, 7
  %v2177 = vsub.s32 0, %v2176
  %v2178 = vrot.slane %v2173, %v2177
  %v2180 = vadd.f32 %v2172, %v2178
  %v2181 = vmax.f32 %v2180, 0.0
  %v2182 = vld [vmem:[%s16] sm:$0xff]
  %v2183 = vld [vmem:[%s16 + $0x8] sm:$0xff]
  %v2184 = vld [vmem:[%s16 + $0x10] sm:$0xff]
  %v2185 = vld [vmem:[%s16 + $0x18] sm:$0xff]
  %v2186 = vld [vmem:[%s16 + $0x20] sm:$0xff]
  %v2187 = vld [vmem:[%s16 + $0x28] sm:$0xff]
  %v2188 = vld [vmem:[%s16 + $0x30] sm:$0xff]
  %v2189 = vld [vmem:[%s16 + $0x38] sm:$0xff]
  %v2190 = vld [vmem:[%s16 + $0x40] sm:$0xff]
  %v2191 = vld [vmem:[%s16 + $0x48] sm:$0xff]
  %v2192 = vld [vmem:[%s16 + $0x50] sm:$0xff]
  %v2193 = vld [vmem:[%s16 + $0x58] sm:$0xff]
  %v2194 = vld [vmem:[%s16 + $0x60] sm:$0xff]
  %v2195 = vld [vmem:[%s16 + $0x68] sm:$0xff]
  %v2196 = vld [vmem:[%s16 + $0x70] sm:$0xff]
  %v2197 = vld [vmem:[%s16 + $0x78] sm:$0xff]
  %v2198 = vld [vmem:[#allocation2] sm:$0x1]
  %v2200 = vlaneseq
  %v2201 = vshrl.u32 %v2200, 7
  %v2202 = vsub.s32 0, %v2201
  %v2203 = vrot.slane %v2198, %v2202
  %2205 = vmatprep.subr.mxu0 0.0
  %2206 = vmatpush1.msra.mxu0 %v2182
  %2207 = vmatprep.subr.mxu0 0.0
  %2208 = vmatpush1.msra.mxu0 %v2183
  %2209 = vmatprep.subr.mxu0 0.0
  %2210 = vmatpush1.msra.mxu0 %v2184
  %2211 = vmatprep.subr.mxu0 0.0
  %2212 = vmatpush1.msra.mxu0 %v2185
  %2213 = vmatprep.subr.mxu0 0.0
  %2214 = vmatpush1.msra.mxu0 %v2186
  %2215 = vmatprep.subr.mxu0 0.0
  %2216 = vmatpush1.msra.mxu0 %v2187
  %2217 = vmatprep.subr.mxu0 0.0
  %2218 = vmatpush1.msra.mxu0 %v2188
  %2219 = vmatprep.subr.mxu0 0.0
  %2220 = vmatpush1.msra.mxu0 %v2189
  %2221 = vmatprep.subr.mxu0 0.0
  %2222 = vmatpush1.msra.mxu0 %v2190
  %2223 = vmatprep.subr.mxu0 0.0
  %2224 = vmatpush1.msra.mxu0 %v2191
  %2225 = vmatprep.subr.mxu0 0.0
  %2226 = vmatpush1.msra.mxu0 %v2192
  %2227 = vmatprep.subr.mxu0 0.0
  %2228 = vmatpush1.msra.mxu0 %v2193
  %2229 = vmatprep.subr.mxu0 0.0
  %2230 = vmatpush1.msra.mxu0 %v2194
  %2231 = vmatprep.subr.mxu0 0.0
  %2232 = vmatpush1.msra.mxu0 %v2195
  %2233 = vmatprep.subr.mxu0 0.0
  %2234 = vmatpush1.msra.mxu0 %v2196
  %2235 = vmatprep.subr.mxu0 0.0
  %2236 = vmatpush1.msra.mxu0 %v2197
  %2237 = vmatprep.subr.mxu0 0.0
  %2238 = vmatpush1.msra.mxu0 0.0
  %2239 = vmatprep.subr.mxu0 0.0
  %2240 = vmatpush1.msra.mxu0 0.0
  %2241 = vmatprep.subr.mxu0 0.0
  %2242 = vmatpush1.msra.mxu0 0.0
  %2243 = vmatprep.subr.mxu0 0.0
  %2244 = vmatpush1.msra.mxu0 0.0
  %2245 = vmatprep.subr.mxu0 0.0
  %2246 = vmatpush1.msra.mxu0 0.0
  %2247 = vmatprep.subr.mxu0 0.0
  %2248 = vmatpush1.msra.mxu0 0.0
  %2249 = vmatprep.subr.mxu0 0.0
  %2250 = vmatpush1.msra.mxu0 0.0
  %2251 = vmatprep.subr.mxu0 0.0
  %2252 = vmatpush1.msra.mxu0 0.0
  %2253 = vmatprep.subr.mxu0 0.0
  %2254 = vmatpush1.msra.mxu0 0.0
  %2255 = vmatprep.subr.mxu0 0.0
  %2256 = vmatpush1.msra.mxu0 0.0
  %2257 = vmatprep.subr.mxu0 0.0
  %2258 = vmatpush1.msra.mxu0 0.0
  %2259 = vmatprep.subr.mxu0 0.0
  %2260 = vmatpush1.msra.mxu0 0.0
  %2261 = vmatprep.subr.mxu0 0.0
  %2262 = vmatpush1.msra.mxu0 0.0
  %2263 = vmatprep.subr.mxu0 0.0
  %2264 = vmatpush1.msra.mxu0 0.0
  %2265 = vmatprep.subr.mxu0 0.0
  %2266 = vmatpush1.msra.mxu0 0.0
  %2267 = vmatprep.subr.mxu0 0.0
  %2268 = vmatpush1.msra.mxu0 0.0
  %2269 = vmatprep.mubr.f32.mxu0 0.0
  %2270 = vmatmul.mubr.f32.gmra.mrb[0].mxu0 %v2181
  %v2271 = vpop.f32.mrb[0].mxu0
  %v2272 = vadd.f32 %v2203, %v2271
  %v2273 = vpop.f32.mrb[0].mxu0
  %2274 = vdwg.mxu0
  %vm2275 = vcmask 1024
  %2276 = vst.msk [vmem:[%s18] sm:$0x3] %vm2275, %v2272
  // Predicated region
  $region74: #{forward.5} parent=0 // pred_check
    _
  $region75: #{forward.5} parent=0 // pred_check_branch
    %2278 = sbr.rel (0) target = $region77
  $region76: #{forward.5} parent=0 // pred_region
    _
  $region77: #{forward.5} parent=0 // pred_fallthru
    _
  // Predicated region
  $region78: #{forward.5} parent=0 // pred_check
    _
  $region79: #{forward.5} parent=0 // pred_check_branch
    %2280 = sbr.rel (0) target = $region81
  $region80: #{forward.5} parent=0 // pred_region
    _
  $region81: #{forward.5} parent=0 // pred_fallthru
    _

</llo_original>
